<compile_context>
chip_gen: v5e
topology: v5e:2x2
jax: 0.10.0
libtpu: 0.0.40
codegen_flags: <defaults>
</compile_context>

<pallas_src>
import math
from functools import partial

import jax
import jax.numpy as jnp
from jax.experimental import pallas as pl
from jax.experimental.pallas import tpu as pltpu

LN_EPS = 1e-5        # PyTorch nn.LayerNorm default
_NEG_INF = -1e30     # finite "minus infinity": keeps fully-masked rows NaN-free


# ----------------------------------------------------------------------------- in-kernel helpers

def _layernorm(x, g, b):
    """x: [rows, E] f32; g, b: [1, E] f32."""
    mean = jnp.mean(x, axis=-1, keepdims=True)
    cent = x - mean
    var = jnp.mean(cent * cent, axis=-1, keepdims=True)
    return cent * jax.lax.rsqrt(var + LN_EPS) * g + b


def _mha(q, k, v, wo, bo, bias, H, Dh, head_sc):
    """Multi-head attention for one batch element.

    q: [Lq, E] f32 (1/sqrt(Dh) already folded into the Q projection),
    k, v: [Lk, E] f32, wo: [E, E] bf16, bo: [1, E] f32,
    bias: [Hb, Lq, Lk] f32 (Hb in {1, H}) or None, head_sc: VMEM (Lq, E) f32 scratch.
    """
    bf16 = jnp.bfloat16
    qb = q.astype(bf16)
    vb = v.astype(bf16)
    kT = k.astype(bf16).T                                        # [E, Lk], hoisted transpose

    # Per-head QK^T (static lane/sublane slices), stacked so softmax runs ONCE over
    # the whole [H, Lq, Lk] score tensor.
    s = jnp.stack([jnp.dot(qb[:, h * Dh:(h + 1) * Dh], kT[h * Dh:(h + 1) * Dh, :],
                           preferred_element_type=jnp.float32)
                   for h in range(H)])                           # [H, Lq, Lk] f32
    if bias is not None:
        s = s + bias                                             # broadcasts over heads if Hb=1
    m = jnp.max(s, axis=-1, keepdims=True)
    p = jnp.exp(s - m)
    p = (p * pl.reciprocal(jnp.sum(p, axis=-1, keepdims=True), approx=True)).astype(bf16)

    # Per-head PV written into one [Lq, E] tile -> SINGLE fused output projection (K = E).
    for h in range(H):
        head_sc[:, h * Dh:(h + 1) * Dh] = jnp.dot(
            p[h], vb[:, h * Dh:(h + 1) * Dh], preferred_element_type=jnp.float32)
    o = head_sc[...]
    return jnp.dot(o.astype(bf16), wo, preferred_element_type=jnp.float32) + bo


# ----------------------------------------------------------------------------- fused decoder kernel

def _decoder_kernel(*refs, H, has_sa_bias, has_c1_bias, has_c2_bias,
                    has_final_norm, return_intermediate):
    it = iter(refs)

    def take(n):
        return [next(it) for _ in range(n)]

    tgt_ref, mem_ref, oth_ref = take(3)
    sa_wqkv, sa_bqkv, sa_wo, sa_bo = take(4)
    c1_wq, c1_bq, c1_wkv, c1_bkv, c1_wo, c1_bo = take(6)
    c2_wq, c2_bq, c2_wkv, c2_bkv, c2_wo, c2_bo = take(6)
    ff_w1, ff_b1, ff_w2, ff_b2 = take(4)
    (ln_ref,) = take(1)
    fn_ref = take(1)[0] if has_final_norm else None
    sa_b_ref = take(1)[0] if has_sa_bias else None
    c1_b_ref = take(1)[0] if has_c1_bias else None
    c2_b_ref = take(1)[0] if has_c2_bias else None
    (out_ref,) = take(1)
    inter_ref = take(1)[0] if return_intermediate else None
    x_sc, head_sc = take(2)

    layer = pl.program_id(1)
    n_layers = pl.num_programs(1)
    E = x_sc.shape[-1]
    Dh = E // H
    bf16 = jnp.bfloat16
    f32 = jnp.float32

    @pl.when(layer == 0)
    def _():
        x_sc[...] = tgt_ref[0]          # seed the running state with this batch's queries

    x = x_sc[...]                        # [Lq, E] f32 running activations
    lnp = ln_ref[layer]                  # [8, E]  (g1,b1,g2,b2,g3,b3,g4,b4)

    # ---- 1) self-attention (fused QKV projection) + residual + LN1 ----------------
    qkv = jnp.dot(x.astype(bf16), sa_wqkv[layer],
                  preferred_element_type=f32) + sa_bqkv[layer]            # [Lq, 3E]
    a = _mha(qkv[:, :E], qkv[:, E:2 * E], qkv[:, 2 * E:],
             sa_wo[layer], sa_bo[layer],
             sa_b_ref[0] if has_sa_bias else None, H, Dh, head_sc)
    x = _layernorm(x + a, lnp[0:1], lnp[1:2])

    # ---- 2) cross-attention over `memory` + residual + LN2 ------------------------
    mem = mem_ref[0].astype(bf16)
    q = jnp.dot(x.astype(bf16), c1_wq[layer], preferred_element_type=f32) + c1_bq[layer]
    kv = jnp.dot(mem, c1_wkv[layer], preferred_element_type=f32) + c1_bkv[layer]
    a = _mha(q, kv[:, :E], kv[:, E:], c1_wo[layer], c1_bo[layer],
             c1_b_ref[0] if has_c1_bias else None, H, Dh, head_sc)
    x = _layernorm(x + a, lnp[2:3], lnp[3:4])

    # ---- 3) cross-attention over `other_memory` + residual + LN3 ------------------
    oth = oth_ref[0].astype(bf16)
    q = jnp.dot(x.astype(bf16), c2_wq[layer], preferred_element_type=f32) + c2_bq[layer]
    kv = jnp.dot(oth, c2_wkv[layer], preferred_element_type=f32) + c2_bkv[layer]
    a = _mha(q, kv[:, :E], kv[:, E:], c2_wo[layer], c2_bo[layer],
             c2_b_ref[0] if has_c2_bias else None, H, Dh, head_sc)
    x = _layernorm(x + a, lnp[4:5], lnp[5:6])

    # ---- 4) FFN (linear -> ReLU -> linear) + residual + LN4 -----------------------
    h1 = jnp.maximum(jnp.dot(x.astype(bf16), ff_w1[layer],
                             preferred_element_type=f32) + ff_b1[layer], 0.0)
    h2 = jnp.dot(h1.astype(bf16), ff_w2[layer], preferred_element_type=f32) + ff_b2[layer]
    x = _layernorm(x + h2, lnp[6:7], lnp[7:8])

    # running state is only needed by the NEXT layer
    @pl.when(layer < n_layers - 1)
    def _():
        x_sc[...] = x

    last = layer == n_layers - 1
    if return_intermediate:
        fnv = fn_ref[...]
        y = _layernorm(x, fnv[0:1], fnv[1:2])
        inter_ref[0, 0] = y
        @pl.when(last)
        def _():
            out_ref[0] = y               # final norm computed once, reused
    else:
        @pl.when(last)
        def _():
            if has_final_norm:
                fnv = fn_ref[...]
                out_ref[0] = _layernorm(x, fnv[0:1], fnv[1:2])
            else:
                out_ref[0] = x


# ----------------------------------------------------------------------------- mask -> additive bias

def _build_attn_bias(B, H, Lq, Lk, attn_mask, key_padding_mask):
    """Additive attention bias [B, Hb, Lq, Lk]; Hb=1 unless a per-head 3-D attn_mask is given.
    Returns None when there is no mask (=> no bias DMA at all)."""
    if attn_mask is None and key_padding_mask is None:
        return None
    per_head = attn_mask is not None and attn_mask.ndim == 3
    Hb = H if per_head else 1
    bias = jnp.zeros((B, Hb, Lq, Lk), jnp.float32)
    if attn_mask is not None:
        if attn_mask.dtype == jnp.bool_:
            am = jnp.where(attn_mask, _NEG_INF, 0.0).astype(jnp.float32)
        else:
            am = attn_mask.astype(jnp.float32)
        if am.ndim == 2:
            bias = bias + am[None, None, :, :]
        else:                                   # [B*H, Lq, Lk] PyTorch 3-D layout
            bias = bias + am.reshape(B, H, Lq, Lk)
    if key_padding_mask is not None:
        kp = jnp.where(key_padding_mask.astype(jnp.bool_), _NEG_INF, 0.0).astype(jnp.float32)
        bias = bias + kp[:, None, None, :]
    return jnp.maximum(bias, _NEG_INF)


# ----------------------------------------------------------------------------- wrapper

def group_transformer_decoder(tgt, memory, other_memory, layer_params, final_norm, nhead,
                              tgt_attn_mask=None, memory_attn_mask=None,
                              other_memory_attn_mask=None,
                              tgt_key_padding_mask=None, memory_key_padding_mask=None,
                              other_memory_key_padding_mask=None,
                              return_intermediate=False):
    Lq, B, E = tgt.shape
    Lk1 = memory.shape[0]
    Lk2 = other_memory.shape[0]
    H = nhead
    assert E % H == 0, "nhead must divide d_model"
    Dh = E // H
    scale = 1.0 / math.sqrt(Dh)
    NL = len(layer_params)
    FF = layer_params[0]["w1"].shape[1]
    has_final_norm = final_norm is not None
    if return_intermediate:
        assert has_final_norm, "return_intermediate requires a final norm (as in the reference)"

    f32, bf = jnp.float32, jnp.bfloat16

    def stack(get, dtype):
        return jnp.stack([get(p) for p in layer_params]).astype(dtype)

    # ---- stacked per-layer weights (matmul weights bf16, 1/sqrt(Dh) folded into Q) ----
    sa_wqkv = stack(lambda p: jnp.concatenate([p["self_attn"]["wq"] * scale,
                                               p["self_attn"]["wk"],
                                               p["self_attn"]["wv"]], axis=1), bf)
    sa_bqkv = stack(lambda p: jnp.concatenate([p["self_attn"]["bq"] * scale,
                                               p["self_attn"]["bk"],
                                               p["self_attn"]["bv"]]).reshape(1, 3 * E), f32)
    sa_wo = stack(lambda p: p["self_attn"]["wo"], bf)
    sa_bo = stack(lambda p: p["self_attn"]["bo"].reshape(1, E), f32)

    def cross(name):
        return [stack(lambda p: p[name]["wq"] * scale, bf),
                stack(lambda p: (p[name]["bq"] * scale).reshape(1, E), f32),
                stack(lambda p: jnp.concatenate([p[name]["wk"], p[name]["wv"]], axis=1), bf),
                stack(lambda p: jnp.concatenate([p[name]["bk"],
                                                 p[name]["bv"]]).reshape(1, 2 * E), f32),
                stack(lambda p: p[name]["wo"], bf),
                stack(lambda p: p[name]["bo"].reshape(1, E), f32)]

    per_layer = ([sa_wqkv, sa_bqkv, sa_wo, sa_bo]
                 + cross("cross_attn") + cross("cross_attn2")
                 + [stack(lambda p: p["w1"], bf),
                    stack(lambda p: p["b1"].reshape(1, FF), f32),
                    stack(lambda p: p["w2"], bf),
                    stack(lambda p: p["b2"].reshape(1, E), f32),
                    stack(lambda p: jnp.stack([p["norm1_g"], p["norm1_b"],
                                               p["norm2_g"], p["norm2_b"],
                                               p["norm3_g"], p["norm3_b"],
                                               p["norm4_g"], p["norm4_b"]]), f32)])

    # ---- batch-major operands (one transpose per decoder call, none per MHA) ---------
    tgt_bm = jnp.transpose(tgt, (1, 0, 2))             # [B, Lq, E]
    mem_bm = jnp.transpose(memory, (1, 0, 2))          # [B, Lk1, E]
    oth_bm = jnp.transpose(other_memory, (1, 0, 2))    # [B, Lk2, E]

    sa_bias = _build_attn_bias(B, H, Lq, Lq, tgt_attn_mask, tgt_key_padding_mask)
    c1_bias = _build_attn_bias(B, H, Lq, Lk1, memory_attn_mask, memory_key_padding_mask)
    c2_bias = _build_attn_bias(B, H, Lq, Lk2, other_memory_attn_mask,
                               other_memory_key_padding_mask)

    # ---- BlockSpecs -------------------------------------------------------------------
    def batch_spec(arr):        # [B, ...] -> one batch slice per grid step
        return pl.BlockSpec((1,) + arr.shape[1:],
                            lambda b, l, nd=arr.ndim: (b,) + (0,) * (nd - 1))

    def resident_spec(arr):     # full array, constant index -> DMA'd into VMEM once
        return pl.BlockSpec(arr.shape, lambda b, l, nd=arr.ndim: (0,) * nd)

    inputs = [tgt_bm, mem_bm, oth_bm]
    in_specs = [batch_spec(tgt_bm), batch_spec(mem_bm), batch_spec(oth_bm)]
    resident_arrays = list(per_layer)
    inputs += per_layer
    in_specs += [resident_spec(a) for a in per_layer]
    if has_final_norm:
        fn = jnp.stack([final_norm["g"], final_norm["b"]]).astype(f32)   # [2, E]
        inputs.append(fn)
        in_specs.append(resident_spec(fn))
        resident_arrays.append(fn)
    for bias in (sa_bias, c1_bias, c2_bias):
        if bias is not None:
            inputs.append(bias)
            in_specs.append(batch_spec(bias))

    out_shapes = [jax.ShapeDtypeStruct((B, Lq, E), jnp.float32)]
    out_specs = [pl.BlockSpec((1, Lq, E), lambda b, l: (b, 0, 0))]
    if return_intermediate:
        out_shapes.append(jax.ShapeDtypeStruct((NL, B, Lq, E), jnp.float32))
        out_specs.append(pl.BlockSpec((1, 1, Lq, E), lambda b, l: (l, b, 0, 0)))

    # ---- VMEM budget: resident weights (x2 headroom) + double-buffered streamed blocks
    def nbytes(a):
        return int(a.size) * a.dtype.itemsize
    resident_bytes = sum(nbytes(a) for a in resident_arrays)
    streamed = [tgt_bm, mem_bm, oth_bm] + [b for b in (sa_bias, c1_bias, c2_bias)
                                           if b is not None]
    streamed_bytes = sum(nbytes(a) // a.shape[0] for a in streamed)
    out_block_bytes = Lq * E * 4 * (2 if return_intermediate else 1)
    scratch_bytes = 2 * Lq * E * 4
    est = (2 * resident_bytes + 2 * (streamed_bytes + out_block_bytes)
           + scratch_bytes + (4 << 20))
    vmem_limit = int(min(96 << 20, max(32 << 20, est)))

    kernel = partial(_decoder_kernel, H=H,
                     has_sa_bias=sa_bias is not None,
                     has_c1_bias=c1_bias is not None,
                     has_c2_bias=c2_bias is not None,
                     has_final_norm=has_final_norm,
                     return_intermediate=return_intermediate)

    results = pl.pallas_call(
        kernel,
        out_shape=tuple(out_shapes),
        grid=(B, NL),                         # batch parallel (megacore), layers sequential
        in_specs=in_specs,
        out_specs=tuple(out_specs),
        scratch_shapes=[pltpu.VMEM((Lq, E), jnp.float32),    # running activations
                        pltpu.VMEM((Lq, E), jnp.float32)],   # per-head PV collection tile
        compiler_params=pltpu.CompilerParams(
            dimension_semantics=("parallel", "arbitrary"),
            vmem_limit_bytes=vmem_limit),
    )(*inputs)

    out = jnp.transpose(results[0], (1, 0, 2))               # [Lq, B, E]
    if return_intermediate:
        return jnp.transpose(results[1], (0, 2, 1, 3))       # [NL, Lq, B, E]
    return out


# ----------------------------------------------------------------------------- params

def _init_mha_params(key, E):
    ks = jax.random.split(key, 4)
    s = 1.0 / math.sqrt(E)
    u = lambda k, shp: jax.random.uniform(k, shp, jnp.float32, -s, s)
    # Weights stored pre-transposed ([in, out]) so kernels compute x @ W + b.
    return dict(
        wq=u(ks[0], (E, E)), wk=u(ks[1], (E, E)), wv=u(ks[2], (E, E)), wo=u(ks[3], (E, E)),
        bq=jnp.zeros((E,), jnp.float32), bk=jnp.zeros((E,), jnp.float32),
        bv=jnp.zeros((E,), jnp.float32), bo=jnp.zeros((E,), jnp.float32),
    )


def _init_layer_params(key, E, FF):
    ks = jax.random.split(key, 5)
    s1, s2 = 1.0 / math.sqrt(E), 1.0 / math.sqrt(FF)
    p = dict(
        self_attn=_init_mha_params(ks[0], E),
        cross_attn=_init_mha_params(ks[1], E),
        cross_attn2=_init_mha_params(ks[2], E),
        w1=jax.random.uniform(ks[3], (E, FF), jnp.float32, -s1, s1),
        b1=jnp.zeros((FF,), jnp.float32),
        w2=jax.random.uniform(ks[4], (FF, E), jnp.float32, -s2, s2),
        b2=jnp.zeros((E,), jnp.float32),
    )
    for i in (1, 2, 3, 4):
        p[f"norm{i}_g"] = jnp.ones((E,), jnp.float32)
        p[f"norm{i}_b"] = jnp.zeros((E,), jnp.float32)
    return p


# ----------------------------------------------------------------------------- main

if __name__ == "__main__":
    E, H, FF, NUM_LAYERS = 32, 4, 64, 2
    L_TGT, L_MEM, L_OTHER, B = 8, 16, 16, 2

    key = jax.random.PRNGKey(0)
    k_tgt, k_mem, k_oth, k_par = jax.random.split(key, 4)
    tgt = jax.random.normal(k_tgt, (L_TGT, B, E), jnp.float32)
    memory = jax.random.normal(k_mem, (L_MEM, B, E), jnp.float32)
    other_memory = jax.random.normal(k_oth, (L_OTHER, B, E), jnp.float32)

    layer_p = _init_layer_params(k_par, E, FF)
    # _get_clones deepcopies one layer => all layers start with identical weights.
    layer_params = [layer_p] * NUM_LAYERS
    final_norm = dict(g=jnp.ones((E,), jnp.float32), b=jnp.zeros((E,), jnp.float32))

    out = group_transformer_decoder(tgt, memory, other_memory, layer_params, final_norm, H,
                                    return_intermediate=False)
    out = jax.block_until_ready(out)
    assert out.shape == (L_TGT, B, E) and out.dtype == jnp.float32
    assert bool(jnp.all(jnp.isfinite(out)))
    print("KERNEL_OK")
</pallas_src>

<mosaic_0001>
module attributes {stable_mosaic.version = 11 : i64} {
  func.func @_decoder_kernel(%arg0: i32, %arg1: i32, %arg2: memref<1x8x32xf32, #tpu.memory_space<vmem>>, %arg3: memref<1x16x32xf32, #tpu.memory_space<vmem>>, %arg4: memref<1x16x32xf32, #tpu.memory_space<vmem>>, %arg5: memref<2x32x96xbf16, #tpu.memory_space<vmem>>, %arg6: memref<2x1x96xf32, #tpu.memory_space<vmem>>, %arg7: memref<2x32x32xbf16, #tpu.memory_space<vmem>>, %arg8: memref<2x1x32xf32, #tpu.memory_space<vmem>>, %arg9: memref<2x32x32xbf16, #tpu.memory_space<vmem>>, %arg10: memref<2x1x32xf32, #tpu.memory_space<vmem>>, %arg11: memref<2x32x64xbf16, #tpu.memory_space<vmem>>, %arg12: memref<2x1x64xf32, #tpu.memory_space<vmem>>, %arg13: memref<2x32x32xbf16, #tpu.memory_space<vmem>>, %arg14: memref<2x1x32xf32, #tpu.memory_space<vmem>>, %arg15: memref<2x32x32xbf16, #tpu.memory_space<vmem>>, %arg16: memref<2x1x32xf32, #tpu.memory_space<vmem>>, %arg17: memref<2x32x64xbf16, #tpu.memory_space<vmem>>, %arg18: memref<2x1x64xf32, #tpu.memory_space<vmem>>, %arg19: memref<2x32x32xbf16, #tpu.memory_space<vmem>>, %arg20: memref<2x1x32xf32, #tpu.memory_space<vmem>>, %arg21: memref<2x32x64xbf16, #tpu.memory_space<vmem>>, %arg22: memref<2x1x64xf32, #tpu.memory_space<vmem>>, %arg23: memref<2x64x32xbf16, #tpu.memory_space<vmem>>, %arg24: memref<2x1x32xf32, #tpu.memory_space<vmem>>, %arg25: memref<2x8x32xf32, #tpu.memory_space<vmem>>, %arg26: memref<2x32xf32, #tpu.memory_space<vmem>>, %arg27: memref<1x8x32xf32, #tpu.memory_space<vmem>>, %arg28: memref<8x32xf32, #tpu.memory_space<vmem>>, %arg29: memref<8x32xf32, #tpu.memory_space<vmem>>) attributes {dimension_semantics = [#tpu.dimension_semantics<parallel>, #tpu.dimension_semantics<arbitrary>], iteration_bounds = array<i64: 2, 2>, scalar_prefetch = 0 : i64, scratch_operands = 2 : i64, tpu.core_type = #tpu.core_type<tc>, window_params = [{transform_indices = @transform_0, window_bounds = array<i64: 1, 8, 32>}, {transform_indices = @transform_1, window_bounds = array<i64: 1, 16, 32>}, {transform_indices = @transform_2, window_bounds = array<i64: 1, 16, 32>}, {pipeline_mode = #tpu.pipeline_mode<synchronous>, transform_indices = @transform_3, window_bounds = array<i64: 2, 32, 96>}, {pipeline_mode = #tpu.pipeline_mode<synchronous>, transform_indices = @transform_4, window_bounds = array<i64: 2, 1, 96>}, {pipeline_mode = #tpu.pipeline_mode<synchronous>, transform_indices = @transform_5, window_bounds = array<i64: 2, 32, 32>}, {pipeline_mode = #tpu.pipeline_mode<synchronous>, transform_indices = @transform_6, window_bounds = array<i64: 2, 1, 32>}, {pipeline_mode = #tpu.pipeline_mode<synchronous>, transform_indices = @transform_7, window_bounds = array<i64: 2, 32, 32>}, {pipeline_mode = #tpu.pipeline_mode<synchronous>, transform_indices = @transform_8, window_bounds = array<i64: 2, 1, 32>}, {pipeline_mode = #tpu.pipeline_mode<synchronous>, transform_indices = @transform_9, window_bounds = array<i64: 2, 32, 64>}, {pipeline_mode = #tpu.pipeline_mode<synchronous>, transform_indices = @transform_10, window_bounds = array<i64: 2, 1, 64>}, {pipeline_mode = #tpu.pipeline_mode<synchronous>, transform_indices = @transform_11, window_bounds = array<i64: 2, 32, 32>}, {pipeline_mode = #tpu.pipeline_mode<synchronous>, transform_indices = @transform_12, window_bounds = array<i64: 2, 1, 32>}, {pipeline_mode = #tpu.pipeline_mode<synchronous>, transform_indices = @transform_13, window_bounds = array<i64: 2, 32, 32>}, {pipeline_mode = #tpu.pipeline_mode<synchronous>, transform_indices = @transform_14, window_bounds = array<i64: 2, 1, 32>}, {pipeline_mode = #tpu.pipeline_mode<synchronous>, transform_indices = @transform_15, window_bounds = array<i64: 2, 32, 64>}, {pipeline_mode = #tpu.pipeline_mode<synchronous>, transform_indices = @transform_16, window_bounds = array<i64: 2, 1, 64>}, {pipeline_mode = #tpu.pipeline_mode<synchronous>, transform_indices = @transform_17, window_bounds = array<i64: 2, 32, 32>}, {pipeline_mode = #tpu.pipeline_mode<synchronous>, transform_indices = @transform_18, window_bounds = array<i64: 2, 1, 32>}, {pipeline_mode = #tpu.pipeline_mode<synchronous>, transform_indices = @transform_19, window_bounds = array<i64: 2, 32, 64>}, {pipeline_mode = #tpu.pipeline_mode<synchronous>, transform_indices = @transform_20, window_bounds = array<i64: 2, 1, 64>}, {pipeline_mode = #tpu.pipeline_mode<synchronous>, transform_indices = @transform_21, window_bounds = array<i64: 2, 64, 32>}, {pipeline_mode = #tpu.pipeline_mode<synchronous>, transform_indices = @transform_22, window_bounds = array<i64: 2, 1, 32>}, {pipeline_mode = #tpu.pipeline_mode<synchronous>, transform_indices = @transform_23, window_bounds = array<i64: 2, 8, 32>}, {pipeline_mode = #tpu.pipeline_mode<synchronous>, transform_indices = @transform_24, window_bounds = array<i64: 2, 32>}, {transform_indices = @transform_25, window_bounds = array<i64: 1, 8, 32>}]} {
    %c0_i32 = arith.constant 0 : i32
    %0 = arith.cmpi eq, %arg1, %c0_i32 : i32
    %1 = arith.extui %0 : i1 to i32
    %c0_i32_0 = arith.constant 0 : i32
    %2 = arith.cmpi ne, %1, %c0_i32_0 : i32
    scf.if %2 {
      %c0_140 = arith.constant 0 : index
      %c0_141 = arith.constant 0 : index
      %c0_142 = arith.constant 0 : index
      %377 = vector.load %arg2[%c0_140, %c0_141, %c0_142] : memref<1x8x32xf32, #tpu.memory_space<vmem>>, vector<1x8x32xf32>
      %378 = vector.shape_cast %377 : vector<1x8x32xf32> to vector<8x32xf32>
      %c0_143 = arith.constant 0 : index
      %c0_144 = arith.constant 0 : index
      %379 = vector.load %arg28[%c0_143, %c0_144] : memref<8x32xf32, #tpu.memory_space<vmem>>, vector<8x32xf32>
      tpu.vector_store %arg28[%c0_143, %c0_144], %378 {strides = array<i32>} : memref<8x32xf32, #tpu.memory_space<vmem>>, vector<8x32xf32>,
    } else {
    }
    %c0 = arith.constant 0 : index
    %c0_1 = arith.constant 0 : index
    %3 = vector.load %arg28[%c0, %c0_1] : memref<8x32xf32, #tpu.memory_space<vmem>>, vector<8x32xf32>
    %4 = arith.index_cast %arg1 : i32 to index
    %c0_2 = arith.constant 0 : index
    %c0_3 = arith.constant 0 : index
    %5 = vector.load %arg25[%4, %c0_2, %c0_3] : memref<2x8x32xf32, #tpu.memory_space<vmem>>, vector<1x8x32xf32>
    %6 = vector.shape_cast %5 : vector<1x8x32xf32> to vector<8x32xf32>
    %7 = arith.truncf %3 : vector<8x32xf32> to vector<8x32xbf16>
    %8 = arith.index_cast %arg1 : i32 to index
    %c0_4 = arith.constant 0 : index
    %c0_5 = arith.constant 0 : index
    %9 = vector.load %arg5[%8, %c0_4, %c0_5] : memref<2x32x96xbf16, #tpu.memory_space<vmem>>, vector<1x32x96xbf16>
    %10 = vector.shape_cast %9 : vector<1x32x96xbf16> to vector<32x96xbf16>
    %cst = arith.constant dense<0.000000e+00> : vector<8x96xf32>
    %11 = tpu.matmul %7, %10, %cst {dimension_numbers = #tpu.dot_dimension_numbers<[1], [0], [0], [1], [0, 0, 1, 1], [], []>} : vector<8x32xbf16>, vector<32x96xbf16>, vector<8x96xf32> -> vector<8x96xf32>
    %12 = arith.index_cast %arg1 : i32 to index
    %c0_6 = arith.constant 0 : index
    %c0_7 = arith.constant 0 : index
    %13 = vector.load %arg6[%12, %c0_6, %c0_7] : memref<2x1x96xf32, #tpu.memory_space<vmem>>, vector<1x1x96xf32>
    %14 = vector.shape_cast %13 : vector<1x1x96xf32> to vector<1x96xf32>
    %15 = vector.broadcast %14 : vector<1x96xf32> to vector<8x96xf32>
    %16 = arith.addf %11, %15 : vector<8x96xf32>
    %17 = vector.extract_strided_slice %16 {offsets = [0, 0], sizes = [8, 32], strides = [1, 1]} : vector<8x96xf32> to vector<8x32xf32>
    %18 = vector.extract_strided_slice %16 {offsets = [0, 32], sizes = [8, 32], strides = [1, 1]} : vector<8x96xf32> to vector<8x32xf32>
    %19 = vector.extract_strided_slice %16 {offsets = [0, 64], sizes = [8, 32], strides = [1, 1]} : vector<8x96xf32> to vector<8x32xf32>
    %20 = arith.index_cast %arg1 : i32 to index
    %c0_8 = arith.constant 0 : index
    %c0_9 = arith.constant 0 : index
    %21 = vector.load %arg7[%20, %c0_8, %c0_9] : memref<2x32x32xbf16, #tpu.memory_space<vmem>>, vector<1x32x32xbf16>
    %22 = vector.shape_cast %21 : vector<1x32x32xbf16> to vector<32x32xbf16>
    %23 = arith.index_cast %arg1 : i32 to index
    %c0_10 = arith.constant 0 : index
    %c0_11 = arith.constant 0 : index
    %24 = vector.load %arg8[%23, %c0_10, %c0_11] : memref<2x1x32xf32, #tpu.memory_space<vmem>>, vector<1x1x32xf32>
    %25 = vector.shape_cast %24 : vector<1x1x32xf32> to vector<1x32xf32>
    %26 = arith.truncf %17 : vector<8x32xf32> to vector<8x32xbf16>
    %27 = arith.truncf %19 : vector<8x32xf32> to vector<8x32xbf16>
    %28 = arith.truncf %18 : vector<8x32xf32> to vector<8x32xbf16>
    %29 = tpu.transpose %28, [1, 0] : vector<8x32xbf16> -> vector<32x8xbf16>
    %30 = vector.extract_strided_slice %26 {offsets = [0, 0], sizes = [8, 8], strides = [1, 1]} : vector<8x32xbf16> to vector<8x8xbf16>
    %31 = vector.extract_strided_slice %29 {offsets = [0, 0], sizes = [8, 8], strides = [1, 1]} : vector<32x8xbf16> to vector<8x8xbf16>
    %cst_12 = arith.constant dense<0.000000e+00> : vector<8x8xf32>
    %32 = tpu.matmul %30, %31, %cst_12 {dimension_numbers = #tpu.dot_dimension_numbers<[1], [0], [0], [1], [0, 0, 1, 1], [], []>} : vector<8x8xbf16>, vector<8x8xbf16>, vector<8x8xf32> -> vector<8x8xf32>
    %33 = vector.extract_strided_slice %26 {offsets = [0, 8], sizes = [8, 8], strides = [1, 1]} : vector<8x32xbf16> to vector<8x8xbf16>
    %34 = vector.extract_strided_slice %29 {offsets = [8, 0], sizes = [8, 8], strides = [1, 1]} : vector<32x8xbf16> to vector<8x8xbf16>
    %cst_13 = arith.constant dense<0.000000e+00> : vector<8x8xf32>
    %35 = tpu.matmul %33, %34, %cst_13 {dimension_numbers = #tpu.dot_dimension_numbers<[1], [0], [0], [1], [0, 0, 1, 1], [], []>} : vector<8x8xbf16>, vector<8x8xbf16>, vector<8x8xf32> -> vector<8x8xf32>
    %36 = vector.extract_strided_slice %26 {offsets = [0, 16], sizes = [8, 8], strides = [1, 1]} : vector<8x32xbf16> to vector<8x8xbf16>
    %37 = vector.extract_strided_slice %29 {offsets = [16, 0], sizes = [8, 8], strides = [1, 1]} : vector<32x8xbf16> to vector<8x8xbf16>
    %cst_14 = arith.constant dense<0.000000e+00> : vector<8x8xf32>
    %38 = tpu.matmul %36, %37, %cst_14 {dimension_numbers = #tpu.dot_dimension_numbers<[1], [0], [0], [1], [0, 0, 1, 1], [], []>} : vector<8x8xbf16>, vector<8x8xbf16>, vector<8x8xf32> -> vector<8x8xf32>
    %39 = vector.extract_strided_slice %26 {offsets = [0, 24], sizes = [8, 8], strides = [1, 1]} : vector<8x32xbf16> to vector<8x8xbf16>
    %40 = vector.extract_strided_slice %29 {offsets = [24, 0], sizes = [8, 8], strides = [1, 1]} : vector<32x8xbf16> to vector<8x8xbf16>
    %cst_15 = arith.constant dense<0.000000e+00> : vector<8x8xf32>
    %41 = tpu.matmul %39, %40, %cst_15 {dimension_numbers = #tpu.dot_dimension_numbers<[1], [0], [0], [1], [0, 0, 1, 1], [], []>} : vector<8x8xbf16>, vector<8x8xbf16>, vector<8x8xf32> -> vector<8x8xf32>
    %42 = vector.shape_cast %32 : vector<8x8xf32> to vector<1x8x8xf32>
    %43 = vector.shape_cast %35 : vector<8x8xf32> to vector<1x8x8xf32>
    %44 = vector.shape_cast %38 : vector<8x8xf32> to vector<1x8x8xf32>
    %45 = vector.shape_cast %41 : vector<8x8xf32> to vector<1x8x8xf32>
    %46 = tpu.concatenate %42, %43, %44, %45 in 0 : vector<1x8x8xf32>, vector<1x8x8xf32>, vector<1x8x8xf32>, vector<1x8x8xf32> -> vector<4x8x8xf32>
    %cst_16 = arith.constant dense<0xFF800000> : vector<4x8xf32>
    %47 = vector.multi_reduction <maximumf>, %46, %cst_16 [2] : vector<4x8x8xf32> to vector<4x8xf32>
    %48 = vector.shape_cast %47 : vector<4x8xf32> to vector<4x8x1xf32>
    %49 = vector.broadcast %48 : vector<4x8x1xf32> to vector<4x8x8xf32>
    %50 = arith.subf %46, %49 : vector<4x8x8xf32>
    %51 = math.exp %50 : vector<4x8x8xf32>
    %cst_17 = arith.constant dense<0.000000e+00> : vector<4x8xf32>
    %52 = vector.multi_reduction <add>, %51, %cst_17 [2] : vector<4x8x8xf32> to vector<4x8xf32>
    %53 = vector.shape_cast %52 : vector<4x8xf32> to vector<4x8x1xf32>
    %54 = tpu.reciprocal %53 {approx = true} : vector<4x8x1xf32> -> vector<4x8x1xf32>
    %55 = vector.broadcast %54 : vector<4x8x1xf32> to vector<4x8x8xf32>
    %56 = arith.mulf %51, %55 : vector<4x8x8xf32>
    %57 = arith.truncf %56 : vector<4x8x8xf32> to vector<4x8x8xbf16>
    %58 = vector.extract_strided_slice %57 {offsets = [0, 0, 0], sizes = [1, 8, 8], strides = [1, 1, 1]} : vector<4x8x8xbf16> to vector<1x8x8xbf16>
    %59 = vector.shape_cast %58 : vector<1x8x8xbf16> to vector<8x8xbf16>
    %60 = vector.extract_strided_slice %27 {offsets = [0, 0], sizes = [8, 8], strides = [1, 1]} : vector<8x32xbf16> to vector<8x8xbf16>
    %cst_18 = arith.constant dense<0.000000e+00> : vector<8x8xf32>
    %61 = tpu.matmul %59, %60, %cst_18 {dimension_numbers = #tpu.dot_dimension_numbers<[1], [0], [0], [1], [0, 0, 1, 1], [], []>} : vector<8x8xbf16>, vector<8x8xbf16>, vector<8x8xf32> -> vector<8x8xf32>
    %c0_19 = arith.constant 0 : index
    %c0_20 = arith.constant 0 : index
    %62 = vector.load %arg29[%c0_19, %c0_20] : memref<8x32xf32, #tpu.memory_space<vmem>>, vector<8x8xf32>
    tpu.vector_store %arg29[%c0_19, %c0_20], %61 {strides = array<i32>} : memref<8x32xf32, #tpu.memory_space<vmem>>, vector<8x8xf32>,
    %63 = vector.extract_strided_slice %57 {offsets = [1, 0, 0], sizes = [1, 8, 8], strides = [1, 1, 1]} : vector<4x8x8xbf16> to vector<1x8x8xbf16>
    %64 = vector.shape_cast %63 : vector<1x8x8xbf16> to vector<8x8xbf16>
    %65 = vector.extract_strided_slice %27 {offsets = [0, 8], sizes = [8, 8], strides = [1, 1]} : vector<8x32xbf16> to vector<8x8xbf16>
    %cst_21 = arith.constant dense<0.000000e+00> : vector<8x8xf32>
    %66 = tpu.matmul %64, %65, %cst_21 {dimension_numbers = #tpu.dot_dimension_numbers<[1], [0], [0], [1], [0, 0, 1, 1], [], []>} : vector<8x8xbf16>, vector<8x8xbf16>, vector<8x8xf32> -> vector<8x8xf32>
    %c0_22 = arith.constant 0 : index
    %c8 = arith.constant 8 : index
    %67 = vector.load %arg29[%c0_22, %c8] : memref<8x32xf32, #tpu.memory_space<vmem>>, vector<8x8xf32>
    tpu.vector_store %arg29[%c0_22, %c8], %66 {strides = array<i32>} : memref<8x32xf32, #tpu.memory_space<vmem>>, vector<8x8xf32>,
    %68 = vector.extract_strided_slice %57 {offsets = [2, 0, 0], sizes = [1, 8, 8], strides = [1, 1, 1]} : vector<4x8x8xbf16> to vector<1x8x8xbf16>
    %69 = vector.shape_cast %68 : vector<1x8x8xbf16> to vector<8x8xbf16>
    %70 = vector.extract_strided_slice %27 {offsets = [0, 16], sizes = [8, 8], strides = [1, 1]} : vector<8x32xbf16> to vector<8x8xbf16>
    %cst_23 = arith.constant dense<0.000000e+00> : vector<8x8xf32>
    %71 = tpu.matmul %69, %70, %cst_23 {dimension_numbers = #tpu.dot_dimension_numbers<[1], [0], [0], [1], [0, 0, 1, 1], [], []>} : vector<8x8xbf16>, vector<8x8xbf16>, vector<8x8xf32> -> vector<8x8xf32>
    %c0_24 = arith.constant 0 : index
    %c16 = arith.constant 16 : index
    %72 = vector.load %arg29[%c0_24, %c16] : memref<8x32xf32, #tpu.memory_space<vmem>>, vector<8x8xf32>
    tpu.vector_store %arg29[%c0_24, %c16], %71 {strides = array<i32>} : memref<8x32xf32, #tpu.memory_space<vmem>>, vector<8x8xf32>,
    %73 = vector.extract_strided_slice %57 {offsets = [3, 0, 0], sizes = [1, 8, 8], strides = [1, 1, 1]} : vector<4x8x8xbf16> to vector<1x8x8xbf16>
    %74 = vector.shape_cast %73 : vector<1x8x8xbf16> to vector<8x8xbf16>
    %75 = vector.extract_strided_slice %27 {offsets = [0, 24], sizes = [8, 8], strides = [1, 1]} : vector<8x32xbf16> to vector<8x8xbf16>
    %cst_25 = arith.constant dense<0.000000e+00> : vector<8x8xf32>
    %76 = tpu.matmul %74, %75, %cst_25 {dimension_numbers = #tpu.dot_dimension_numbers<[1], [0], [0], [1], [0, 0, 1, 1], [], []>} : vector<8x8xbf16>, vector<8x8xbf16>, vector<8x8xf32> -> vector<8x8xf32>
    %c0_26 = arith.constant 0 : index
    %c24 = arith.constant 24 : index
    %77 = vector.load %arg29[%c0_26, %c24] : memref<8x32xf32, #tpu.memory_space<vmem>>, vector<8x8xf32>
    tpu.vector_store %arg29[%c0_26, %c24], %76 {strides = array<i32>} : memref<8x32xf32, #tpu.memory_space<vmem>>, vector<8x8xf32>,
    %c0_27 = arith.constant 0 : index
    %c0_28 = arith.constant 0 : index
    %78 = vector.load %arg29[%c0_27, %c0_28] : memref<8x32xf32, #tpu.memory_space<vmem>>, vector<8x32xf32>
    %79 = arith.truncf %78 : vector<8x32xf32> to vector<8x32xbf16>
    %cst_29 = arith.constant dense<0.000000e+00> : vector<8x32xf32>
    %80 = tpu.matmul %79, %22, %cst_29 {dimension_numbers = #tpu.dot_dimension_numbers<[1], [0], [0], [1], [0, 0, 1, 1], [], []>} : vector<8x32xbf16>, vector<32x32xbf16>, vector<8x32xf32> -> vector<8x32xf32>
    %81 = vector.broadcast %25 : vector<1x32xf32> to vector<8x32xf32>
    %82 = arith.addf %80, %81 : vector<8x32xf32>
    %83 = arith.addf %3, %82 : vector<8x32xf32>
    %84 = vector.extract_strided_slice %6 {offsets = [0, 0], sizes = [1, 32], strides = [1, 1]} : vector<8x32xf32> to vector<1x32xf32>
    %85 = vector.extract_strided_slice %6 {offsets = [1, 0], sizes = [1, 32], strides = [1, 1]} : vector<8x32xf32> to vector<1x32xf32>
    %cst_30 = arith.constant dense<0.000000e+00> : vector<8xf32>
    %86 = vector.multi_reduction <add>, %83, %cst_30 [1] : vector<8x32xf32> to vector<8xf32>
    %87 = vector.shape_cast %86 : vector<8xf32> to vector<8x1xf32>
    %cst_31 = arith.constant 3.200000e+01 : f32
    %88 = vector.broadcast %cst_31 : f32 to vector<8x1xf32>
    %89 = arith.divf %87, %88 : vector<8x1xf32>
    %90 = vector.broadcast %89 : vector<8x1xf32> to vector<8x32xf32>
    %91 = arith.subf %83, %90 : vector<8x32xf32>
    %92 = arith.mulf %91, %91 : vector<8x32xf32>
    %cst_32 = arith.constant dense<0.000000e+00> : vector<8xf32>
    %93 = vector.multi_reduction <add>, %92, %cst_32 [1] : vector<8x32xf32> to vector<8xf32>
    %94 = vector.shape_cast %93 : vector<8xf32> to vector<8x1xf32>
    %cst_33 = arith.constant 3.200000e+01 : f32
    %95 = vector.broadcast %cst_33 : f32 to vector<8x1xf32>
    %96 = arith.divf %94, %95 : vector<8x1xf32>
    %cst_34 = arith.constant 9.99999974E-6 : f32
    %97 = vector.broadcast %cst_34 : f32 to vector<8x1xf32>
    %98 = arith.addf %96, %97 : vector<8x1xf32>
    %99 = math.rsqrt %98 : vector<8x1xf32>
    %100 = vector.broadcast %99 : vector<8x1xf32> to vector<8x32xf32>
    %101 = arith.mulf %91, %100 : vector<8x32xf32>
    %102 = vector.broadcast %84 : vector<1x32xf32> to vector<8x32xf32>
    %103 = arith.mulf %101, %102 : vector<8x32xf32>
    %104 = vector.broadcast %85 : vector<1x32xf32> to vector<8x32xf32>
    %105 = arith.addf %103, %104 : vector<8x32xf32>
    %c0_35 = arith.constant 0 : index
    %c0_36 = arith.constant 0 : index
    %c0_37 = arith.constant 0 : index
    %106 = vector.load %arg3[%c0_35, %c0_36, %c0_37] : memref<1x16x32xf32, #tpu.memory_space<vmem>>, vector<1x16x32xf32>
    %107 = vector.shape_cast %106 : vector<1x16x32xf32> to vector<16x32xf32>
    %108 = arith.truncf %107 : vector<16x32xf32> to vector<16x32xbf16>
    %109 = arith.truncf %105 : vector<8x32xf32> to vector<8x32xbf16>
    %110 = arith.index_cast %arg1 : i32 to index
    %c0_38 = arith.constant 0 : index
    %c0_39 = arith.constant 0 : index
    %111 = vector.load %arg9[%110, %c0_38, %c0_39] : memref<2x32x32xbf16, #tpu.memory_space<vmem>>, vector<1x32x32xbf16>
    %112 = vector.shape_cast %111 : vector<1x32x32xbf16> to vector<32x32xbf16>
    %cst_40 = arith.constant dense<0.000000e+00> : vector<8x32xf32>
    %113 = tpu.matmul %109, %112, %cst_40 {dimension_numbers = #tpu.dot_dimension_numbers<[1], [0], [0], [1], [0, 0, 1, 1], [], []>} : vector<8x32xbf16>, vector<32x32xbf16>, vector<8x32xf32> -> vector<8x32xf32>
    %114 = arith.index_cast %arg1 : i32 to index
    %c0_41 = arith.constant 0 : index
    %c0_42 = arith.constant 0 : index
    %115 = vector.load %arg10[%114, %c0_41, %c0_42] : memref<2x1x32xf32, #tpu.memory_space<vmem>>, vector<1x1x32xf32>
    %116 = vector.shape_cast %115 : vector<1x1x32xf32> to vector<1x32xf32>
    %117 = vector.broadcast %116 : vector<1x32xf32> to vector<8x32xf32>
    %118 = arith.addf %113, %117 : vector<8x32xf32>
    %119 = arith.index_cast %arg1 : i32 to index
    %c0_43 = arith.constant 0 : index
    %c0_44 = arith.constant 0 : index
    %120 = vector.load %arg11[%119, %c0_43, %c0_44] : memref<2x32x64xbf16, #tpu.memory_space<vmem>>, vector<1x32x64xbf16>
    %121 = vector.shape_cast %120 : vector<1x32x64xbf16> to vector<32x64xbf16>
    %cst_45 = arith.constant dense<0.000000e+00> : vector<16x64xf32>
    %122 = tpu.matmul %108, %121, %cst_45 {dimension_numbers = #tpu.dot_dimension_numbers<[1], [0], [0], [1], [0, 0, 1, 1], [], []>} : vector<16x32xbf16>, vector<32x64xbf16>, vector<16x64xf32> -> vector<16x64xf32>
    %123 = arith.index_cast %arg1 : i32 to index
    %c0_46 = arith.constant 0 : index
    %c0_47 = arith.constant 0 : index
    %124 = vector.load %arg12[%123, %c0_46, %c0_47] : memref<2x1x64xf32, #tpu.memory_space<vmem>>, vector<1x1x64xf32>
    %125 = vector.shape_cast %124 : vector<1x1x64xf32> to vector<1x64xf32>
    %126 = vector.broadcast %125 : vector<1x64xf32> to vector<16x64xf32>
    %127 = arith.addf %122, %126 : vector<16x64xf32>
    %128 = vector.extract_strided_slice %127 {offsets = [0, 0], sizes = [16, 32], strides = [1, 1]} : vector<16x64xf32> to vector<16x32xf32>
    %129 = vector.extract_strided_slice %127 {offsets = [0, 32], sizes = [16, 32], strides = [1, 1]} : vector<16x64xf32> to vector<16x32xf32>
    %130 = arith.index_cast %arg1 : i32 to index
    %c0_48 = arith.constant 0 : index
    %c0_49 = arith.constant 0 : index
    %131 = vector.load %arg13[%130, %c0_48, %c0_49] : memref<2x32x32xbf16, #tpu.memory_space<vmem>>, vector<1x32x32xbf16>
    %132 = vector.shape_cast %131 : vector<1x32x32xbf16> to vector<32x32xbf16>
    %133 = arith.index_cast %arg1 : i32 to index
    %c0_50 = arith.constant 0 : index
    %c0_51 = arith.constant 0 : index
    %134 = vector.load %arg14[%133, %c0_50, %c0_51] : memref<2x1x32xf32, #tpu.memory_space<vmem>>, vector<1x1x32xf32>
    %135 = vector.shape_cast %134 : vector<1x1x32xf32> to vector<1x32xf32>
    %136 = arith.truncf %118 : vector<8x32xf32> to vector<8x32xbf16>
    %137 = arith.truncf %129 : vector<16x32xf32> to vector<16x32xbf16>
    %138 = arith.truncf %128 : vector<16x32xf32> to vector<16x32xbf16>
    %139 = tpu.transpose %138, [1, 0] : vector<16x32xbf16> -> vector<32x16xbf16>
    %140 = vector.extract_strided_slice %136 {offsets = [0, 0], sizes = [8, 8], strides = [1, 1]} : vector<8x32xbf16> to vector<8x8xbf16>
    %141 = vector.extract_strided_slice %139 {offsets = [0, 0], sizes = [8, 16], strides = [1, 1]} : vector<32x16xbf16> to vector<8x16xbf16>
    %cst_52 = arith.constant dense<0.000000e+00> : vector<8x16xf32>
    %142 = tpu.matmul %140, %141, %cst_52 {dimension_numbers = #tpu.dot_dimension_numbers<[1], [0], [0], [1], [0, 0, 1, 1], [], []>} : vector<8x8xbf16>, vector<8x16xbf16>, vector<8x16xf32> -> vector<8x16xf32>
    %143 = vector.extract_strided_slice %136 {offsets = [0, 8], sizes = [8, 8], strides = [1, 1]} : vector<8x32xbf16> to vector<8x8xbf16>
    %144 = vector.extract_strided_slice %139 {offsets = [8, 0], sizes = [8, 16], strides = [1, 1]} : vector<32x16xbf16> to vector<8x16xbf16>
    %cst_53 = arith.constant dense<0.000000e+00> : vector<8x16xf32>
    %145 = tpu.matmul %143, %144, %cst_53 {dimension_numbers = #tpu.dot_dimension_numbers<[1], [0], [0], [1], [0, 0, 1, 1], [], []>} : vector<8x8xbf16>, vector<8x16xbf16>, vector<8x16xf32> -> vector<8x16xf32>
    %146 = vector.extract_strided_slice %136 {offsets = [0, 16], sizes = [8, 8], strides = [1, 1]} : vector<8x32xbf16> to vector<8x8xbf16>
    %147 = vector.extract_strided_slice %139 {offsets = [16, 0], sizes = [8, 16], strides = [1, 1]} : vector<32x16xbf16> to vector<8x16xbf16>
    %cst_54 = arith.constant dense<0.000000e+00> : vector<8x16xf32>
    %148 = tpu.matmul %146, %147, %cst_54 {dimension_numbers = #tpu.dot_dimension_numbers<[1], [0], [0], [1], [0, 0, 1, 1], [], []>} : vector<8x8xbf16>, vector<8x16xbf16>, vector<8x16xf32> -> vector<8x16xf32>
    %149 = vector.extract_strided_slice %136 {offsets = [0, 24], sizes = [8, 8], strides = [1, 1]} : vector<8x32xbf16> to vector<8x8xbf16>
    %150 = vector.extract_strided_slice %139 {offsets = [24, 0], sizes = [8, 16], strides = [1, 1]} : vector<32x16xbf16> to vector<8x16xbf16>
    %cst_55 = arith.constant dense<0.000000e+00> : vector<8x16xf32>
    %151 = tpu.matmul %149, %150, %cst_55 {dimension_numbers = #tpu.dot_dimension_numbers<[1], [0], [0], [1], [0, 0, 1, 1], [], []>} : vector<8x8xbf16>, vector<8x16xbf16>, vector<8x16xf32> -> vector<8x16xf32>
    %152 = vector.shape_cast %142 : vector<8x16xf32> to vector<1x8x16xf32>
    %153 = vector.shape_cast %145 : vector<8x16xf32> to vector<1x8x16xf32>
    %154 = vector.shape_cast %148 : vector<8x16xf32> to vector<1x8x16xf32>
    %155 = vector.shape_cast %151 : vector<8x16xf32> to vector<1x8x16xf32>
    %156 = tpu.concatenate %152, %153, %154, %155 in 0 : vector<1x8x16xf32>, vector<1x8x16xf32>, vector<1x8x16xf32>, vector<1x8x16xf32> -> vector<4x8x16xf32>
    %cst_56 = arith.constant dense<0xFF800000> : vector<4x8xf32>
    %157 = vector.multi_reduction <maximumf>, %156, %cst_56 [2] : vector<4x8x16xf32> to vector<4x8xf32>
    %158 = vector.shape_cast %157 : vector<4x8xf32> to vector<4x8x1xf32>
    %159 = vector.broadcast %158 : vector<4x8x1xf32> to vector<4x8x16xf32>
    %160 = arith.subf %156, %159 : vector<4x8x16xf32>
    %161 = math.exp %160 : vector<4x8x16xf32>
    %cst_57 = arith.constant dense<0.000000e+00> : vector<4x8xf32>
    %162 = vector.multi_reduction <add>, %161, %cst_57 [2] : vector<4x8x16xf32> to vector<4x8xf32>
    %163 = vector.shape_cast %162 : vector<4x8xf32> to vector<4x8x1xf32>
    %164 = tpu.reciprocal %163 {approx = true} : vector<4x8x1xf32> -> vector<4x8x1xf32>
    %165 = vector.broadcast %164 : vector<4x8x1xf32> to vector<4x8x16xf32>
    %166 = arith.mulf %161, %165 : vector<4x8x16xf32>
    %167 = arith.truncf %166 : vector<4x8x16xf32> to vector<4x8x16xbf16>
    %168 = vector.extract_strided_slice %167 {offsets = [0, 0, 0], sizes = [1, 8, 16], strides = [1, 1, 1]} : vector<4x8x16xbf16> to vector<1x8x16xbf16>
    %169 = vector.shape_cast %168 : vector<1x8x16xbf16> to vector<8x16xbf16>
    %170 = vector.extract_strided_slice %137 {offsets = [0, 0], sizes = [16, 8], strides = [1, 1]} : vector<16x32xbf16> to vector<16x8xbf16>
    %cst_58 = arith.constant dense<0.000000e+00> : vector<8x8xf32>
    %171 = tpu.matmul %169, %170, %cst_58 {dimension_numbers = #tpu.dot_dimension_numbers<[1], [0], [0], [1], [0, 0, 1, 1], [], []>} : vector<8x16xbf16>, vector<16x8xbf16>, vector<8x8xf32> -> vector<8x8xf32>
    %c0_59 = arith.constant 0 : index
    %c0_60 = arith.constant 0 : index
    %172 = vector.load %arg29[%c0_59, %c0_60] : memref<8x32xf32, #tpu.memory_space<vmem>>, vector<8x8xf32>
    tpu.vector_store %arg29[%c0_59, %c0_60], %171 {strides = array<i32>} : memref<8x32xf32, #tpu.memory_space<vmem>>, vector<8x8xf32>,
    %173 = vector.extract_strided_slice %167 {offsets = [1, 0, 0], sizes = [1, 8, 16], strides = [1, 1, 1]} : vector<4x8x16xbf16> to vector<1x8x16xbf16>
    %174 = vector.shape_cast %173 : vector<1x8x16xbf16> to vector<8x16xbf16>
    %175 = vector.extract_strided_slice %137 {offsets = [0, 8], sizes = [16, 8], strides = [1, 1]} : vector<16x32xbf16> to vector<16x8xbf16>
    %cst_61 = arith.constant dense<0.000000e+00> : vector<8x8xf32>
    %176 = tpu.matmul %174, %175, %cst_61 {dimension_numbers = #tpu.dot_dimension_numbers<[1], [0], [0], [1], [0, 0, 1, 1], [], []>} : vector<8x16xbf16>, vector<16x8xbf16>, vector<8x8xf32> -> vector<8x8xf32>
    %c0_62 = arith.constant 0 : index
    %c8_63 = arith.constant 8 : index
    %177 = vector.load %arg29[%c0_62, %c8_63] : memref<8x32xf32, #tpu.memory_space<vmem>>, vector<8x8xf32>
    tpu.vector_store %arg29[%c0_62, %c8_63], %176 {strides = array<i32>} : memref<8x32xf32, #tpu.memory_space<vmem>>, vector<8x8xf32>,
    %178 = vector.extract_strided_slice %167 {offsets = [2, 0, 0], sizes = [1, 8, 16], strides = [1, 1, 1]} : vector<4x8x16xbf16> to vector<1x8x16xbf16>
    %179 = vector.shape_cast %178 : vector<1x8x16xbf16> to vector<8x16xbf16>
    %180 = vector.extract_strided_slice %137 {offsets = [0, 16], sizes = [16, 8], strides = [1, 1]} : vector<16x32xbf16> to vector<16x8xbf16>
    %cst_64 = arith.constant dense<0.000000e+00> : vector<8x8xf32>
    %181 = tpu.matmul %179, %180, %cst_64 {dimension_numbers = #tpu.dot_dimension_numbers<[1], [0], [0], [1], [0, 0, 1, 1], [], []>} : vector<8x16xbf16>, vector<16x8xbf16>, vector<8x8xf32> -> vector<8x8xf32>
    %c0_65 = arith.constant 0 : index
    %c16_66 = arith.constant 16 : index
    %182 = vector.load %arg29[%c0_65, %c16_66] : memref<8x32xf32, #tpu.memory_space<vmem>>, vector<8x8xf32>
    tpu.vector_store %arg29[%c0_65, %c16_66], %181 {strides = array<i32>} : memref<8x32xf32, #tpu.memory_space<vmem>>, vector<8x8xf32>,
    %183 = vector.extract_strided_slice %167 {offsets = [3, 0, 0], sizes = [1, 8, 16], strides = [1, 1, 1]} : vector<4x8x16xbf16> to vector<1x8x16xbf16>
    %184 = vector.shape_cast %183 : vector<1x8x16xbf16> to vector<8x16xbf16>
    %185 = vector.extract_strided_slice %137 {offsets = [0, 24], sizes = [16, 8], strides = [1, 1]} : vector<16x32xbf16> to vector<16x8xbf16>
    %cst_67 = arith.constant dense<0.000000e+00> : vector<8x8xf32>
    %186 = tpu.matmul %184, %185, %cst_67 {dimension_numbers = #tpu.dot_dimension_numbers<[1], [0], [0], [1], [0, 0, 1, 1], [], []>} : vector<8x16xbf16>, vector<16x8xbf16>, vector<8x8xf32> -> vector<8x8xf32>
    %c0_68 = arith.constant 0 : index
    %c24_69 = arith.constant 24 : index
    %187 = vector.load %arg29[%c0_68, %c24_69] : memref<8x32xf32, #tpu.memory_space<vmem>>, vector<8x8xf32>
    tpu.vector_store %arg29[%c0_68, %c24_69], %186 {strides = array<i32>} : memref<8x32xf32, #tpu.memory_space<vmem>>, vector<8x8xf32>,
    %c0_70 = arith.constant 0 : index
    %c0_71 = arith.constant 0 : index
    %188 = vector.load %arg29[%c0_70, %c0_71] : memref<8x32xf32, #tpu.memory_space<vmem>>, vector<8x32xf32>
    %189 = arith.truncf %188 : vector<8x32xf32> to vector<8x32xbf16>
    %cst_72 = arith.constant dense<0.000000e+00> : vector<8x32xf32>
    %190 = tpu.matmul %189, %132, %cst_72 {dimension_numbers = #tpu.dot_dimension_numbers<[1], [0], [0], [1], [0, 0, 1, 1], [], []>} : vector<8x32xbf16>, vector<32x32xbf16>, vector<8x32xf32> -> vector<8x32xf32>
    %191 = vector.broadcast %135 : vector<1x32xf32> to vector<8x32xf32>
    %192 = arith.addf %190, %191 : vector<8x32xf32>
    %193 = arith.addf %105, %192 : vector<8x32xf32>
    %194 = vector.extract_strided_slice %6 {offsets = [2, 0], sizes = [1, 32], strides = [1, 1]} : vector<8x32xf32> to vector<1x32xf32>
    %195 = vector.extract_strided_slice %6 {offsets = [3, 0], sizes = [1, 32], strides = [1, 1]} : vector<8x32xf32> to vector<1x32xf32>
    %cst_73 = arith.constant dense<0.000000e+00> : vector<8xf32>
    %196 = vector.multi_reduction <add>, %193, %cst_73 [1] : vector<8x32xf32> to vector<8xf32>
    %197 = vector.shape_cast %196 : vector<8xf32> to vector<8x1xf32>
    %cst_74 = arith.constant 3.200000e+01 : f32
    %198 = vector.broadcast %cst_74 : f32 to vector<8x1xf32>
    %199 = arith.divf %197, %198 : vector<8x1xf32>
    %200 = vector.broadcast %199 : vector<8x1xf32> to vector<8x32xf32>
    %201 = arith.subf %193, %200 : vector<8x32xf32>
    %202 = arith.mulf %201, %201 : vector<8x32xf32>
    %cst_75 = arith.constant dense<0.000000e+00> : vector<8xf32>
    %203 = vector.multi_reduction <add>, %202, %cst_75 [1] : vector<8x32xf32> to vector<8xf32>
    %204 = vector.shape_cast %203 : vector<8xf32> to vector<8x1xf32>
    %cst_76 = arith.constant 3.200000e+01 : f32
    %205 = vector.broadcast %cst_76 : f32 to vector<8x1xf32>
    %206 = arith.divf %204, %205 : vector<8x1xf32>
    %cst_77 = arith.constant 9.99999974E-6 : f32
    %207 = vector.broadcast %cst_77 : f32 to vector<8x1xf32>
    %208 = arith.addf %206, %207 : vector<8x1xf32>
    %209 = math.rsqrt %208 : vector<8x1xf32>
    %210 = vector.broadcast %209 : vector<8x1xf32> to vector<8x32xf32>
    %211 = arith.mulf %201, %210 : vector<8x32xf32>
    %212 = vector.broadcast %194 : vector<1x32xf32> to vector<8x32xf32>
    %213 = arith.mulf %211, %212 : vector<8x32xf32>
    %214 = vector.broadcast %195 : vector<1x32xf32> to vector<8x32xf32>
    %215 = arith.addf %213, %214 : vector<8x32xf32>
    %c0_78 = arith.constant 0 : index
    %c0_79 = arith.constant 0 : index
    %c0_80 = arith.constant 0 : index
    %216 = vector.load %arg4[%c0_78, %c0_79, %c0_80] : memref<1x16x32xf32, #tpu.memory_space<vmem>>, vector<1x16x32xf32>
    %217 = vector.shape_cast %216 : vector<1x16x32xf32> to vector<16x32xf32>
    %218 = arith.truncf %217 : vector<16x32xf32> to vector<16x32xbf16>
    %219 = arith.truncf %215 : vector<8x32xf32> to vector<8x32xbf16>
    %220 = arith.index_cast %arg1 : i32 to index
    %c0_81 = arith.constant 0 : index
    %c0_82 = arith.constant 0 : index
    %221 = vector.load %arg15[%220, %c0_81, %c0_82] : memref<2x32x32xbf16, #tpu.memory_space<vmem>>, vector<1x32x32xbf16>
    %222 = vector.shape_cast %221 : vector<1x32x32xbf16> to vector<32x32xbf16>
    %cst_83 = arith.constant dense<0.000000e+00> : vector<8x32xf32>
    %223 = tpu.matmul %219, %222, %cst_83 {dimension_numbers = #tpu.dot_dimension_numbers<[1], [0], [0], [1], [0, 0, 1, 1], [], []>} : vector<8x32xbf16>, vector<32x32xbf16>, vector<8x32xf32> -> vector<8x32xf32>
    %224 = arith.index_cast %arg1 : i32 to index
    %c0_84 = arith.constant 0 : index
    %c0_85 = arith.constant 0 : index
    %225 = vector.load %arg16[%224, %c0_84, %c0_85] : memref<2x1x32xf32, #tpu.memory_space<vmem>>, vector<1x1x32xf32>
    %226 = vector.shape_cast %225 : vector<1x1x32xf32> to vector<1x32xf32>
    %227 = vector.broadcast %226 : vector<1x32xf32> to vector<8x32xf32>
    %228 = arith.addf %223, %227 : vector<8x32xf32>
    %229 = arith.index_cast %arg1 : i32 to index
    %c0_86 = arith.constant 0 : index
    %c0_87 = arith.constant 0 : index
    %230 = vector.load %arg17[%229, %c0_86, %c0_87] : memref<2x32x64xbf16, #tpu.memory_space<vmem>>, vector<1x32x64xbf16>
    %231 = vector.shape_cast %230 : vector<1x32x64xbf16> to vector<32x64xbf16>
    %cst_88 = arith.constant dense<0.000000e+00> : vector<16x64xf32>
    %232 = tpu.matmul %218, %231, %cst_88 {dimension_numbers = #tpu.dot_dimension_numbers<[1], [0], [0], [1], [0, 0, 1, 1], [], []>} : vector<16x32xbf16>, vector<32x64xbf16>, vector<16x64xf32> -> vector<16x64xf32>
    %233 = arith.index_cast %arg1 : i32 to index
    %c0_89 = arith.constant 0 : index
    %c0_90 = arith.constant 0 : index
    %234 = vector.load %arg18[%233, %c0_89, %c0_90] : memref<2x1x64xf32, #tpu.memory_space<vmem>>, vector<1x1x64xf32>
    %235 = vector.shape_cast %234 : vector<1x1x64xf32> to vector<1x64xf32>
    %236 = vector.broadcast %235 : vector<1x64xf32> to vector<16x64xf32>
    %237 = arith.addf %232, %236 : vector<16x64xf32>
    %238 = vector.extract_strided_slice %237 {offsets = [0, 0], sizes = [16, 32], strides = [1, 1]} : vector<16x64xf32> to vector<16x32xf32>
    %239 = vector.extract_strided_slice %237 {offsets = [0, 32], sizes = [16, 32], strides = [1, 1]} : vector<16x64xf32> to vector<16x32xf32>
    %240 = arith.index_cast %arg1 : i32 to index
    %c0_91 = arith.constant 0 : index
    %c0_92 = arith.constant 0 : index
    %241 = vector.load %arg19[%240, %c0_91, %c0_92] : memref<2x32x32xbf16, #tpu.memory_space<vmem>>, vector<1x32x32xbf16>
    %242 = vector.shape_cast %241 : vector<1x32x32xbf16> to vector<32x32xbf16>
    %243 = arith.index_cast %arg1 : i32 to index
    %c0_93 = arith.constant 0 : index
    %c0_94 = arith.constant 0 : index
    %244 = vector.load %arg20[%243, %c0_93, %c0_94] : memref<2x1x32xf32, #tpu.memory_space<vmem>>, vector<1x1x32xf32>
    %245 = vector.shape_cast %244 : vector<1x1x32xf32> to vector<1x32xf32>
    %246 = arith.truncf %228 : vector<8x32xf32> to vector<8x32xbf16>
    %247 = arith.truncf %239 : vector<16x32xf32> to vector<16x32xbf16>
    %248 = arith.truncf %238 : vector<16x32xf32> to vector<16x32xbf16>
    %249 = tpu.transpose %248, [1, 0] : vector<16x32xbf16> -> vector<32x16xbf16>
    %250 = vector.extract_strided_slice %246 {offsets = [0, 0], sizes = [8, 8], strides = [1, 1]} : vector<8x32xbf16> to vector<8x8xbf16>
    %251 = vector.extract_strided_slice %249 {offsets = [0, 0], sizes = [8, 16], strides = [1, 1]} : vector<32x16xbf16> to vector<8x16xbf16>
    %cst_95 = arith.constant dense<0.000000e+00> : vector<8x16xf32>
    %252 = tpu.matmul %250, %251, %cst_95 {dimension_numbers = #tpu.dot_dimension_numbers<[1], [0], [0], [1], [0, 0, 1, 1], [], []>} : vector<8x8xbf16>, vector<8x16xbf16>, vector<8x16xf32> -> vector<8x16xf32>
    %253 = vector.extract_strided_slice %246 {offsets = [0, 8], sizes = [8, 8], strides = [1, 1]} : vector<8x32xbf16> to vector<8x8xbf16>
    %254 = vector.extract_strided_slice %249 {offsets = [8, 0], sizes = [8, 16], strides = [1, 1]} : vector<32x16xbf16> to vector<8x16xbf16>
    %cst_96 = arith.constant dense<0.000000e+00> : vector<8x16xf32>
    %255 = tpu.matmul %253, %254, %cst_96 {dimension_numbers = #tpu.dot_dimension_numbers<[1], [0], [0], [1], [0, 0, 1, 1], [], []>} : vector<8x8xbf16>, vector<8x16xbf16>, vector<8x16xf32> -> vector<8x16xf32>
    %256 = vector.extract_strided_slice %246 {offsets = [0, 16], sizes = [8, 8], strides = [1, 1]} : vector<8x32xbf16> to vector<8x8xbf16>
    %257 = vector.extract_strided_slice %249 {offsets = [16, 0], sizes = [8, 16], strides = [1, 1]} : vector<32x16xbf16> to vector<8x16xbf16>
    %cst_97 = arith.constant dense<0.000000e+00> : vector<8x16xf32>
    %258 = tpu.matmul %256, %257, %cst_97 {dimension_numbers = #tpu.dot_dimension_numbers<[1], [0], [0], [1], [0, 0, 1, 1], [], []>} : vector<8x8xbf16>, vector<8x16xbf16>, vector<8x16xf32> -> vector<8x16xf32>
    %259 = vector.extract_strided_slice %246 {offsets = [0, 24], sizes = [8, 8], strides = [1, 1]} : vector<8x32xbf16> to vector<8x8xbf16>
    %260 = vector.extract_strided_slice %249 {offsets = [24, 0], sizes = [8, 16], strides = [1, 1]} : vector<32x16xbf16> to vector<8x16xbf16>
    %cst_98 = arith.constant dense<0.000000e+00> : vector<8x16xf32>
    %261 = tpu.matmul %259, %260, %cst_98 {dimension_numbers = #tpu.dot_dimension_numbers<[1], [0], [0], [1], [0, 0, 1, 1], [], []>} : vector<8x8xbf16>, vector<8x16xbf16>, vector<8x16xf32> -> vector<8x16xf32>
    %262 = vector.shape_cast %252 : vector<8x16xf32> to vector<1x8x16xf32>
    %263 = vector.shape_cast %255 : vector<8x16xf32> to vector<1x8x16xf32>
    %264 = vector.shape_cast %258 : vector<8x16xf32> to vector<1x8x16xf32>
    %265 = vector.shape_cast %261 : vector<8x16xf32> to vector<1x8x16xf32>
    %266 = tpu.concatenate %262, %263, %264, %265 in 0 : vector<1x8x16xf32>, vector<1x8x16xf32>, vector<1x8x16xf32>, vector<1x8x16xf32> -> vector<4x8x16xf32>
    %cst_99 = arith.constant dense<0xFF800000> : vector<4x8xf32>
    %267 = vector.multi_reduction <maximumf>, %266, %cst_99 [2] : vector<4x8x16xf32> to vector<4x8xf32>
    %268 = vector.shape_cast %267 : vector<4x8xf32> to vector<4x8x1xf32>
    %269 = vector.broadcast %268 : vector<4x8x1xf32> to vector<4x8x16xf32>
    %270 = arith.subf %266, %269 : vector<4x8x16xf32>
    %271 = math.exp %270 : vector<4x8x16xf32>
    %cst_100 = arith.constant dense<0.000000e+00> : vector<4x8xf32>
    %272 = vector.multi_reduction <add>, %271, %cst_100 [2] : vector<4x8x16xf32> to vector<4x8xf32>
    %273 = vector.shape_cast %272 : vector<4x8xf32> to vector<4x8x1xf32>
    %274 = tpu.reciprocal %273 {approx = true} : vector<4x8x1xf32> -> vector<4x8x1xf32>
    %275 = vector.broadcast %274 : vector<4x8x1xf32> to vector<4x8x16xf32>
    %276 = arith.mulf %271, %275 : vector<4x8x16xf32>
    %277 = arith.truncf %276 : vector<4x8x16xf32> to vector<4x8x16xbf16>
    %278 = vector.extract_strided_slice %277 {offsets = [0, 0, 0], sizes = [1, 8, 16], strides = [1, 1, 1]} : vector<4x8x16xbf16> to vector<1x8x16xbf16>
    %279 = vector.shape_cast %278 : vector<1x8x16xbf16> to vector<8x16xbf16>
    %280 = vector.extract_strided_slice %247 {offsets = [0, 0], sizes = [16, 8], strides = [1, 1]} : vector<16x32xbf16> to vector<16x8xbf16>
    %cst_101 = arith.constant dense<0.000000e+00> : vector<8x8xf32>
    %281 = tpu.matmul %279, %280, %cst_101 {dimension_numbers = #tpu.dot_dimension_numbers<[1], [0], [0], [1], [0, 0, 1, 1], [], []>} : vector<8x16xbf16>, vector<16x8xbf16>, vector<8x8xf32> -> vector<8x8xf32>
    %c0_102 = arith.constant 0 : index
    %c0_103 = arith.constant 0 : index
    %282 = vector.load %arg29[%c0_102, %c0_103] : memref<8x32xf32, #tpu.memory_space<vmem>>, vector<8x8xf32>
    tpu.vector_store %arg29[%c0_102, %c0_103], %281 {strides = array<i32>} : memref<8x32xf32, #tpu.memory_space<vmem>>, vector<8x8xf32>,
    %283 = vector.extract_strided_slice %277 {offsets = [1, 0, 0], sizes = [1, 8, 16], strides = [1, 1, 1]} : vector<4x8x16xbf16> to vector<1x8x16xbf16>
    %284 = vector.shape_cast %283 : vector<1x8x16xbf16> to vector<8x16xbf16>
    %285 = vector.extract_strided_slice %247 {offsets = [0, 8], sizes = [16, 8], strides = [1, 1]} : vector<16x32xbf16> to vector<16x8xbf16>
    %cst_104 = arith.constant dense<0.000000e+00> : vector<8x8xf32>
    %286 = tpu.matmul %284, %285, %cst_104 {dimension_numbers = #tpu.dot_dimension_numbers<[1], [0], [0], [1], [0, 0, 1, 1], [], []>} : vector<8x16xbf16>, vector<16x8xbf16>, vector<8x8xf32> -> vector<8x8xf32>
    %c0_105 = arith.constant 0 : index
    %c8_106 = arith.constant 8 : index
    %287 = vector.load %arg29[%c0_105, %c8_106] : memref<8x32xf32, #tpu.memory_space<vmem>>, vector<8x8xf32>
    tpu.vector_store %arg29[%c0_105, %c8_106], %286 {strides = array<i32>} : memref<8x32xf32, #tpu.memory_space<vmem>>, vector<8x8xf32>,
    %288 = vector.extract_strided_slice %277 {offsets = [2, 0, 0], sizes = [1, 8, 16], strides = [1, 1, 1]} : vector<4x8x16xbf16> to vector<1x8x16xbf16>
    %289 = vector.shape_cast %288 : vector<1x8x16xbf16> to vector<8x16xbf16>
    %290 = vector.extract_strided_slice %247 {offsets = [0, 16], sizes = [16, 8], strides = [1, 1]} : vector<16x32xbf16> to vector<16x8xbf16>
    %cst_107 = arith.constant dense<0.000000e+00> : vector<8x8xf32>
    %291 = tpu.matmul %289, %290, %cst_107 {dimension_numbers = #tpu.dot_dimension_numbers<[1], [0], [0], [1], [0, 0, 1, 1], [], []>} : vector<8x16xbf16>, vector<16x8xbf16>, vector<8x8xf32> -> vector<8x8xf32>
    %c0_108 = arith.constant 0 : index
    %c16_109 = arith.constant 16 : index
    %292 = vector.load %arg29[%c0_108, %c16_109] : memref<8x32xf32, #tpu.memory_space<vmem>>, vector<8x8xf32>
    tpu.vector_store %arg29[%c0_108, %c16_109], %291 {strides = array<i32>} : memref<8x32xf32, #tpu.memory_space<vmem>>, vector<8x8xf32>,
    %293 = vector.extract_strided_slice %277 {offsets = [3, 0, 0], sizes = [1, 8, 16], strides = [1, 1, 1]} : vector<4x8x16xbf16> to vector<1x8x16xbf16>
    %294 = vector.shape_cast %293 : vector<1x8x16xbf16> to vector<8x16xbf16>
    %295 = vector.extract_strided_slice %247 {offsets = [0, 24], sizes = [16, 8], strides = [1, 1]} : vector<16x32xbf16> to vector<16x8xbf16>
    %cst_110 = arith.constant dense<0.000000e+00> : vector<8x8xf32>
    %296 = tpu.matmul %294, %295, %cst_110 {dimension_numbers = #tpu.dot_dimension_numbers<[1], [0], [0], [1], [0, 0, 1, 1], [], []>} : vector<8x16xbf16>, vector<16x8xbf16>, vector<8x8xf32> -> vector<8x8xf32>
    %c0_111 = arith.constant 0 : index
    %c24_112 = arith.constant 24 : index
    %297 = vector.load %arg29[%c0_111, %c24_112] : memref<8x32xf32, #tpu.memory_space<vmem>>, vector<8x8xf32>
    tpu.vector_store %arg29[%c0_111, %c24_112], %296 {strides = array<i32>} : memref<8x32xf32, #tpu.memory_space<vmem>>, vector<8x8xf32>,
    %c0_113 = arith.constant 0 : index
    %c0_114 = arith.constant 0 : index
    %298 = vector.load %arg29[%c0_113, %c0_114] : memref<8x32xf32, #tpu.memory_space<vmem>>, vector<8x32xf32>
    %299 = arith.truncf %298 : vector<8x32xf32> to vector<8x32xbf16>
    %cst_115 = arith.constant dense<0.000000e+00> : vector<8x32xf32>
    %300 = tpu.matmul %299, %242, %cst_115 {dimension_numbers = #tpu.dot_dimension_numbers<[1], [0], [0], [1], [0, 0, 1, 1], [], []>} : vector<8x32xbf16>, vector<32x32xbf16>, vector<8x32xf32> -> vector<8x32xf32>
    %301 = vector.broadcast %245 : vector<1x32xf32> to vector<8x32xf32>
    %302 = arith.addf %300, %301 : vector<8x32xf32>
    %303 = arith.addf %215, %302 : vector<8x32xf32>
    %304 = vector.extract_strided_slice %6 {offsets = [4, 0], sizes = [1, 32], strides = [1, 1]} : vector<8x32xf32> to vector<1x32xf32>
    %305 = vector.extract_strided_slice %6 {offsets = [5, 0], sizes = [1, 32], strides = [1, 1]} : vector<8x32xf32> to vector<1x32xf32>
    %cst_116 = arith.constant dense<0.000000e+00> : vector<8xf32>
    %306 = vector.multi_reduction <add>, %303, %cst_116 [1] : vector<8x32xf32> to vector<8xf32>
    %307 = vector.shape_cast %306 : vector<8xf32> to vector<8x1xf32>
    %cst_117 = arith.constant 3.200000e+01 : f32
    %308 = vector.broadcast %cst_117 : f32 to vector<8x1xf32>
    %309 = arith.divf %307, %308 : vector<8x1xf32>
    %310 = vector.broadcast %309 : vector<8x1xf32> to vector<8x32xf32>
    %311 = arith.subf %303, %310 : vector<8x32xf32>
    %312 = arith.mulf %311, %311 : vector<8x32xf32>
    %cst_118 = arith.constant dense<0.000000e+00> : vector<8xf32>
    %313 = vector.multi_reduction <add>, %312, %cst_118 [1] : vector<8x32xf32> to vector<8xf32>
    %314 = vector.shape_cast %313 : vector<8xf32> to vector<8x1xf32>
    %cst_119 = arith.constant 3.200000e+01 : f32
    %315 = vector.broadcast %cst_119 : f32 to vector<8x1xf32>
    %316 = arith.divf %314, %315 : vector<8x1xf32>
    %cst_120 = arith.constant 9.99999974E-6 : f32
    %317 = vector.broadcast %cst_120 : f32 to vector<8x1xf32>
    %318 = arith.addf %316, %317 : vector<8x1xf32>
    %319 = math.rsqrt %318 : vector<8x1xf32>
    %320 = vector.broadcast %319 : vector<8x1xf32> to vector<8x32xf32>
    %321 = arith.mulf %311, %320 : vector<8x32xf32>
    %322 = vector.broadcast %304 : vector<1x32xf32> to vector<8x32xf32>
    %323 = arith.mulf %321, %322 : vector<8x32xf32>
    %324 = vector.broadcast %305 : vector<1x32xf32> to vector<8x32xf32>
    %325 = arith.addf %323, %324 : vector<8x32xf32>
    %326 = arith.truncf %325 : vector<8x32xf32> to vector<8x32xbf16>
    %327 = arith.index_cast %arg1 : i32 to index
    %c0_121 = arith.constant 0 : index
    %c0_122 = arith.constant 0 : index
    %328 = vector.load %arg21[%327, %c0_121, %c0_122] : memref<2x32x64xbf16, #tpu.memory_space<vmem>>, vector<1x32x64xbf16>
    %329 = vector.shape_cast %328 : vector<1x32x64xbf16> to vector<32x64xbf16>
    %cst_123 = arith.constant dense<0.000000e+00> : vector<8x64xf32>
    %330 = tpu.matmul %326, %329, %cst_123 {dimension_numbers = #tpu.dot_dimension_numbers<[1], [0], [0], [1], [0, 0, 1, 1], [], []>} : vector<8x32xbf16>, vector<32x64xbf16>, vector<8x64xf32> -> vector<8x64xf32>
    %331 = arith.index_cast %arg1 : i32 to index
    %c0_124 = arith.constant 0 : index
    %c0_125 = arith.constant 0 : index
    %332 = vector.load %arg22[%331, %c0_124, %c0_125] : memref<2x1x64xf32, #tpu.memory_space<vmem>>, vector<1x1x64xf32>
    %333 = vector.shape_cast %332 : vector<1x1x64xf32> to vector<1x64xf32>
    %334 = vector.broadcast %333 : vector<1x64xf32> to vector<8x64xf32>
    %335 = arith.addf %330, %334 : vector<8x64xf32>
    %cst_126 = arith.constant 0.000000e+00 : f32
    %336 = vector.broadcast %cst_126 : f32 to vector<8x64xf32>
    %337 = arith.maximumf %335, %336 : vector<8x64xf32>
    %338 = arith.truncf %337 : vector<8x64xf32> to vector<8x64xbf16>
    %339 = arith.index_cast %arg1 : i32 to index
    %c0_127 = arith.constant 0 : index
    %c0_128 = arith.constant 0 : index
    %340 = vector.load %arg23[%339, %c0_127, %c0_128] : memref<2x64x32xbf16, #tpu.memory_space<vmem>>, vector<1x64x32xbf16>
    %341 = vector.shape_cast %340 : vector<1x64x32xbf16> to vector<64x32xbf16>
    %cst_129 = arith.constant dense<0.000000e+00> : vector<8x32xf32>
    %342 = tpu.matmul %338, %341, %cst_129 {dimension_numbers = #tpu.dot_dimension_numbers<[1], [0], [0], [1], [0, 0, 1, 1], [], []>} : vector<8x64xbf16>, vector<64x32xbf16>, vector<8x32xf32> -> vector<8x32xf32>
    %343 = arith.index_cast %arg1 : i32 to index
    %c0_130 = arith.constant 0 : index
    %c0_131 = arith.constant 0 : index
    %344 = vector.load %arg24[%343, %c0_130, %c0_131] : memref<2x1x32xf32, #tpu.memory_space<vmem>>, vector<1x1x32xf32>
    %345 = vector.shape_cast %344 : vector<1x1x32xf32> to vector<1x32xf32>
    %346 = vector.broadcast %345 : vector<1x32xf32> to vector<8x32xf32>
    %347 = arith.addf %342, %346 : vector<8x32xf32>
    %348 = arith.addf %325, %347 : vector<8x32xf32>
    %349 = vector.extract_strided_slice %6 {offsets = [6, 0], sizes = [1, 32], strides = [1, 1]} : vector<8x32xf32> to vector<1x32xf32>
    %350 = vector.extract_strided_slice %6 {offsets = [7, 0], sizes = [1, 32], strides = [1, 1]} : vector<8x32xf32> to vector<1x32xf32>
    %cst_132 = arith.constant dense<0.000000e+00> : vector<8xf32>
    %351 = vector.multi_reduction <add>, %348, %cst_132 [1] : vector<8x32xf32> to vector<8xf32>
    %352 = vector.shape_cast %351 : vector<8xf32> to vector<8x1xf32>
    %cst_133 = arith.constant 3.200000e+01 : f32
    %353 = vector.broadcast %cst_133 : f32 to vector<8x1xf32>
    %354 = arith.divf %352, %353 : vector<8x1xf32>
    %355 = vector.broadcast %354 : vector<8x1xf32> to vector<8x32xf32>
    %356 = arith.subf %348, %355 : vector<8x32xf32>
    %357 = arith.mulf %356, %356 : vector<8x32xf32>
    %cst_134 = arith.constant dense<0.000000e+00> : vector<8xf32>
    %358 = vector.multi_reduction <add>, %357, %cst_134 [1] : vector<8x32xf32> to vector<8xf32>
    %359 = vector.shape_cast %358 : vector<8xf32> to vector<8x1xf32>
    %cst_135 = arith.constant 3.200000e+01 : f32
    %360 = vector.broadcast %cst_135 : f32 to vector<8x1xf32>
    %361 = arith.divf %359, %360 : vector<8x1xf32>
    %cst_136 = arith.constant 9.99999974E-6 : f32
    %362 = vector.broadcast %cst_136 : f32 to vector<8x1xf32>
    %363 = arith.addf %361, %362 : vector<8x1xf32>
    %364 = math.rsqrt %363 : vector<8x1xf32>
    %365 = vector.broadcast %364 : vector<8x1xf32> to vector<8x32xf32>
    %366 = arith.mulf %356, %365 : vector<8x32xf32>
    %367 = vector.broadcast %349 : vector<1x32xf32> to vector<8x32xf32>
    %368 = arith.mulf %366, %367 : vector<8x32xf32>
    %369 = vector.broadcast %350 : vector<1x32xf32> to vector<8x32xf32>
    %370 = arith.addf %368, %369 : vector<8x32xf32>
    %c1_i32 = arith.constant 1 : i32
    %371 = arith.cmpi slt, %arg1, %c1_i32 : i32
    %372 = arith.extui %371 : i1 to i32
    %c0_i32_137 = arith.constant 0 : i32
    %373 = arith.cmpi ne, %372, %c0_i32_137 : i32
    scf.if %373 {
      %c0_140 = arith.constant 0 : index
      %c0_141 = arith.constant 0 : index
      %377 = vector.load %arg28[%c0_140, %c0_141] : memref<8x32xf32, #tpu.memory_space<vmem>>, vector<8x32xf32>
      tpu.vector_store %arg28[%c0_140, %c0_141], %370 {strides = array<i32>} : memref<8x32xf32, #tpu.memory_space<vmem>>, vector<8x32xf32>,
    } else {
    }
    %c1_i32_138 = arith.constant 1 : i32
    %374 = arith.cmpi eq, %arg1, %c1_i32_138 : i32
    %375 = arith.extui %374 : i1 to i32
    %c0_i32_139 = arith.constant 0 : i32
    %376 = arith.cmpi ne, %375, %c0_i32_139 : i32
    scf.if %376 {
      %c0_140 = arith.constant 0 : index
      %c0_141 = arith.constant 0 : index
      %377 = vector.load %arg26[%c0_140, %c0_141] : memref<2x32xf32, #tpu.memory_space<vmem>>, vector<2x32xf32>
      %378 = vector.extract_strided_slice %377 {offsets = [0, 0], sizes = [1, 32], strides = [1, 1]} : vector<2x32xf32> to vector<1x32xf32>
      %379 = vector.extract_strided_slice %377 {offsets = [1, 0], sizes = [1, 32], strides = [1, 1]} : vector<2x32xf32> to vector<1x32xf32>
      %cst_142 = arith.constant dense<0.000000e+00> : vector<8xf32>
      %380 = vector.multi_reduction <add>, %370, %cst_142 [1] : vector<8x32xf32> to vector<8xf32>
      %381 = vector.shape_cast %380 : vector<8xf32> to vector<8x1xf32>
      %cst_143 = arith.constant 3.200000e+01 : f32
      %382 = vector.broadcast %cst_143 : f32 to vector<8x1xf32>
      %383 = arith.divf %381, %382 : vector<8x1xf32>
      %384 = vector.broadcast %383 : vector<8x1xf32> to vector<8x32xf32>
      %385 = arith.subf %370, %384 : vector<8x32xf32>
      %386 = arith.mulf %385, %385 : vector<8x32xf32>
      %cst_144 = arith.constant dense<0.000000e+00> : vector<8xf32>
      %387 = vector.multi_reduction <add>, %386, %cst_144 [1] : vector<8x32xf32> to vector<8xf32>
      %388 = vector.shape_cast %387 : vector<8xf32> to vector<8x1xf32>
      %cst_145 = arith.constant 3.200000e+01 : f32
      %389 = vector.broadcast %cst_145 : f32 to vector<8x1xf32>
      %390 = arith.divf %388, %389 : vector<8x1xf32>
      %cst_146 = arith.constant 9.99999974E-6 : f32
      %391 = vector.broadcast %cst_146 : f32 to vector<8x1xf32>
      %392 = arith.addf %390, %391 : vector<8x1xf32>
      %393 = math.rsqrt %392 : vector<8x1xf32>
      %394 = vector.broadcast %393 : vector<8x1xf32> to vector<8x32xf32>
      %395 = arith.mulf %385, %394 : vector<8x32xf32>
      %396 = vector.broadcast %378 : vector<1x32xf32> to vector<8x32xf32>
      %397 = arith.mulf %395, %396 : vector<8x32xf32>
      %398 = vector.broadcast %379 : vector<1x32xf32> to vector<8x32xf32>
      %399 = arith.addf %397, %398 : vector<8x32xf32>
      %c0_147 = arith.constant 0 : index
      %c0_148 = arith.constant 0 : index
      %c0_149 = arith.constant 0 : index
      %400 = vector.load %arg27[%c0_147, %c0_148, %c0_149] : memref<1x8x32xf32, #tpu.memory_space<vmem>>, vector<1x8x32xf32>
      %401 = vector.shape_cast %400 : vector<1x8x32xf32> to vector<8x32xf32>
      %402 = vector.shape_cast %399 : vector<8x32xf32> to vector<1x8x32xf32>
      tpu.vector_store %arg27[%c0_147, %c0_148, %c0_149], %402 {strides = array<i32>} : memref<1x8x32xf32, #tpu.memory_space<vmem>>, vector<1x8x32xf32>,
    } else {
    }
    return
  }
  func.func @transform_0(%arg0: i32, %arg1: i32) -> (i32, i32, i32) {
    %c0_i32 = arith.constant 0 : i32
    %c0_i32_0 = arith.constant 0 : i32
    %c0_i32_1 = arith.constant 0 : i32
    return %arg0, %c0_i32, %c0_i32_0 : i32, i32, i32
  }
  func.func @transform_1(%arg0: i32, %arg1: i32) -> (i32, i32, i32) {
    %c0_i32 = arith.constant 0 : i32
    %c0_i32_0 = arith.constant 0 : i32
    %c0_i32_1 = arith.constant 0 : i32
    return %arg0, %c0_i32, %c0_i32_0 : i32, i32, i32
  }
  func.func @transform_2(%arg0: i32, %arg1: i32) -> (i32, i32, i32) {
    %c0_i32 = arith.constant 0 : i32
    %c0_i32_0 = arith.constant 0 : i32
    %c0_i32_1 = arith.constant 0 : i32
    return %arg0, %c0_i32, %c0_i32_0 : i32, i32, i32
  }
  func.func @transform_3(%arg0: i32, %arg1: i32) -> (i32, i32, i32) {
    %c0_i32 = arith.constant 0 : i32
    %c0_i32_0 = arith.constant 0 : i32
    %c0_i32_1 = arith.constant 0 : i32
    %c0_i32_2 = arith.constant 0 : i32
    return %c0_i32, %c0_i32_0, %c0_i32_1 : i32, i32, i32
  }
  func.func @transform_4(%arg0: i32, %arg1: i32) -> (i32, i32, i32) {
    %c0_i32 = arith.constant 0 : i32
    %c0_i32_0 = arith.constant 0 : i32
    %c0_i32_1 = arith.constant 0 : i32
    %c0_i32_2 = arith.constant 0 : i32
    return %c0_i32, %c0_i32_0, %c0_i32_1 : i32, i32, i32
  }
  func.func @transform_5(%arg0: i32, %arg1: i32) -> (i32, i32, i32) {
    %c0_i32 = arith.constant 0 : i32
    %c0_i32_0 = arith.constant 0 : i32
    %c0_i32_1 = arith.constant 0 : i32
    %c0_i32_2 = arith.constant 0 : i32
    return %c0_i32, %c0_i32_0, %c0_i32_1 : i32, i32, i32
  }
  func.func @transform_6(%arg0: i32, %arg1: i32) -> (i32, i32, i32) {
    %c0_i32 = arith.constant 0 : i32
    %c0_i32_0 = arith.constant 0 : i32
    %c0_i32_1 = arith.constant 0 : i32
    %c0_i32_2 = arith.constant 0 : i32
    return %c0_i32, %c0_i32_0, %c0_i32_1 : i32, i32, i32
  }
  func.func @transform_7(%arg0: i32, %arg1: i32) -> (i32, i32, i32) {
    %c0_i32 = arith.constant 0 : i32
    %c0_i32_0 = arith.constant 0 : i32
    %c0_i32_1 = arith.constant 0 : i32
    %c0_i32_2 = arith.constant 0 : i32
    return %c0_i32, %c0_i32_0, %c0_i32_1 : i32, i32, i32
  }
  func.func @transform_8(%arg0: i32, %arg1: i32) -> (i32, i32, i32) {
    %c0_i32 = arith.constant 0 : i32
    %c0_i32_0 = arith.constant 0 : i32
    %c0_i32_1 = arith.constant 0 : i32
    %c0_i32_2 = arith.constant 0 : i32
    return %c0_i32, %c0_i32_0, %c0_i32_1 : i32, i32, i32
  }
  func.func @transform_9(%arg0: i32, %arg1: i32) -> (i32, i32, i32) {
    %c0_i32 = arith.constant 0 : i32
    %c0_i32_0 = arith.constant 0 : i32
    %c0_i32_1 = arith.constant 0 : i32
    %c0_i32_2 = arith.constant 0 : i32
    return %c0_i32, %c0_i32_0, %c0_i32_1 : i32, i32, i32
  }
  func.func @transform_10(%arg0: i32, %arg1: i32) -> (i32, i32, i32) {
    %c0_i32 = arith.constant 0 : i32
    %c0_i32_0 = arith.constant 0 : i32
    %c0_i32_1 = arith.constant 0 : i32
    %c0_i32_2 = arith.constant 0 : i32
    return %c0_i32, %c0_i32_0, %c0_i32_1 : i32, i32, i32
  }
  func.func @transform_11(%arg0: i32, %arg1: i32) -> (i32, i32, i32) {
    %c0_i32 = arith.constant 0 : i32
    %c0_i32_0 = arith.constant 0 : i32
    %c0_i32_1 = arith.constant 0 : i32
    %c0_i32_2 = arith.constant 0 : i32
    return %c0_i32, %c0_i32_0, %c0_i32_1 : i32, i32, i32
  }
  func.func @transform_12(%arg0: i32, %arg1: i32) -> (i32, i32, i32) {
    %c0_i32 = arith.constant 0 : i32
    %c0_i32_0 = arith.constant 0 : i32
    %c0_i32_1 = arith.constant 0 : i32
    %c0_i32_2 = arith.constant 0 : i32
    return %c0_i32, %c0_i32_0, %c0_i32_1 : i32, i32, i32
  }
  func.func @transform_13(%arg0: i32, %arg1: i32) -> (i32, i32, i32) {
    %c0_i32 = arith.constant 0 : i32
    %c0_i32_0 = arith.constant 0 : i32
    %c0_i32_1 = arith.constant 0 : i32
    %c0_i32_2 = arith.constant 0 : i32
    return %c0_i32, %c0_i32_0, %c0_i32_1 : i32, i32, i32
  }
  func.func @transform_14(%arg0: i32, %arg1: i32) -> (i32, i32, i32) {
    %c0_i32 = arith.constant 0 : i32
    %c0_i32_0 = arith.constant 0 : i32
    %c0_i32_1 = arith.constant 0 : i32
    %c0_i32_2 = arith.constant 0 : i32
    return %c0_i32, %c0_i32_0, %c0_i32_1 : i32, i32, i32
  }
  func.func @transform_15(%arg0: i32, %arg1: i32) -> (i32, i32, i32) {
    %c0_i32 = arith.constant 0 : i32
    %c0_i32_0 = arith.constant 0 : i32
    %c0_i32_1 = arith.constant 0 : i32
    %c0_i32_2 = arith.constant 0 : i32
    return %c0_i32, %c0_i32_0, %c0_i32_1 : i32, i32, i32
  }
  func.func @transform_16(%arg0: i32, %arg1: i32) -> (i32, i32, i32) {
    %c0_i32 = arith.constant 0 : i32
    %c0_i32_0 = arith.constant 0 : i32
    %c0_i32_1 = arith.constant 0 : i32
    %c0_i32_2 = arith.constant 0 : i32
    return %c0_i32, %c0_i32_0, %c0_i32_1 : i32, i32, i32
  }
  func.func @transform_17(%arg0: i32, %arg1: i32) -> (i32, i32, i32) {
    %c0_i32 = arith.constant 0 : i32
    %c0_i32_0 = arith.constant 0 : i32
    %c0_i32_1 = arith.constant 0 : i32
    %c0_i32_2 = arith.constant 0 : i32
    return %c0_i32, %c0_i32_0, %c0_i32_1 : i32, i32, i32
  }
  func.func @transform_18(%arg0: i32, %arg1: i32) -> (i32, i32, i32) {
    %c0_i32 = arith.constant 0 : i32
    %c0_i32_0 = arith.constant 0 : i32
    %c0_i32_1 = arith.constant 0 : i32
    %c0_i32_2 = arith.constant 0 : i32
    return %c0_i32, %c0_i32_0, %c0_i32_1 : i32, i32, i32
  }
  func.func @transform_19(%arg0: i32, %arg1: i32) -> (i32, i32, i32) {
    %c0_i32 = arith.constant 0 : i32
    %c0_i32_0 = arith.constant 0 : i32
    %c0_i32_1 = arith.constant 0 : i32
    %c0_i32_2 = arith.constant 0 : i32
    return %c0_i32, %c0_i32_0, %c0_i32_1 : i32, i32, i32
  }
  func.func @transform_20(%arg0: i32, %arg1: i32) -> (i32, i32, i32) {
    %c0_i32 = arith.constant 0 : i32
    %c0_i32_0 = arith.constant 0 : i32
    %c0_i32_1 = arith.constant 0 : i32
    %c0_i32_2 = arith.constant 0 : i32
    return %c0_i32, %c0_i32_0, %c0_i32_1 : i32, i32, i32
  }
  func.func @transform_21(%arg0: i32, %arg1: i32) -> (i32, i32, i32) {
    %c0_i32 = arith.constant 0 : i32
    %c0_i32_0 = arith.constant 0 : i32
    %c0_i32_1 = arith.constant 0 : i32
    %c0_i32_2 = arith.constant 0 : i32
    return %c0_i32, %c0_i32_0, %c0_i32_1 : i32, i32, i32
  }
  func.func @transform_22(%arg0: i32, %arg1: i32) -> (i32, i32, i32) {
    %c0_i32 = arith.constant 0 : i32
    %c0_i32_0 = arith.constant 0 : i32
    %c0_i32_1 = arith.constant 0 : i32
    %c0_i32_2 = arith.constant 0 : i32
    return %c0_i32, %c0_i32_0, %c0_i32_1 : i32, i32, i32
  }
  func.func @transform_23(%arg0: i32, %arg1: i32) -> (i32, i32, i32) {
    %c0_i32 = arith.constant 0 : i32
    %c0_i32_0 = arith.constant 0 : i32
    %c0_i32_1 = arith.constant 0 : i32
    %c0_i32_2 = arith.constant 0 : i32
    return %c0_i32, %c0_i32_0, %c0_i32_1 : i32, i32, i32
  }
  func.func @transform_24(%arg0: i32, %arg1: i32) -> (i32, i32) {
    %c0_i32 = arith.constant 0 : i32
    %c0_i32_0 = arith.constant 0 : i32
    %c0_i32_1 = arith.constant 0 : i32
    return %c0_i32, %c0_i32_0 : i32, i32
  }
  func.func @transform_25(%arg0: i32, %arg1: i32) -> (i32, i32, i32) {
    %c0_i32 = arith.constant 0 : i32
    %c0_i32_0 = arith.constant 0 : i32
    %c0_i32_1 = arith.constant 0 : i32
    return %arg0, %c0_i32, %c0_i32_0 : i32, i32, i32
  }
}

</mosaic_0001>

<llo_original>
// kernel: tpu_custom_call.1
$region0: #{tpu_custom_call.1}
  #allocation0 [shape = 'u32[]', space=smem, size = 0x4, offset = 0x4, fixed_abs, tag = 'smem constant byte address 0x4 - core index']
  #allocation1 [shape = 'u32[72,128]{1,0:T(1,128)}', space=vmem, size = 0x9000, scoped, tag = 'internal scratch']
  #allocation2 [shape = 'f32[8,32]{1,0:T(8,128)}', space=vmem, size = 0x1000, scoped, tag = 'scratch operand']
  #allocation3 [shape = 'f32[8,32]{1,0:T(8,128)}', space=vmem, size = 0x1000, scoped, tag = 'scratch operand']
  %s0 = inlined_call_operand.hbm [shape: f32[2,8,32], index: 0, kind: input, shape index: {}]
  %s1 = inlined_call_operand.vmem [shape: f32[2,16,32], index: 1, kind: input, shape index: {}]
  %s2 = inlined_call_operand.vmem [shape: f32[2,16,32], index: 2, kind: input, shape index: {}]
  %s3 = inlined_call_operand.vmem [shape: bf16[2,32,96], index: 3, kind: input, shape index: {}]
  %s4 = inlined_call_operand.hbm [shape: f32[2,1,96], index: 4, kind: input, shape index: {}]
  %s5 = inlined_call_operand.hbm [shape: bf16[2,32,32], index: 5, kind: input, shape index: {}]
  %s6 = inlined_call_operand.hbm [shape: f32[2,1,32], index: 6, kind: input, shape index: {}]
  %s7 = inlined_call_operand.hbm [shape: bf16[2,32,32], index: 7, kind: input, shape index: {}]
  %s8 = inlined_call_operand.hbm [shape: f32[2,1,32], index: 8, kind: input, shape index: {}]
  %s9 = inlined_call_operand.hbm [shape: bf16[2,32,64], index: 9, kind: input, shape index: {}]
  %s10 = inlined_call_operand.hbm [shape: f32[2,1,64], index: 10, kind: input, shape index: {}]
  %s11 = inlined_call_operand.hbm [shape: bf16[2,32,32], index: 11, kind: input, shape index: {}]
  %s12 = inlined_call_operand.hbm [shape: f32[2,1,32], index: 12, kind: input, shape index: {}]
  %s13 = inlined_call_operand.hbm [shape: bf16[2,32,32], index: 13, kind: input, shape index: {}]
  %s14 = inlined_call_operand.hbm [shape: f32[2,1,32], index: 14, kind: input, shape index: {}]
  %s15 = inlined_call_operand.hbm [shape: bf16[2,32,64], index: 15, kind: input, shape index: {}]
  %s16 = inlined_call_operand.hbm [shape: f32[2,1,64], index: 16, kind: input, shape index: {}]
  %s17 = inlined_call_operand.hbm [shape: bf16[2,32,32], index: 17, kind: input, shape index: {}]
  %s18 = inlined_call_operand.hbm [shape: f32[2,1,32], index: 18, kind: input, shape index: {}]
  %s19 = inlined_call_operand.hbm [shape: bf16[2,32,64], index: 19, kind: input, shape index: {}]
  %s20 = inlined_call_operand.vmem [shape: f32[2,1,64], index: 20, kind: input, shape index: {}]
  %s21 = inlined_call_operand.vmem [shape: bf16[2,64,32], index: 21, kind: input, shape index: {}]
  %s22 = inlined_call_operand.vmem [shape: f32[2,1,32], index: 22, kind: input, shape index: {}]
  %s23 = inlined_call_operand.vmem [shape: f32[2,8,32], index: 23, kind: input, shape index: {}]
  %s24 = inlined_call_operand.vmem [shape: f32[2,32], index: 24, kind: input, shape index: {}]
  %s25 = inlined_call_operand.hbm [shape: f32[2,8,32], index: 25, kind: output, shape index: {}]
  %s26 = sld [smem:[#allocation0]]
  $region213: #{tpu_custom_call.1} parent=0
    _
  %s28 = ssub.s32 1, %s26
  %s29 = scalar_select 0, %s28, %s26
  $region1: #{tpu_custom_call.1} parent=0
    #allocation4 [shape = 'u8[8192]{0}', space=vmem, size = 0x2000, scoped, tag = 'input window, operand 0']
    #allocation5 [shape = 's32[2]{0}', space=sflag, size = 0x8, scoped, tag = 'scoped memory for tpu_custom_call.1']
    #allocation6 [shape = 's32[2]{0}', space=sflag, size = 0x8, scoped, tag = 'scoped memory for tpu_custom_call.1']
    #allocation7 [shape = 'u8[1024]{0}', space=vmem, size = 0x400, scoped, tag = 'input window, operand 4, single buffered']
    #allocation8 [shape = 's32[1]{0}', space=sflag, size = 0x4, scoped, tag = 'scoped memory for tpu_custom_call.1']
    #allocation9 [shape = 'u8[16384]{0}', space=vmem, size = 0x4000, scoped, tag = 'input window, operand 5, single buffered']
    #allocation10 [shape = 'u8[1024]{0}', space=vmem, size = 0x400, scoped, tag = 'input window, operand 6, single buffered']
    #allocation11 [shape = 's32[1]{0}', space=sflag, size = 0x4, scoped, tag = 'scoped memory for tpu_custom_call.1']
    #allocation12 [shape = 'u8[16384]{0}', space=vmem, size = 0x4000, scoped, tag = 'input window, operand 7, single buffered']
    #allocation13 [shape = 'u8[1024]{0}', space=vmem, size = 0x400, scoped, tag = 'input window, operand 8, single buffered']
    #allocation14 [shape = 's32[1]{0}', space=sflag, size = 0x4, scoped, tag = 'scoped memory for tpu_custom_call.1']
    #allocation15 [shape = 'u8[16384]{0}', space=vmem, size = 0x4000, scoped, tag = 'input window, operand 9, single buffered']
    #allocation16 [shape = 'u8[1024]{0}', space=vmem, size = 0x400, scoped, tag = 'input window, operand 10, single buffered']
    #allocation17 [shape = 's32[1]{0}', space=sflag, size = 0x4, scoped, tag = 'scoped memory for tpu_custom_call.1']
    #allocation18 [shape = 'u8[16384]{0}', space=vmem, size = 0x4000, scoped, tag = 'input window, operand 11, single buffered']
    #allocation19 [shape = 'u8[1024]{0}', space=vmem, size = 0x400, scoped, tag = 'input window, operand 12, single buffered']
    #allocation20 [shape = 's32[1]{0}', space=sflag, size = 0x4, scoped, tag = 'scoped memory for tpu_custom_call.1']
    #allocation21 [shape = 'u8[16384]{0}', space=vmem, size = 0x4000, scoped, tag = 'input window, operand 13, single buffered']
    #allocation22 [shape = 'u8[1024]{0}', space=vmem, size = 0x400, scoped, tag = 'input window, operand 14, single buffered']
    #allocation23 [shape = 's32[1]{0}', space=sflag, size = 0x4, scoped, tag = 'scoped memory for tpu_custom_call.1']
    #allocation24 [shape = 'u8[16384]{0}', space=vmem, size = 0x4000, scoped, tag = 'input window, operand 15, single buffered']
    #allocation25 [shape = 'u8[1024]{0}', space=vmem, size = 0x400, scoped, tag = 'input window, operand 16, single buffered']
    #allocation26 [shape = 's32[1]{0}', space=sflag, size = 0x4, scoped, tag = 'scoped memory for tpu_custom_call.1']
    #allocation27 [shape = 'u8[16384]{0}', space=vmem, size = 0x4000, scoped, tag = 'input window, operand 17, single buffered']
    #allocation28 [shape = 'u8[1024]{0}', space=vmem, size = 0x400, scoped, tag = 'input window, operand 18, single buffered']
    #allocation29 [shape = 's32[1]{0}', space=sflag, size = 0x4, scoped, tag = 'scoped memory for tpu_custom_call.1']
    #allocation30 [shape = 'u8[16384]{0}', space=vmem, size = 0x4000, scoped, tag = 'input window, operand 19, single buffered']
    #allocation31 [shape = 'u8[8192]{0}', space=vmem, size = 0x2000, scoped, tag = 'output window, operand 0']
    %30 = vsyncpa [#allocation5], 0
    %s31 = scalar_lea.sflag [#allocation5], 1
    %32 = vsyncpa %s31, 0
    %33 = vsyncpa [#allocation8], 0
    %34 = vsyncpa [#allocation11], 0
    %35 = vsyncpa [#allocation14], 0
    %36 = vsyncpa [#allocation17], 0
    %37 = vsyncpa [#allocation20], 0
    %38 = vsyncpa [#allocation23], 0
    %39 = vsyncpa [#allocation26], 0
    %40 = vsyncpa [#allocation29], 0
    %41 = vsyncpa [#allocation6], 0
    %s42 = scalar_lea.sflag [#allocation6], 1
    %43 = vsyncpa %s42, 0
    loop: start=0, step=1, limit=6
    $region2: #{tpu_custom_call.1} parent=1 // loop_pre_header
      _
    $region3: #{tpu_custom_call.1} parent=1 // loop_header
      %s45 = sphi 0, %s49
      %p46 = scmp.ge.s32.totalorder %s45, 6
      %s52 = sphi 0, %s64
      %s53 = sphi 0, %s60
      %s54 = sphi 0, %s52
      %s55 = sphi 0, %s53
      %s56 = sphi 0, %s54
      %s57 = sphi 0, %s55
      %s67 = sphi 0, %s69
      %s70 = sphi 0, %s67
      %s71 = sphi 0, %s70
      %s87 = sphi 0, %s71
      %s93 = sphi 0, %s95
      %s96 = sphi 0, %s93
      %s97 = sphi 0, %s96
      %s113 = sphi 0, %s97
      %s119 = sphi 0, %s121
      %s122 = sphi 0, %s119
      %s123 = sphi 0, %s122
      %s139 = sphi 0, %s123
      %s143 = sphi 0, %s143
      %s145 = sphi 0, %s143
      %s146 = sphi 0, %s145
      %s160 = sphi 0, %s146
      %s164 = sphi 0, %s164
      %s166 = sphi 0, %s164
      %s167 = sphi 0, %s166
      %s181 = sphi 0, %s167
      %s185 = sphi 0, %s185
      %s187 = sphi 0, %s185
      %s188 = sphi 0, %s187
      %s202 = sphi 0, %s188
      %s206 = sphi 0, %s206
      %s208 = sphi 0, %s206
      %s209 = sphi 0, %s208
      %s223 = sphi 0, %s209
      %s227 = sphi 0, %s227
      %s229 = sphi 0, %s227
      %s230 = sphi 0, %s229
      %s244 = sphi 0, %s230
      %s248 = sphi 0, %s248
      %s250 = sphi 0, %s248
      %s251 = sphi 0, %s250
      %s265 = sphi 0, %s251
      %s269 = sphi 0, %s269
      %s271 = sphi 0, %s269
      %s272 = sphi 0, %s271
      %s286 = sphi 0, %s272
      %s290 = sphi 0, %s290
      %s292 = sphi 0, %s290
      %s293 = sphi 0, %s292
      %s307 = sphi 0, %s293
      %s311 = sphi 0, %s311
      %s313 = sphi 0, %s311
      %s314 = sphi 0, %s313
      %s328 = sphi 0, %s314
      %s332 = sphi 0, %s332
      %s334 = sphi 0, %s332
      %s335 = sphi 0, %s334
      %s349 = sphi 0, %s335
      %s353 = sphi 0, %s353
      %s355 = sphi 0, %s353
      %s356 = sphi 0, %s355
      %s370 = sphi 0, %s356
      %s374 = sphi 0, %s374
      %s376 = sphi 0, %s374
      %s377 = sphi 0, %s376
      %s391 = sphi 0, %s377
      %s395 = sphi 0, %s395
      %s397 = sphi 0, %s395
      %s398 = sphi 0, %s397
      %s412 = sphi 0, %s398
      %s416 = sphi 0, %s416
      %s418 = sphi 0, %s416
      %s419 = sphi 0, %s418
      %s433 = sphi 0, %s419
      %s437 = sphi 0, %s437
      %s439 = sphi 0, %s437
      %s440 = sphi 0, %s439
      %s454 = sphi 0, %s440
      %s458 = sphi 0, %s458
      %s460 = sphi 0, %s458
      %s461 = sphi 0, %s460
      %s475 = sphi 0, %s461
      %s479 = sphi 0, %s479
      %s481 = sphi 0, %s479
      %s482 = sphi 0, %s481
      %s496 = sphi 0, %s482
      %s500 = sphi 0, %s500
      %s502 = sphi 0, %s500
      %s503 = sphi 0, %s502
      %s517 = sphi 0, %s503
      %s521 = sphi 0, %s521
      %s523 = sphi 0, %s521
      %s524 = sphi 0, %s523
      %s538 = sphi 0, %s524
      %s542 = sphi 0, %s542
      %s544 = sphi 0, %s542
      %s545 = sphi 0, %s544
      %s559 = sphi 0, %s545
      %s563 = sphi 0, %s563
      %s565 = sphi 0, %s563
      %s566 = sphi 0, %s565
      %s580 = sphi 0, %s566
      %s584 = sphi 0, %s584
      %s586 = sphi 0, %s584
      %s587 = sphi 0, %s586
      %s601 = sphi 0, %s587
      %s607 = sphi 0, %s609
      %s610 = sphi 0, %s607
      %s611 = sphi 0, %s610
      %s627 = sphi 0, %s611
    $region4: #{tpu_custom_call.1} parent=1 // loop_header_branch
      %48 = sbr.rel (%p46) target = $region8
    $region5: #{tpu_custom_call.1} parent=1 // loop_body
      %s50 = ssub.s32 %s45, 1
      %s51 = ssub.s32 %s45, 2
      %s58 = sadd.s32 1, %s53
      %p59 = scmp.ge.s32.totalorder %s58, 2
      %s60 = scalar_select %p59, 0, %s58
      %s61 = sadd.s32 1, %s52
      %s62 = scalar_select %p59, %s61, %s52
      %p63 = scmp.ge.s32.totalorder %s62, 2
      %s64 = scalar_select %p63, 0, %s62
      %s65 = ssub.s32 %s52, %s64
      %p66 = scmp.eq.s32.totalorder %s65, 0
      %s68 = sadd.s32 %s67, 1
      %s69 = scalar_select %p66, %s67, %s68
      %p72 = pneg %p66
      %p73 = scmp.eq.s32.totalorder %s45, 3
      %p74 = por %p72, %p73
      %p75 = scmp.ne.s32.totalorder %s67, %s70
      %p76 = scmp.eq.s32.totalorder %s45, 0
      %p77 = por %p75, %p76
      %p78 = scmp.ne.s32.totalorder %s67, %s70
      %p79 = scmp.eq.s32.totalorder %s50, 3
      %p80 = por %p78, %p79
      %p81 = scmp.ne.s32.totalorder %s70, %s71
      %p82 = scmp.eq.s32.totalorder %s50, 0
      %p83 = por %p81, %p82
      %p84 = scmp.ne.s32.totalorder %s70, %s71
      %p85 = scmp.eq.s32.totalorder %s51, 3
      %p86 = por %p84, %p85
      %p88 = scmp.ne.s32.totalorder %s71, %s87
      %p89 = scmp.eq.s32.totalorder %s51, 0
      %p90 = por %p88, %p89
      %s91 = ssub.s32 %s52, %s64
      %p92 = scmp.eq.s32.totalorder %s91, 0
      %s94 = sadd.s32 %s93, 1
      %s95 = scalar_select %p92, %s93, %s94
      %p98 = pneg %p92
      %p99 = scmp.eq.s32.totalorder %s45, 3
      %p100 = por %p98, %p99
      %p101 = scmp.ne.s32.totalorder %s93, %s96
      %p102 = scmp.eq.s32.totalorder %s45, 0
      %p103 = por %p101, %p102
      %p104 = scmp.ne.s32.totalorder %s93, %s96
      %p105 = scmp.eq.s32.totalorder %s50, 3
      %p106 = por %p104, %p105
      %p107 = scmp.ne.s32.totalorder %s96, %s97
      %p108 = scmp.eq.s32.totalorder %s50, 0
      %p109 = por %p107, %p108
      %p110 = scmp.ne.s32.totalorder %s96, %s97
      %p111 = scmp.eq.s32.totalorder %s51, 3
      %p112 = por %p110, %p111
      %p114 = scmp.ne.s32.totalorder %s97, %s113
      %p115 = scmp.eq.s32.totalorder %s51, 0
      %p116 = por %p114, %p115
      %s117 = ssub.s32 %s52, %s64
      %p118 = scmp.eq.s32.totalorder %s117, 0
      %s120 = sadd.s32 %s119, 1
      %s121 = scalar_select %p118, %s119, %s120
      %p124 = pneg %p118
      %p125 = scmp.eq.s32.totalorder %s45, 3
      %p126 = por %p124, %p125
      %p127 = scmp.ne.s32.totalorder %s119, %s122
      %p128 = scmp.eq.s32.totalorder %s45, 0
      %p129 = por %p127, %p128
      %p130 = scmp.ne.s32.totalorder %s119, %s122
      %p131 = scmp.eq.s32.totalorder %s50, 3
      %p132 = por %p130, %p131
      %p133 = scmp.ne.s32.totalorder %s122, %s123
      %p134 = scmp.eq.s32.totalorder %s50, 0
      %p135 = por %p133, %p134
      %p136 = scmp.ne.s32.totalorder %s122, %s123
      %p137 = scmp.eq.s32.totalorder %s51, 3
      %p138 = por %p136, %p137
      %p140 = scmp.ne.s32.totalorder %s123, %s139
      %p141 = scmp.eq.s32.totalorder %s51, 0
      %p142 = por %p140, %p141
      %s144 = sadd.s32 %s143, 1
      %p147 = scmp.eq.s32.totalorder %s45, 3
      %p148 = scmp.ne.s32.totalorder %s143, %s145
      %p149 = scmp.eq.s32.totalorder %s45, 0
      %p150 = por %p148, %p149
      %p151 = scmp.ne.s32.totalorder %s143, %s145
      %p152 = scmp.eq.s32.totalorder %s50, 3
      %p153 = por %p151, %p152
      %p154 = scmp.ne.s32.totalorder %s145, %s146
      %p155 = scmp.eq.s32.totalorder %s50, 0
      %p156 = por %p154, %p155
      %p157 = scmp.ne.s32.totalorder %s145, %s146
      %p158 = scmp.eq.s32.totalorder %s51, 3
      %p159 = por %p157, %p158
      %p161 = scmp.ne.s32.totalorder %s146, %s160
      %p162 = scmp.eq.s32.totalorder %s51, 0
      %p163 = por %p161, %p162
      %s165 = sadd.s32 %s164, 1
      %p168 = scmp.eq.s32.totalorder %s45, 3
      %p169 = scmp.ne.s32.totalorder %s164, %s166
      %p170 = scmp.eq.s32.totalorder %s45, 0
      %p171 = por %p169, %p170
      %p172 = scmp.ne.s32.totalorder %s164, %s166
      %p173 = scmp.eq.s32.totalorder %s50, 3
      %p174 = por %p172, %p173
      %p175 = scmp.ne.s32.totalorder %s166, %s167
      %p176 = scmp.eq.s32.totalorder %s50, 0
      %p177 = por %p175, %p176
      %p178 = scmp.ne.s32.totalorder %s166, %s167
      %p179 = scmp.eq.s32.totalorder %s51, 3
      %p180 = por %p178, %p179
      %p182 = scmp.ne.s32.totalorder %s167, %s181
      %p183 = scmp.eq.s32.totalorder %s51, 0
      %p184 = por %p182, %p183
      %s186 = sadd.s32 %s185, 1
      %p189 = scmp.eq.s32.totalorder %s45, 3
      %p190 = scmp.ne.s32.totalorder %s185, %s187
      %p191 = scmp.eq.s32.totalorder %s45, 0
      %p192 = por %p190, %p191
      %p193 = scmp.ne.s32.totalorder %s185, %s187
      %p194 = scmp.eq.s32.totalorder %s50, 3
      %p195 = por %p193, %p194
      %p196 = scmp.ne.s32.totalorder %s187, %s188
      %p197 = scmp.eq.s32.totalorder %s50, 0
      %p198 = por %p196, %p197
      %p199 = scmp.ne.s32.totalorder %s187, %s188
      %p200 = scmp.eq.s32.totalorder %s51, 3
      %p201 = por %p199, %p200
      %p203 = scmp.ne.s32.totalorder %s188, %s202
      %p204 = scmp.eq.s32.totalorder %s51, 0
      %p205 = por %p203, %p204
      %s207 = sadd.s32 %s206, 1
      %p210 = scmp.eq.s32.totalorder %s45, 3
      %p211 = scmp.ne.s32.totalorder %s206, %s208
      %p212 = scmp.eq.s32.totalorder %s45, 0
      %p213 = por %p211, %p212
      %p214 = scmp.ne.s32.totalorder %s206, %s208
      %p215 = scmp.eq.s32.totalorder %s50, 3
      %p216 = por %p214, %p215
      %p217 = scmp.ne.s32.totalorder %s208, %s209
      %p218 = scmp.eq.s32.totalorder %s50, 0
      %p219 = por %p217, %p218
      %p220 = scmp.ne.s32.totalorder %s208, %s209
      %p221 = scmp.eq.s32.totalorder %s51, 3
      %p222 = por %p220, %p221
      %p224 = scmp.ne.s32.totalorder %s209, %s223
      %p225 = scmp.eq.s32.totalorder %s51, 0
      %p226 = por %p224, %p225
      %s228 = sadd.s32 %s227, 1
      %p231 = scmp.eq.s32.totalorder %s45, 3
      %p232 = scmp.ne.s32.totalorder %s227, %s229
      %p233 = scmp.eq.s32.totalorder %s45, 0
      %p234 = por %p232, %p233
      %p235 = scmp.ne.s32.totalorder %s227, %s229
      %p236 = scmp.eq.s32.totalorder %s50, 3
      %p237 = por %p235, %p236
      %p238 = scmp.ne.s32.totalorder %s229, %s230
      %p239 = scmp.eq.s32.totalorder %s50, 0
      %p240 = por %p238, %p239
      %p241 = scmp.ne.s32.totalorder %s229, %s230
      %p242 = scmp.eq.s32.totalorder %s51, 3
      %p243 = por %p241, %p242
      %p245 = scmp.ne.s32.totalorder %s230, %s244
      %p246 = scmp.eq.s32.totalorder %s51, 0
      %p247 = por %p245, %p246
      %s249 = sadd.s32 %s248, 1
      %p252 = scmp.eq.s32.totalorder %s45, 3
      %p253 = scmp.ne.s32.totalorder %s248, %s250
      %p254 = scmp.eq.s32.totalorder %s45, 0
      %p255 = por %p253, %p254
      %p256 = scmp.ne.s32.totalorder %s248, %s250
      %p257 = scmp.eq.s32.totalorder %s50, 3
      %p258 = por %p256, %p257
      %p259 = scmp.ne.s32.totalorder %s250, %s251
      %p260 = scmp.eq.s32.totalorder %s50, 0
      %p261 = por %p259, %p260
      %p262 = scmp.ne.s32.totalorder %s250, %s251
      %p263 = scmp.eq.s32.totalorder %s51, 3
      %p264 = por %p262, %p263
      %p266 = scmp.ne.s32.totalorder %s251, %s265
      %p267 = scmp.eq.s32.totalorder %s51, 0
      %p268 = por %p266, %p267
      %s270 = sadd.s32 %s269, 1
      %p273 = scmp.eq.s32.totalorder %s45, 3
      %p274 = scmp.ne.s32.totalorder %s269, %s271
      %p275 = scmp.eq.s32.totalorder %s45, 0
      %p276 = por %p274, %p275
      %p277 = scmp.ne.s32.totalorder %s269, %s271
      %p278 = scmp.eq.s32.totalorder %s50, 3
      %p279 = por %p277, %p278
      %p280 = scmp.ne.s32.totalorder %s271, %s272
      %p281 = scmp.eq.s32.totalorder %s50, 0
      %p282 = por %p280, %p281
      %p283 = scmp.ne.s32.totalorder %s271, %s272
      %p284 = scmp.eq.s32.totalorder %s51, 3
      %p285 = por %p283, %p284
      %p287 = scmp.ne.s32.totalorder %s272, %s286
      %p288 = scmp.eq.s32.totalorder %s51, 0
      %p289 = por %p287, %p288
      %s291 = sadd.s32 %s290, 1
      %p294 = scmp.eq.s32.totalorder %s45, 3
      %p295 = scmp.ne.s32.totalorder %s290, %s292
      %p296 = scmp.eq.s32.totalorder %s45, 0
      %p297 = por %p295, %p296
      %p298 = scmp.ne.s32.totalorder %s290, %s292
      %p299 = scmp.eq.s32.totalorder %s50, 3
      %p300 = por %p298, %p299
      %p301 = scmp.ne.s32.totalorder %s292, %s293
      %p302 = scmp.eq.s32.totalorder %s50, 0
      %p303 = por %p301, %p302
      %p304 = scmp.ne.s32.totalorder %s292, %s293
      %p305 = scmp.eq.s32.totalorder %s51, 3
      %p306 = por %p304, %p305
      %p308 = scmp.ne.s32.totalorder %s293, %s307
      %p309 = scmp.eq.s32.totalorder %s51, 0
      %p310 = por %p308, %p309
      %s312 = sadd.s32 %s311, 1
      %p315 = scmp.eq.s32.totalorder %s45, 3
      %p316 = scmp.ne.s32.totalorder %s311, %s313
      %p317 = scmp.eq.s32.totalorder %s45, 0
      %p318 = por %p316, %p317
      %p319 = scmp.ne.s32.totalorder %s311, %s313
      %p320 = scmp.eq.s32.totalorder %s50, 3
      %p321 = por %p319, %p320
      %p322 = scmp.ne.s32.totalorder %s313, %s314
      %p323 = scmp.eq.s32.totalorder %s50, 0
      %p324 = por %p322, %p323
      %p325 = scmp.ne.s32.totalorder %s313, %s314
      %p326 = scmp.eq.s32.totalorder %s51, 3
      %p327 = por %p325, %p326
      %p329 = scmp.ne.s32.totalorder %s314, %s328
      %p330 = scmp.eq.s32.totalorder %s51, 0
      %p331 = por %p329, %p330
      %s333 = sadd.s32 %s332, 1
      %p336 = scmp.eq.s32.totalorder %s45, 3
      %p337 = scmp.ne.s32.totalorder %s332, %s334
      %p338 = scmp.eq.s32.totalorder %s45, 0
      %p339 = por %p337, %p338
      %p340 = scmp.ne.s32.totalorder %s332, %s334
      %p341 = scmp.eq.s32.totalorder %s50, 3
      %p342 = por %p340, %p341
      %p343 = scmp.ne.s32.totalorder %s334, %s335
      %p344 = scmp.eq.s32.totalorder %s50, 0
      %p345 = por %p343, %p344
      %p346 = scmp.ne.s32.totalorder %s334, %s335
      %p347 = scmp.eq.s32.totalorder %s51, 3
      %p348 = por %p346, %p347
      %p350 = scmp.ne.s32.totalorder %s335, %s349
      %p351 = scmp.eq.s32.totalorder %s51, 0
      %p352 = por %p350, %p351
      %s354 = sadd.s32 %s353, 1
      %p357 = scmp.eq.s32.totalorder %s45, 3
      %p358 = scmp.ne.s32.totalorder %s353, %s355
      %p359 = scmp.eq.s32.totalorder %s45, 0
      %p360 = por %p358, %p359
      %p361 = scmp.ne.s32.totalorder %s353, %s355
      %p362 = scmp.eq.s32.totalorder %s50, 3
      %p363 = por %p361, %p362
      %p364 = scmp.ne.s32.totalorder %s355, %s356
      %p365 = scmp.eq.s32.totalorder %s50, 0
      %p366 = por %p364, %p365
      %p367 = scmp.ne.s32.totalorder %s355, %s356
      %p368 = scmp.eq.s32.totalorder %s51, 3
      %p369 = por %p367, %p368
      %p371 = scmp.ne.s32.totalorder %s356, %s370
      %p372 = scmp.eq.s32.totalorder %s51, 0
      %p373 = por %p371, %p372
      %s375 = sadd.s32 %s374, 1
      %p378 = scmp.eq.s32.totalorder %s45, 3
      %p379 = scmp.ne.s32.totalorder %s374, %s376
      %p380 = scmp.eq.s32.totalorder %s45, 0
      %p381 = por %p379, %p380
      %p382 = scmp.ne.s32.totalorder %s374, %s376
      %p383 = scmp.eq.s32.totalorder %s50, 3
      %p384 = por %p382, %p383
      %p385 = scmp.ne.s32.totalorder %s376, %s377
      %p386 = scmp.eq.s32.totalorder %s50, 0
      %p387 = por %p385, %p386
      %p388 = scmp.ne.s32.totalorder %s376, %s377
      %p389 = scmp.eq.s32.totalorder %s51, 3
      %p390 = por %p388, %p389
      %p392 = scmp.ne.s32.totalorder %s377, %s391
      %p393 = scmp.eq.s32.totalorder %s51, 0
      %p394 = por %p392, %p393
      %s396 = sadd.s32 %s395, 1
      %p399 = scmp.eq.s32.totalorder %s45, 3
      %p400 = scmp.ne.s32.totalorder %s395, %s397
      %p401 = scmp.eq.s32.totalorder %s45, 0
      %p402 = por %p400, %p401
      %p403 = scmp.ne.s32.totalorder %s395, %s397
      %p404 = scmp.eq.s32.totalorder %s50, 3
      %p405 = por %p403, %p404
      %p406 = scmp.ne.s32.totalorder %s397, %s398
      %p407 = scmp.eq.s32.totalorder %s50, 0
      %p408 = por %p406, %p407
      %p409 = scmp.ne.s32.totalorder %s397, %s398
      %p410 = scmp.eq.s32.totalorder %s51, 3
      %p411 = por %p409, %p410
      %p413 = scmp.ne.s32.totalorder %s398, %s412
      %p414 = scmp.eq.s32.totalorder %s51, 0
      %p415 = por %p413, %p414
      %s417 = sadd.s32 %s416, 1
      %p420 = scmp.eq.s32.totalorder %s45, 3
      %p421 = scmp.ne.s32.totalorder %s416, %s418
      %p422 = scmp.eq.s32.totalorder %s45, 0
      %p423 = por %p421, %p422
      %p424 = scmp.ne.s32.totalorder %s416, %s418
      %p425 = scmp.eq.s32.totalorder %s50, 3
      %p426 = por %p424, %p425
      %p427 = scmp.ne.s32.totalorder %s418, %s419
      %p428 = scmp.eq.s32.totalorder %s50, 0
      %p429 = por %p427, %p428
      %p430 = scmp.ne.s32.totalorder %s418, %s419
      %p431 = scmp.eq.s32.totalorder %s51, 3
      %p432 = por %p430, %p431
      %p434 = scmp.ne.s32.totalorder %s419, %s433
      %p435 = scmp.eq.s32.totalorder %s51, 0
      %p436 = por %p434, %p435
      %s438 = sadd.s32 %s437, 1
      %p441 = scmp.eq.s32.totalorder %s45, 3
      %p442 = scmp.ne.s32.totalorder %s437, %s439
      %p443 = scmp.eq.s32.totalorder %s45, 0
      %p444 = por %p442, %p443
      %p445 = scmp.ne.s32.totalorder %s437, %s439
      %p446 = scmp.eq.s32.totalorder %s50, 3
      %p447 = por %p445, %p446
      %p448 = scmp.ne.s32.totalorder %s439, %s440
      %p449 = scmp.eq.s32.totalorder %s50, 0
      %p450 = por %p448, %p449
      %p451 = scmp.ne.s32.totalorder %s439, %s440
      %p452 = scmp.eq.s32.totalorder %s51, 3
      %p453 = por %p451, %p452
      %p455 = scmp.ne.s32.totalorder %s440, %s454
      %p456 = scmp.eq.s32.totalorder %s51, 0
      %p457 = por %p455, %p456
      %s459 = sadd.s32 %s458, 1
      %p462 = scmp.eq.s32.totalorder %s45, 3
      %p463 = scmp.ne.s32.totalorder %s458, %s460
      %p464 = scmp.eq.s32.totalorder %s45, 0
      %p465 = por %p463, %p464
      %p466 = scmp.ne.s32.totalorder %s458, %s460
      %p467 = scmp.eq.s32.totalorder %s50, 3
      %p468 = por %p466, %p467
      %p469 = scmp.ne.s32.totalorder %s460, %s461
      %p470 = scmp.eq.s32.totalorder %s50, 0
      %p471 = por %p469, %p470
      %p472 = scmp.ne.s32.totalorder %s460, %s461
      %p473 = scmp.eq.s32.totalorder %s51, 3
      %p474 = por %p472, %p473
      %p476 = scmp.ne.s32.totalorder %s461, %s475
      %p477 = scmp.eq.s32.totalorder %s51, 0
      %p478 = por %p476, %p477
      %s480 = sadd.s32 %s479, 1
      %p483 = scmp.eq.s32.totalorder %s45, 3
      %p484 = scmp.ne.s32.totalorder %s479, %s481
      %p485 = scmp.eq.s32.totalorder %s45, 0
      %p486 = por %p484, %p485
      %p487 = scmp.ne.s32.totalorder %s479, %s481
      %p488 = scmp.eq.s32.totalorder %s50, 3
      %p489 = por %p487, %p488
      %p490 = scmp.ne.s32.totalorder %s481, %s482
      %p491 = scmp.eq.s32.totalorder %s50, 0
      %p492 = por %p490, %p491
      %p493 = scmp.ne.s32.totalorder %s481, %s482
      %p494 = scmp.eq.s32.totalorder %s51, 3
      %p495 = por %p493, %p494
      %p497 = scmp.ne.s32.totalorder %s482, %s496
      %p498 = scmp.eq.s32.totalorder %s51, 0
      %p499 = por %p497, %p498
      %s501 = sadd.s32 %s500, 1
      %p504 = scmp.eq.s32.totalorder %s45, 3
      %p505 = scmp.ne.s32.totalorder %s500, %s502
      %p506 = scmp.eq.s32.totalorder %s45, 0
      %p507 = por %p505, %p506
      %p508 = scmp.ne.s32.totalorder %s500, %s502
      %p509 = scmp.eq.s32.totalorder %s50, 3
      %p510 = por %p508, %p509
      %p511 = scmp.ne.s32.totalorder %s502, %s503
      %p512 = scmp.eq.s32.totalorder %s50, 0
      %p513 = por %p511, %p512
      %p514 = scmp.ne.s32.totalorder %s502, %s503
      %p515 = scmp.eq.s32.totalorder %s51, 3
      %p516 = por %p514, %p515
      %p518 = scmp.ne.s32.totalorder %s503, %s517
      %p519 = scmp.eq.s32.totalorder %s51, 0
      %p520 = por %p518, %p519
      %s522 = sadd.s32 %s521, 1
      %p525 = scmp.eq.s32.totalorder %s45, 3
      %p526 = scmp.ne.s32.totalorder %s521, %s523
      %p527 = scmp.eq.s32.totalorder %s45, 0
      %p528 = por %p526, %p527
      %p529 = scmp.ne.s32.totalorder %s521, %s523
      %p530 = scmp.eq.s32.totalorder %s50, 3
      %p531 = por %p529, %p530
      %p532 = scmp.ne.s32.totalorder %s523, %s524
      %p533 = scmp.eq.s32.totalorder %s50, 0
      %p534 = por %p532, %p533
      %p535 = scmp.ne.s32.totalorder %s523, %s524
      %p536 = scmp.eq.s32.totalorder %s51, 3
      %p537 = por %p535, %p536
      %p539 = scmp.ne.s32.totalorder %s524, %s538
      %p540 = scmp.eq.s32.totalorder %s51, 0
      %p541 = por %p539, %p540
      %s543 = sadd.s32 %s542, 1
      %p546 = scmp.eq.s32.totalorder %s45, 3
      %p547 = scmp.ne.s32.totalorder %s542, %s544
      %p548 = scmp.eq.s32.totalorder %s45, 0
      %p549 = por %p547, %p548
      %p550 = scmp.ne.s32.totalorder %s542, %s544
      %p551 = scmp.eq.s32.totalorder %s50, 3
      %p552 = por %p550, %p551
      %p553 = scmp.ne.s32.totalorder %s544, %s545
      %p554 = scmp.eq.s32.totalorder %s50, 0
      %p555 = por %p553, %p554
      %p556 = scmp.ne.s32.totalorder %s544, %s545
      %p557 = scmp.eq.s32.totalorder %s51, 3
      %p558 = por %p556, %p557
      %p560 = scmp.ne.s32.totalorder %s545, %s559
      %p561 = scmp.eq.s32.totalorder %s51, 0
      %p562 = por %p560, %p561
      %s564 = sadd.s32 %s563, 1
      %p567 = scmp.eq.s32.totalorder %s45, 3
      %p568 = scmp.ne.s32.totalorder %s563, %s565
      %p569 = scmp.eq.s32.totalorder %s45, 0
      %p570 = por %p568, %p569
      %p571 = scmp.ne.s32.totalorder %s563, %s565
      %p572 = scmp.eq.s32.totalorder %s50, 3
      %p573 = por %p571, %p572
      %p574 = scmp.ne.s32.totalorder %s565, %s566
      %p575 = scmp.eq.s32.totalorder %s50, 0
      %p576 = por %p574, %p575
      %p577 = scmp.ne.s32.totalorder %s565, %s566
      %p578 = scmp.eq.s32.totalorder %s51, 3
      %p579 = por %p577, %p578
      %p581 = scmp.ne.s32.totalorder %s566, %s580
      %p582 = scmp.eq.s32.totalorder %s51, 0
      %p583 = por %p581, %p582
      %s585 = sadd.s32 %s584, 1
      %p588 = scmp.eq.s32.totalorder %s45, 3
      %p589 = scmp.ne.s32.totalorder %s584, %s586
      %p590 = scmp.eq.s32.totalorder %s45, 0
      %p591 = por %p589, %p590
      %p592 = scmp.ne.s32.totalorder %s584, %s586
      %p593 = scmp.eq.s32.totalorder %s50, 3
      %p594 = por %p592, %p593
      %p595 = scmp.ne.s32.totalorder %s586, %s587
      %p596 = scmp.eq.s32.totalorder %s50, 0
      %p597 = por %p595, %p596
      %p598 = scmp.ne.s32.totalorder %s586, %s587
      %p599 = scmp.eq.s32.totalorder %s51, 3
      %p600 = por %p598, %p599
      %p602 = scmp.ne.s32.totalorder %s587, %s601
      %p603 = scmp.eq.s32.totalorder %s51, 0
      %p604 = por %p602, %p603
      %s605 = ssub.s32 %s52, %s64
      %p606 = scmp.eq.s32.totalorder %s605, 0
      %s608 = sadd.s32 %s607, 1
      %s609 = scalar_select %p606, %s607, %s608
      %p612 = pneg %p606
      %p613 = scmp.eq.s32.totalorder %s45, 3
      %p614 = por %p612, %p613
      %p615 = scmp.ne.s32.totalorder %s607, %s610
      %p616 = scmp.eq.s32.totalorder %s45, 0
      %p617 = por %p615, %p616
      %p618 = scmp.ne.s32.totalorder %s607, %s610
      %p619 = scmp.eq.s32.totalorder %s50, 3
      %p620 = por %p618, %p619
      %p621 = scmp.ne.s32.totalorder %s610, %s611
      %p622 = scmp.eq.s32.totalorder %s50, 0
      %p623 = por %p621, %p622
      %p624 = scmp.ne.s32.totalorder %s610, %s611
      %p625 = scmp.eq.s32.totalorder %s51, 3
      %p626 = por %p624, %p625
      %p628 = scmp.ne.s32.totalorder %s611, %s627
      %p629 = scmp.eq.s32.totalorder %s51, 0
      %p630 = por %p628, %p629
      %p631 = scmp.le.s32.totalorder 1, %s45
      %p632 = scmp.lt.s32.totalorder %s45, 5
      %p633 = pnand %p631, %p632
      %p634 = pneg %p633
      // Predicated region
      $region9: #{tpu_custom_call.1} parent=5 // pred_check
        _
      $region10: #{tpu_custom_call.1} parent=5 // pred_check_branch
        %636 = sbr.rel (%p633) target = $region12
      $region11: #{tpu_custom_call.1} parent=5 // pred_region
        %s637 = ssub.s32 %s45, 1
        // Predicated region
        $region13: #{tpu_custom_call.1} parent=11 // pred_check
          %p638 = pneg %p156
        $region14: #{tpu_custom_call.1} parent=11 // pred_check_branch
          %640 = sbr.rel (%p638) target = $region16
        $region15: #{tpu_custom_call.1} parent=11 // pred_region
          _
        $region16: #{tpu_custom_call.1} parent=11 // pred_fallthru
          _
        // Predicated region
        $region17: #{tpu_custom_call.1} parent=11 // pred_check
          %p641 = pneg %p177
        $region18: #{tpu_custom_call.1} parent=11 // pred_check_branch
          %643 = sbr.rel (%p641) target = $region20
        $region19: #{tpu_custom_call.1} parent=11 // pred_region
          %645 = vsyncadd [#allocation8], 0
          %s646 = sshll.u32 %s4, 4
          %s647 = int_to_ptr.hbm [resolvable:$true] %s646
          %s648 = sshll.u32 [#allocation7], 4
          %s649 = int_to_ptr.vmem [resolvable:$true] %s648
          %654 = dma.hbm_to_vmem [thread:$0]  %s647, 32, %s649, [#allocation8], 16, 16, 1
        $region20: #{tpu_custom_call.1} parent=11 // pred_fallthru
          _
        // Predicated region
        $region21: #{tpu_custom_call.1} parent=11 // pred_check
          %p655 = pneg %p198
        $region22: #{tpu_custom_call.1} parent=11 // pred_check_branch
          %657 = sbr.rel (%p655) target = $region24
        $region23: #{tpu_custom_call.1} parent=11 // pred_region
          %659 = vsyncadd [#allocation8], 0
          %s660 = sshll.u32 %s5, 4
          %s661 = int_to_ptr.hbm [resolvable:$true] %s660
          %s662 = sshll.u32 [#allocation9], 4
          %s663 = int_to_ptr.vmem [resolvable:$true] %s662
          %668 = dma.hbm_to_vmem [thread:$0]  %s661, 512, %s663, [#allocation8], 64, 64, 4
        $region24: #{tpu_custom_call.1} parent=11 // pred_fallthru
          _
        // Predicated region
        $region25: #{tpu_custom_call.1} parent=11 // pred_check
          %p669 = pneg %p219
        $region26: #{tpu_custom_call.1} parent=11 // pred_check_branch
          %671 = sbr.rel (%p669) target = $region28
        $region27: #{tpu_custom_call.1} parent=11 // pred_region
          %673 = vsyncadd [#allocation11], 0
          %s674 = sshll.u32 %s6, 4
          %s675 = int_to_ptr.hbm [resolvable:$true] %s674
          %s676 = sshll.u32 [#allocation10], 4
          %s677 = int_to_ptr.vmem [resolvable:$true] %s676
          %682 = dma.hbm_to_vmem [thread:$0]  %s675, 32, %s677, [#allocation11], 16, 16, 1
        $region28: #{tpu_custom_call.1} parent=11 // pred_fallthru
          _
        // Predicated region
        $region29: #{tpu_custom_call.1} parent=11 // pred_check
          %p683 = pneg %p240
        $region30: #{tpu_custom_call.1} parent=11 // pred_check_branch
          %685 = sbr.rel (%p683) target = $region32
        $region31: #{tpu_custom_call.1} parent=11 // pred_region
          %687 = vsyncadd [#allocation11], 0
          %s688 = sshll.u32 %s7, 4
          %s689 = int_to_ptr.hbm [resolvable:$true] %s688
          %s690 = sshll.u32 [#allocation12], 4
          %s691 = int_to_ptr.vmem [resolvable:$true] %s690
          %696 = dma.hbm_to_vmem [thread:$0]  %s689, 512, %s691, [#allocation11], 64, 64, 4
        $region32: #{tpu_custom_call.1} parent=11 // pred_fallthru
          _
        // Predicated region
        $region33: #{tpu_custom_call.1} parent=11 // pred_check
          %p697 = pneg %p261
        $region34: #{tpu_custom_call.1} parent=11 // pred_check_branch
          %699 = sbr.rel (%p697) target = $region36
        $region35: #{tpu_custom_call.1} parent=11 // pred_region
          %701 = vsyncadd [#allocation14], 0
          %s702 = sshll.u32 %s8, 4
          %s703 = int_to_ptr.hbm [resolvable:$true] %s702
          %s704 = sshll.u32 [#allocation13], 4
          %s705 = int_to_ptr.vmem [resolvable:$true] %s704
          %710 = dma.hbm_to_vmem [thread:$0]  %s703, 32, %s705, [#allocation14], 16, 16, 1
        $region36: #{tpu_custom_call.1} parent=11 // pred_fallthru
          _
        // Predicated region
        $region37: #{tpu_custom_call.1} parent=11 // pred_check
          %p711 = pneg %p282
        $region38: #{tpu_custom_call.1} parent=11 // pred_check_branch
          %713 = sbr.rel (%p711) target = $region40
        $region39: #{tpu_custom_call.1} parent=11 // pred_region
          %715 = vsyncadd [#allocation14], 0
          %s716 = sshll.u32 %s9, 4
          %s717 = int_to_ptr.hbm [resolvable:$true] %s716
          %s718 = sshll.u32 [#allocation15], 4
          %s719 = int_to_ptr.vmem [resolvable:$true] %s718
          %724 = dma.hbm_to_vmem [thread:$0]  %s717, 512, %s719, [#allocation14], 64, 64, 4
        $region40: #{tpu_custom_call.1} parent=11 // pred_fallthru
          _
        // Predicated region
        $region41: #{tpu_custom_call.1} parent=11 // pred_check
          %p725 = pneg %p303
        $region42: #{tpu_custom_call.1} parent=11 // pred_check_branch
          %727 = sbr.rel (%p725) target = $region44
        $region43: #{tpu_custom_call.1} parent=11 // pred_region
          %729 = vsyncadd [#allocation17], 0
          %s730 = sshll.u32 %s10, 4
          %s731 = int_to_ptr.hbm [resolvable:$true] %s730
          %s732 = sshll.u32 [#allocation16], 4
          %s733 = int_to_ptr.vmem [resolvable:$true] %s732
          %738 = dma.hbm_to_vmem [thread:$0]  %s731, 32, %s733, [#allocation17], 16, 16, 1
        $region44: #{tpu_custom_call.1} parent=11 // pred_fallthru
          _
        // Predicated region
        $region45: #{tpu_custom_call.1} parent=11 // pred_check
          %p739 = pneg %p324
        $region46: #{tpu_custom_call.1} parent=11 // pred_check_branch
          %741 = sbr.rel (%p739) target = $region48
        $region47: #{tpu_custom_call.1} parent=11 // pred_region
          %743 = vsyncadd [#allocation17], 0
          %s744 = sshll.u32 %s11, 4
          %s745 = int_to_ptr.hbm [resolvable:$true] %s744
          %s746 = sshll.u32 [#allocation18], 4
          %s747 = int_to_ptr.vmem [resolvable:$true] %s746
          %752 = dma.hbm_to_vmem [thread:$0]  %s745, 512, %s747, [#allocation17], 64, 64, 4
        $region48: #{tpu_custom_call.1} parent=11 // pred_fallthru
          _
        // Predicated region
        $region49: #{tpu_custom_call.1} parent=11 // pred_check
          %p753 = pneg %p345
        $region50: #{tpu_custom_call.1} parent=11 // pred_check_branch
          %755 = sbr.rel (%p753) target = $region52
        $region51: #{tpu_custom_call.1} parent=11 // pred_region
          %757 = vsyncadd [#allocation20], 0
          %s758 = sshll.u32 %s12, 4
          %s759 = int_to_ptr.hbm [resolvable:$true] %s758
          %s760 = sshll.u32 [#allocation19], 4
          %s761 = int_to_ptr.vmem [resolvable:$true] %s760
          %766 = dma.hbm_to_vmem [thread:$0]  %s759, 32, %s761, [#allocation20], 16, 16, 1
        $region52: #{tpu_custom_call.1} parent=11 // pred_fallthru
          _
        // Predicated region
        $region53: #{tpu_custom_call.1} parent=11 // pred_check
          %p767 = pneg %p366
        $region54: #{tpu_custom_call.1} parent=11 // pred_check_branch
          %769 = sbr.rel (%p767) target = $region56
        $region55: #{tpu_custom_call.1} parent=11 // pred_region
          %771 = vsyncadd [#allocation20], 0
          %s772 = sshll.u32 %s13, 4
          %s773 = int_to_ptr.hbm [resolvable:$true] %s772
          %s774 = sshll.u32 [#allocation21], 4
          %s775 = int_to_ptr.vmem [resolvable:$true] %s774
          %780 = dma.hbm_to_vmem [thread:$0]  %s773, 512, %s775, [#allocation20], 64, 64, 4
        $region56: #{tpu_custom_call.1} parent=11 // pred_fallthru
          _
        // Predicated region
        $region57: #{tpu_custom_call.1} parent=11 // pred_check
          %p781 = pneg %p387
        $region58: #{tpu_custom_call.1} parent=11 // pred_check_branch
          %783 = sbr.rel (%p781) target = $region60
        $region59: #{tpu_custom_call.1} parent=11 // pred_region
          %785 = vsyncadd [#allocation23], 0
          %s786 = sshll.u32 %s14, 4
          %s787 = int_to_ptr.hbm [resolvable:$true] %s786
          %s788 = sshll.u32 [#allocation22], 4
          %s789 = int_to_ptr.vmem [resolvable:$true] %s788
          %794 = dma.hbm_to_vmem [thread:$0]  %s787, 32, %s789, [#allocation23], 16, 16, 1
        $region60: #{tpu_custom_call.1} parent=11 // pred_fallthru
          _
        // Predicated region
        $region61: #{tpu_custom_call.1} parent=11 // pred_check
          %p795 = pneg %p408
        $region62: #{tpu_custom_call.1} parent=11 // pred_check_branch
          %797 = sbr.rel (%p795) target = $region64
        $region63: #{tpu_custom_call.1} parent=11 // pred_region
          %799 = vsyncadd [#allocation23], 0
          %s800 = sshll.u32 %s15, 4
          %s801 = int_to_ptr.hbm [resolvable:$true] %s800
          %s802 = sshll.u32 [#allocation24], 4
          %s803 = int_to_ptr.vmem [resolvable:$true] %s802
          %808 = dma.hbm_to_vmem [thread:$0]  %s801, 512, %s803, [#allocation23], 64, 64, 4
        $region64: #{tpu_custom_call.1} parent=11 // pred_fallthru
          _
        // Predicated region
        $region65: #{tpu_custom_call.1} parent=11 // pred_check
          %p809 = pneg %p429
        $region66: #{tpu_custom_call.1} parent=11 // pred_check_branch
          %811 = sbr.rel (%p809) target = $region68
        $region67: #{tpu_custom_call.1} parent=11 // pred_region
          %813 = vsyncadd [#allocation26], 0
          %s814 = sshll.u32 %s16, 4
          %s815 = int_to_ptr.hbm [resolvable:$true] %s814
          %s816 = sshll.u32 [#allocation25], 4
          %s817 = int_to_ptr.vmem [resolvable:$true] %s816
          %822 = dma.hbm_to_vmem [thread:$0]  %s815, 32, %s817, [#allocation26], 16, 16, 1
        $region68: #{tpu_custom_call.1} parent=11 // pred_fallthru
          _
        // Predicated region
        $region69: #{tpu_custom_call.1} parent=11 // pred_check
          %p823 = pneg %p450
        $region70: #{tpu_custom_call.1} parent=11 // pred_check_branch
          %825 = sbr.rel (%p823) target = $region72
        $region71: #{tpu_custom_call.1} parent=11 // pred_region
          %827 = vsyncadd [#allocation26], 0
          %s828 = sshll.u32 %s17, 4
          %s829 = int_to_ptr.hbm [resolvable:$true] %s828
          %s830 = sshll.u32 [#allocation27], 4
          %s831 = int_to_ptr.vmem [resolvable:$true] %s830
          %836 = dma.hbm_to_vmem [thread:$0]  %s829, 512, %s831, [#allocation26], 64, 64, 4
        $region72: #{tpu_custom_call.1} parent=11 // pred_fallthru
          _
        // Predicated region
        $region73: #{tpu_custom_call.1} parent=11 // pred_check
          %p837 = pneg %p471
        $region74: #{tpu_custom_call.1} parent=11 // pred_check_branch
          %839 = sbr.rel (%p837) target = $region76
        $region75: #{tpu_custom_call.1} parent=11 // pred_region
          %841 = vsyncadd [#allocation29], 0
          %s842 = sshll.u32 %s18, 4
          %s843 = int_to_ptr.hbm [resolvable:$true] %s842
          %s844 = sshll.u32 [#allocation28], 4
          %s845 = int_to_ptr.vmem [resolvable:$true] %s844
          %850 = dma.hbm_to_vmem [thread:$0]  %s843, 32, %s845, [#allocation29], 16, 16, 1
        $region76: #{tpu_custom_call.1} parent=11 // pred_fallthru
          _
        // Predicated region
        $region77: #{tpu_custom_call.1} parent=11 // pred_check
          %p851 = pneg %p492
        $region78: #{tpu_custom_call.1} parent=11 // pred_check_branch
          %853 = sbr.rel (%p851) target = $region80
        $region79: #{tpu_custom_call.1} parent=11 // pred_region
          %855 = vsyncadd [#allocation29], 0
          %s856 = sshll.u32 %s19, 4
          %s857 = int_to_ptr.hbm [resolvable:$true] %s856
          %s858 = sshll.u32 [#allocation30], 4
          %s859 = int_to_ptr.vmem [resolvable:$true] %s858
          %864 = dma.hbm_to_vmem [thread:$0]  %s857, 512, %s859, [#allocation29], 64, 64, 4
        $region80: #{tpu_custom_call.1} parent=11 // pred_fallthru
          _
        // Predicated region
        $region81: #{tpu_custom_call.1} parent=11 // pred_check
          %p865 = pneg %p513
        $region82: #{tpu_custom_call.1} parent=11 // pred_check_branch
          %867 = sbr.rel (%p865) target = $region84
        $region83: #{tpu_custom_call.1} parent=11 // pred_region
          _
        $region84: #{tpu_custom_call.1} parent=11 // pred_fallthru
          _
        // Predicated region
        $region85: #{tpu_custom_call.1} parent=11 // pred_check
          %p868 = pneg %p534
        $region86: #{tpu_custom_call.1} parent=11 // pred_check_branch
          %870 = sbr.rel (%p868) target = $region88
        $region87: #{tpu_custom_call.1} parent=11 // pred_region
          _
        $region88: #{tpu_custom_call.1} parent=11 // pred_fallthru
          _
        // Predicated region
        $region89: #{tpu_custom_call.1} parent=11 // pred_check
          %p871 = pneg %p555
        $region90: #{tpu_custom_call.1} parent=11 // pred_check_branch
          %873 = sbr.rel (%p871) target = $region92
        $region91: #{tpu_custom_call.1} parent=11 // pred_region
          _
        $region92: #{tpu_custom_call.1} parent=11 // pred_fallthru
          _
        // Predicated region
        $region93: #{tpu_custom_call.1} parent=11 // pred_check
          %p874 = pneg %p576
        $region94: #{tpu_custom_call.1} parent=11 // pred_check_branch
          %876 = sbr.rel (%p874) target = $region96
        $region95: #{tpu_custom_call.1} parent=11 // pred_region
          _
        $region96: #{tpu_custom_call.1} parent=11 // pred_fallthru
          _
        // Predicated region
        $region97: #{tpu_custom_call.1} parent=11 // pred_check
          %p877 = pneg %p597
        $region98: #{tpu_custom_call.1} parent=11 // pred_check_branch
          %879 = sbr.rel (%p877) target = $region100
        $region99: #{tpu_custom_call.1} parent=11 // pred_region
          _
        $region100: #{tpu_custom_call.1} parent=11 // pred_fallthru
          _
      $region12: #{tpu_custom_call.1} parent=5 // pred_fallthru
        _
      %p880 = scmp.lt.s32.totalorder %s45, 4
      // Predicated region
      $region101: #{tpu_custom_call.1} parent=5 // pred_check
        %p881 = pneg %p880
      $region102: #{tpu_custom_call.1} parent=5 // pred_check_branch
        %883 = sbr.rel (%p881) target = $region104
      $region103: #{tpu_custom_call.1} parent=5 // pred_region
        // Predicated region
        $region105: #{tpu_custom_call.1} parent=103 // pred_check
          %p884 = pneg %p77
        $region106: #{tpu_custom_call.1} parent=103 // pred_check_branch
          %886 = sbr.rel (%p884) target = $region108
        $region107: #{tpu_custom_call.1} parent=103 // pred_region
          %s887 = sand.u32 %s67, 1
          %s888 = scalar_lea.sflag [#allocation5], %s887
          %s889 = sand.u32 %s67, 1
          %s890 = smul.addr %s889, 8
          %s891 = scalar_lea.vmem [#allocation4], %s890
          %893 = vsyncadd %s888, 0
          %s894 = smul.addr %s52, 8
          %s895 = scalar_lea.hbm %s0, %s894
          %s897 = sshll.u32 %s895, 4
          %s898 = int_to_ptr.hbm [resolvable:$true] %s897
          %s899 = sshll.u32 %s891, 4
          %s900 = int_to_ptr.vmem [resolvable:$true] %s899
          %902 = dma.hbm_to_vmem [thread:$0]  %s898, 128, %s900, %s888
        $region108: #{tpu_custom_call.1} parent=103 // pred_fallthru
          _
        // Predicated region
        $region109: #{tpu_custom_call.1} parent=103 // pred_check
          %p903 = pneg %p103
        $region110: #{tpu_custom_call.1} parent=103 // pred_check_branch
          %905 = sbr.rel (%p903) target = $region112
        $region111: #{tpu_custom_call.1} parent=103 // pred_region
          %p906 = scmp.lt.s32.totalorder %s52, 1
          %s907 = scalar_select %p906, %s52, 1
          %s908 = smul.addr %s907, 2
          %s909 = smul.addr %s908, 8
          %s910 = scalar_lea.vmem %s1, %s909
        $region112: #{tpu_custom_call.1} parent=103 // pred_fallthru
          _
        // Predicated region
        $region113: #{tpu_custom_call.1} parent=103 // pred_check
          %p911 = pneg %p129
        $region114: #{tpu_custom_call.1} parent=103 // pred_check_branch
          %913 = sbr.rel (%p911) target = $region116
        $region115: #{tpu_custom_call.1} parent=103 // pred_region
          %p914 = scmp.lt.s32.totalorder %s52, 1
          %s915 = scalar_select %p914, %s52, 1
          %s916 = smul.addr %s915, 2
          %s917 = smul.addr %s916, 8
          %s918 = scalar_lea.vmem %s2, %s917
        $region116: #{tpu_custom_call.1} parent=103 // pred_fallthru
          _
      $region104: #{tpu_custom_call.1} parent=5 // pred_fallthru
        _
      %p919 = scmp.le.s32.totalorder 1, %s45
      %p920 = scmp.lt.s32.totalorder %s45, 5
      %p921 = pnand %p919, %p920
      %p922 = pneg %p921
      // Predicated region
      $region117: #{tpu_custom_call.1} parent=5 // pred_check
        _
      $region118: #{tpu_custom_call.1} parent=5 // pred_check_branch
        %924 = sbr.rel (%p921) target = $region120
      $region119: #{tpu_custom_call.1} parent=5 // pred_region
        %s925 = ssub.s32 %s45, 1
        %s926 = sand.u32 %s70, 1
        %s927 = scalar_lea.sflag [#allocation5], %s926
        %s928 = sand.u32 %s70, 1
        %s929 = smul.addr %s928, 8
        %s930 = scalar_lea.vmem [#allocation4], %s929
        // Predicated region
        $region121: #{tpu_custom_call.1} parent=119 // pred_check
          %p931 = pneg %p83
        $region122: #{tpu_custom_call.1} parent=119 // pred_check_branch
          %933 = sbr.rel (%p931) target = $region124
        $region123: #{tpu_custom_call.1} parent=119 // pred_region
          %935 = dma.done %s927, 128
        $region124: #{tpu_custom_call.1} parent=119 // pred_fallthru
          _
        // Predicated region
        $region125: #{tpu_custom_call.1} parent=119 // pred_check
          %p936 = pneg %p177
        $region126: #{tpu_custom_call.1} parent=119 // pred_check_branch
          %938 = sbr.rel (%p936) target = $region128
        $region127: #{tpu_custom_call.1} parent=119 // pred_region
          %940 = dma.done [#allocation8], 32
        $region128: #{tpu_custom_call.1} parent=119 // pred_fallthru
          _
        // Predicated region
        $region129: #{tpu_custom_call.1} parent=119 // pred_check
          %p941 = pneg %p198
        $region130: #{tpu_custom_call.1} parent=119 // pred_check_branch
          %943 = sbr.rel (%p941) target = $region132
        $region131: #{tpu_custom_call.1} parent=119 // pred_region
          %945 = dma.done [#allocation8], 512
        $region132: #{tpu_custom_call.1} parent=119 // pred_fallthru
          _
        // Predicated region
        $region133: #{tpu_custom_call.1} parent=119 // pred_check
          %p946 = pneg %p219
        $region134: #{tpu_custom_call.1} parent=119 // pred_check_branch
          %948 = sbr.rel (%p946) target = $region136
        $region135: #{tpu_custom_call.1} parent=119 // pred_region
          %950 = dma.done [#allocation11], 32
        $region136: #{tpu_custom_call.1} parent=119 // pred_fallthru
          _
        // Predicated region
        $region137: #{tpu_custom_call.1} parent=119 // pred_check
          %p951 = pneg %p240
        $region138: #{tpu_custom_call.1} parent=119 // pred_check_branch
          %953 = sbr.rel (%p951) target = $region140
        $region139: #{tpu_custom_call.1} parent=119 // pred_region
          %955 = dma.done [#allocation11], 512
        $region140: #{tpu_custom_call.1} parent=119 // pred_fallthru
          _
        // Predicated region
        $region141: #{tpu_custom_call.1} parent=119 // pred_check
          %p956 = pneg %p261
        $region142: #{tpu_custom_call.1} parent=119 // pred_check_branch
          %958 = sbr.rel (%p956) target = $region144
        $region143: #{tpu_custom_call.1} parent=119 // pred_region
          %960 = dma.done [#allocation14], 32
        $region144: #{tpu_custom_call.1} parent=119 // pred_fallthru
          _
        // Predicated region
        $region145: #{tpu_custom_call.1} parent=119 // pred_check
          %p961 = pneg %p282
        $region146: #{tpu_custom_call.1} parent=119 // pred_check_branch
          %963 = sbr.rel (%p961) target = $region148
        $region147: #{tpu_custom_call.1} parent=119 // pred_region
          %965 = dma.done [#allocation14], 512
        $region148: #{tpu_custom_call.1} parent=119 // pred_fallthru
          _
        // Predicated region
        $region149: #{tpu_custom_call.1} parent=119 // pred_check
          %p966 = pneg %p303
        $region150: #{tpu_custom_call.1} parent=119 // pred_check_branch
          %968 = sbr.rel (%p966) target = $region152
        $region151: #{tpu_custom_call.1} parent=119 // pred_region
          %970 = dma.done [#allocation17], 32
        $region152: #{tpu_custom_call.1} parent=119 // pred_fallthru
          _
        // Predicated region
        $region153: #{tpu_custom_call.1} parent=119 // pred_check
          %p971 = pneg %p324
        $region154: #{tpu_custom_call.1} parent=119 // pred_check_branch
          %973 = sbr.rel (%p971) target = $region156
        $region155: #{tpu_custom_call.1} parent=119 // pred_region
          %975 = dma.done [#allocation17], 512
        $region156: #{tpu_custom_call.1} parent=119 // pred_fallthru
          _
        // Predicated region
        $region157: #{tpu_custom_call.1} parent=119 // pred_check
          %p976 = pneg %p345
        $region158: #{tpu_custom_call.1} parent=119 // pred_check_branch
          %978 = sbr.rel (%p976) target = $region160
        $region159: #{tpu_custom_call.1} parent=119 // pred_region
          %980 = dma.done [#allocation20], 32
        $region160: #{tpu_custom_call.1} parent=119 // pred_fallthru
          _
        // Predicated region
        $region161: #{tpu_custom_call.1} parent=119 // pred_check
          %p981 = pneg %p366
        $region162: #{tpu_custom_call.1} parent=119 // pred_check_branch
          %983 = sbr.rel (%p981) target = $region164
        $region163: #{tpu_custom_call.1} parent=119 // pred_region
          %985 = dma.done [#allocation20], 512
        $region164: #{tpu_custom_call.1} parent=119 // pred_fallthru
          _
        // Predicated region
        $region165: #{tpu_custom_call.1} parent=119 // pred_check
          %p986 = pneg %p387
        $region166: #{tpu_custom_call.1} parent=119 // pred_check_branch
          %988 = sbr.rel (%p986) target = $region168
        $region167: #{tpu_custom_call.1} parent=119 // pred_region
          %990 = dma.done [#allocation23], 32
        $region168: #{tpu_custom_call.1} parent=119 // pred_fallthru
          _
        // Predicated region
        $region169: #{tpu_custom_call.1} parent=119 // pred_check
          %p991 = pneg %p408
        $region170: #{tpu_custom_call.1} parent=119 // pred_check_branch
          %993 = sbr.rel (%p991) target = $region172
        $region171: #{tpu_custom_call.1} parent=119 // pred_region
          %995 = dma.done [#allocation23], 512
        $region172: #{tpu_custom_call.1} parent=119 // pred_fallthru
          _
        // Predicated region
        $region173: #{tpu_custom_call.1} parent=119 // pred_check
          %p996 = pneg %p429
        $region174: #{tpu_custom_call.1} parent=119 // pred_check_branch
          %998 = sbr.rel (%p996) target = $region176
        $region175: #{tpu_custom_call.1} parent=119 // pred_region
          %1000 = dma.done [#allocation26], 32
        $region176: #{tpu_custom_call.1} parent=119 // pred_fallthru
          _
        // Predicated region
        $region177: #{tpu_custom_call.1} parent=119 // pred_check
          %p1001 = pneg %p450
        $region178: #{tpu_custom_call.1} parent=119 // pred_check_branch
          %1003 = sbr.rel (%p1001) target = $region180
        $region179: #{tpu_custom_call.1} parent=119 // pred_region
          %1005 = dma.done [#allocation26], 512
        $region180: #{tpu_custom_call.1} parent=119 // pred_fallthru
          _
        // Predicated region
        $region181: #{tpu_custom_call.1} parent=119 // pred_check
          %p1006 = pneg %p471
        $region182: #{tpu_custom_call.1} parent=119 // pred_check_branch
          %1008 = sbr.rel (%p1006) target = $region184
        $region183: #{tpu_custom_call.1} parent=119 // pred_region
          %1010 = dma.done [#allocation29], 32
        $region184: #{tpu_custom_call.1} parent=119 // pred_fallthru
          _
        // Predicated region
        $region185: #{tpu_custom_call.1} parent=119 // pred_check
          %p1011 = pneg %p492
        $region186: #{tpu_custom_call.1} parent=119 // pred_check_branch
          %1013 = sbr.rel (%p1011) target = $region188
        $region187: #{tpu_custom_call.1} parent=119 // pred_region
          %1015 = dma.done [#allocation29], 512
        $region188: #{tpu_custom_call.1} parent=119 // pred_fallthru
          _
        %s1016 = sand.u32 %s70, 1
        %s1017 = scalar_lea.sflag [#allocation5], %s1016
        %s1018 = sand.u32 %s70, 1
        %s1019 = smul.addr %s1018, 8
        %s1020 = scalar_lea.vmem [#allocation4], %s1019
        %p1021 = pneg %p83
        %p1022 = pneg %p80
        %p1023 = scmp.lt.s32.totalorder %s54, 1
        %s1024 = scalar_select %p1023, %s54, 1
        %s1025 = smul.addr %s1024, 2
        %s1026 = smul.addr %s1025, 8
        %s1027 = scalar_lea.vmem %s1, %s1026
        %p1028 = pneg %p109
        %p1029 = pneg %p106
        %p1030 = scmp.lt.s32.totalorder %s54, 1
        %s1031 = scalar_select %p1030, %s54, 1
        %s1032 = smul.addr %s1031, 2
        %s1033 = smul.addr %s1032, 8
        %s1034 = scalar_lea.vmem %s2, %s1033
        %p1035 = pneg %p135
        %p1036 = pneg %p132
        %p1037 = pneg %p156
        %p1038 = pneg %p153
        %p1039 = pneg %p177
        %p1040 = pneg %p174
        %p1041 = pneg %p198
        %p1042 = pneg %p195
        %p1043 = pneg %p219
        %p1044 = pneg %p216
        %p1045 = pneg %p240
        %p1046 = pneg %p237
        %p1047 = pneg %p261
        %p1048 = pneg %p258
        %p1049 = pneg %p282
        %p1050 = pneg %p279
        %p1051 = pneg %p303
        %p1052 = pneg %p300
        %p1053 = pneg %p324
        %p1054 = pneg %p321
        %p1055 = pneg %p345
        %p1056 = pneg %p342
        %p1057 = pneg %p366
        %p1058 = pneg %p363
        %p1059 = pneg %p387
        %p1060 = pneg %p384
        %p1061 = pneg %p408
        %p1062 = pneg %p405
        %p1063 = pneg %p429
        %p1064 = pneg %p426
        %p1065 = pneg %p450
        %p1066 = pneg %p447
        %p1067 = pneg %p471
        %p1068 = pneg %p468
        %p1069 = pneg %p492
        %p1070 = pneg %p489
        %p1071 = pneg %p513
        %p1072 = pneg %p510
        %p1073 = pneg %p534
        %p1074 = pneg %p531
        %p1075 = pneg %p555
        %p1076 = pneg %p552
        %p1077 = pneg %p576
        %p1078 = pneg %p573
        %p1079 = pneg %p597
        %p1080 = pneg %p594
        %p1081 = pneg %p623
        %p1082 = pneg %p620
        %s1083 = sand.u32 %s610, 1
        %s1084 = scalar_lea.sflag [#allocation6], %s1083
        %s1085 = sand.u32 %s610, 1
        %s1086 = smul.addr %s1085, 8
        %s1087 = scalar_lea.vmem [#allocation31], %s1086
        %p1088 = scmp.lt.s32.totalorder %s54, 1
        %s1089 = scalar_select %p1088, %s54, 1
        %s1090 = smul.addr %s1089, 2
        %s1091 = smul.addr %s1090, 8
        %s1092 = scalar_lea.vmem %s1, %s1091
        %p1093 = scmp.lt.s32.totalorder %s54, 1
        %s1094 = scalar_select %p1093, %s54, 1
        %s1095 = smul.addr %s1094, 2
        %s1096 = smul.addr %s1095, 8
        %s1097 = scalar_lea.vmem %s2, %s1096
        %p1099 = scmp.eq.s32.totalorder %s55, 0
        // Predicated region
        $region189: #{tpu_custom_call.1} parent=119 // pred_check
          %p1100 = pneg %p1099
        $region190: #{tpu_custom_call.1} parent=119 // pred_check_branch
          %1102 = sbr.rel (%p1100) target = $region192
        $region191: #{tpu_custom_call.1} parent=119 // pred_region
          %v1103 = vld [vmem:[%s930] sm:$0xff]
          %vm1104 = vcmask 261120
          %1105 = vst.msk [vmem:[#allocation2] sm:$0xff] %vm1104, %v1103
        $region192: #{tpu_custom_call.1} parent=119 // pred_fallthru
          _
        %v1106 = vld [vmem:[#allocation2] sm:$0xff]
        %s1107 = smul.u32 %s55, 8
        %s1108 = scalar_lea.vmem %s23, %s1107
        %v1109 = vld [vmem:[%s1108] sm:$0xff]
        %v1110 = vpack.c.bf16 %v1106, %v1106
        %s1111 = smul.u32 %s55, 4
        %s1112 = smul.addr %s1111, 4
        %s1113 = scalar_lea.vmem %s3, %s1112
        %v1114 = vld [vmem:[%s1113] sm:$0xf]
        %v1115 = vld [vmem:[%s1113 + $0x4] sm:$0xf]
        %v1116 = vld [vmem:[%s1113 + $0x8] sm:$0xf]
        %v1117 = vld [vmem:[%s1113 + $0xc] sm:$0xf]
        %s1118 = scalar_lea.vmem [#allocation7], %s55
        %v1119 = vld [vmem:[%s1118] sm:$0x1]
        %v1121 = vperm.slane %v1119, 0
        %v1127 = vunpack.c.l.b16 %v1114
        %v1128 = vunpack.c.l.b16 %v1115
        %v1129 = vunpack.c.l.b16 %v1116
        %v1130 = vunpack.c.l.b16 %v1117
        %v1131 = vpack.c.b16 %v1128, %v1127
        %v1132 = vpack.c.b16 %v1130, %v1129
        %vm1135 = vcmask 261120
        %v1137 = vsel %vm1135, %v1110, 0
        %1139 = vmatpush.bf16.msra.mxu0 0
        %1140 = vmatpush.bf16.msra.mxu0 0
        %1141 = vmatpush.bf16.msra.mxu0 0
        %1142 = vmatpush.bf16.msra.mxu0 0
        %1143 = vmatpush.bf16.msra.mxu0 0
        %1144 = vmatpush.bf16.msra.mxu0 0
        %1145 = vmatpush.bf16.msra.mxu0 %v1132
        %1146 = vmatpush.bf16.msra.mxu0 %v1131
        %1147 = vmatmul.bf16.gmra.mxu0 %v1137
        %v1148 = vpop.f32.mrf.mxu0
        %v1149 = vadd.f32 %v1121, %v1148
        %v1150 = vpop.f32.mrf.mxu0
        %1151 = vdwg.mxu0
        %s1152 = smul.addr %s1111, 4
        %s1153 = scalar_lea.vmem [#allocation9], %s1152
        %v1154 = vld [vmem:[%s1153] sm:$0xf]
        %v1155 = vld [vmem:[%s1153 + $0x4] sm:$0xf]
        %v1156 = vld [vmem:[%s1153 + $0x8] sm:$0xf]
        %v1157 = vld [vmem:[%s1153 + $0xc] sm:$0xf]
        %s1158 = scalar_lea.vmem [#allocation10], %s55
        %v1159 = vld [vmem:[%s1158] sm:$0x1]
        %v1160 = vpack.c.bf16 %v1149, %v1149
        %v1162 = vunpack.c.l.b16 %v1160
        %v1163 = vpack.c.b16 %v1162, %v1162
        %1164 = vrot.lane.b32.xlu0 %v1163, 96
        %v1165 = vpop.permute.xlu0 %1164
        %vm1166 = vcmask 64512
        %v1168 = vsel %vm1166, %v1160, 0
        %v1171 = vsel %vm1166, %v1165, 0
        %1173 = vmatpush.bf16.xpose.msra.mxu0 0
        %1174 = vmatpush.bf16.xpose.msra.mxu0 0
        %1175 = vmatpush.bf16.xpose.msra.mxu0 0
        %1176 = vmatpush.bf16.xpose.msra.mxu0 0
        %1177 = vmatpush.bf16.xpose.msra.mxu0 0
        %1178 = vmatpush.bf16.xpose.msra.mxu0 0
        %1179 = vmatpush.bf16.xpose.msra.mxu0 0
        %1180 = vmatpush.bf16.xpose.msra.mxu0 %v1171
        %1181 = vmatmul.bf16.gmra.mxu0 %v1168
        %v1182 = vpop.f32.mrf.mxu0
        %v1183 = vadd.f32 0.0, %v1182
        %v1184 = vpop.f32.mrf.mxu0
        %1185 = vdwg.mxu0
        %1186 = vrot.lane.b32.xlu0 %v1163, 120
        %v1187 = vpop.permute.xlu0 %1186
        %1188 = vrot.lane.b32.xlu0 %v1163, 88
        %v1189 = vpop.permute.xlu0 %1188
        %v1191 = vsel %vm1166, %v1187, 0
        %v1194 = vsel %vm1166, %v1189, 0
        %1196 = vmatpush.bf16.xpose.msra.mxu0 0
        %1197 = vmatpush.bf16.xpose.msra.mxu0 0
        %1198 = vmatpush.bf16.xpose.msra.mxu0 0
        %1199 = vmatpush.bf16.xpose.msra.mxu0 0
        %1200 = vmatpush.bf16.xpose.msra.mxu0 0
        %1201 = vmatpush.bf16.xpose.msra.mxu0 0
        %1202 = vmatpush.bf16.xpose.msra.mxu0 0
        %1203 = vmatpush.bf16.xpose.msra.mxu0 %v1194
        %1204 = vmatmul.bf16.gmra.mxu0 %v1191
        %v1205 = vpop.f32.mrf.mxu0
        %v1206 = vadd.f32 0.0, %v1205
        %v1207 = vpop.f32.mrf.mxu0
        %1208 = vdwg.mxu0
        %1209 = vrot.lane.b32.xlu0 %v1163, 112
        %v1210 = vpop.permute.xlu0 %1209
        %1211 = vrot.lane.b32.xlu0 %v1163, 80
        %v1212 = vpop.permute.xlu0 %1211
        %v1214 = vsel %vm1166, %v1210, 0
        %v1217 = vsel %vm1166, %v1212, 0
        %1219 = vmatpush.bf16.xpose.msra.mxu0 0
        %1220 = vmatpush.bf16.xpose.msra.mxu0 0
        %1221 = vmatpush.bf16.xpose.msra.mxu0 0
        %1222 = vmatpush.bf16.xpose.msra.mxu0 0
        %1223 = vmatpush.bf16.xpose.msra.mxu0 0
        %1224 = vmatpush.bf16.xpose.msra.mxu0 0
        %1225 = vmatpush.bf16.xpose.msra.mxu0 0
        %1226 = vmatpush.bf16.xpose.msra.mxu0 %v1217
        %1227 = vmatmul.bf16.gmra.mxu0 %v1214
        %v1228 = vpop.f32.mrf.mxu0
        %v1229 = vadd.f32 0.0, %v1228
        %v1230 = vpop.f32.mrf.mxu0
        %1231 = vdwg.mxu0
        %1232 = vrot.lane.b32.xlu0 %v1163, 104
        %v1233 = vpop.permute.xlu0 %1232
        %1234 = vrot.lane.b32.xlu0 %v1163, 72
        %v1235 = vpop.permute.xlu0 %1234
        %v1237 = vsel %vm1166, %v1233, 0
        %v1240 = vsel %vm1166, %v1235, 0
        %1242 = vmatpush.bf16.xpose.msra.mxu0 0
        %1243 = vmatpush.bf16.xpose.msra.mxu0 0
        %1244 = vmatpush.bf16.xpose.msra.mxu0 0
        %1245 = vmatpush.bf16.xpose.msra.mxu0 0
        %1246 = vmatpush.bf16.xpose.msra.mxu0 0
        %1247 = vmatpush.bf16.xpose.msra.mxu0 0
        %1248 = vmatpush.bf16.xpose.msra.mxu0 0
        %1249 = vmatpush.bf16.xpose.msra.mxu0 %v1240
        %1250 = vmatmul.bf16.gmra.mxu0 %v1237
        %v1251 = vpop.f32.mrf.mxu0
        %v1252 = vadd.f32 0.0, %v1251
        %v1253 = vpop.f32.mrf.mxu0
        %1254 = vdwg.mxu0
        %v1255 = vsel %vm1166, %v1183, -inf
        %1256 = vmax.xlane.f32.xlu0 %v1255
        %v1257 = vpop.xlane.xlu0 %1256
        %v1258 = vsel %vm1166, %v1206, -inf
        %1259 = vmax.xlane.f32.xlu0 %v1258
        %v1260 = vpop.xlane.xlu0 %1259
        %v1261 = vsel %vm1166, %v1229, -inf
        %1262 = vmax.xlane.f32.xlu0 %v1261
        %v1263 = vpop.xlane.xlu0 %1262
        %v1264 = vsel %vm1166, %v1252, -inf
        %1265 = vmax.xlane.f32.xlu0 %v1264
        %v1266 = vpop.xlane.xlu0 %1265
        %v1267 = vsub.f32 %v1183, %v1257
        %v1268 = vsub.f32 %v1206, %v1260
        %v1269 = vsub.f32 %v1229, %v1263
        %v1270 = vsub.f32 %v1252, %v1266
        %v1271 = vmul.f32 %v1267, 1.442695
        %v1272 = vpow.pop %v1271
        %v1273 = vmul.f32 %v1268, 1.442695
        %v1274 = vpow.pop %v1273
        %v1275 = vmul.f32 %v1269, 1.442695
        %v1276 = vpow.pop %v1275
        %v1277 = vmul.f32 %v1270, 1.442695
        %v1278 = vpow.pop %v1277
        %v1279 = vsel %vm1166, %v1272, 0.0
        %1280 = vadd.xlane.f32.xlu0 %v1279
        %v1281 = vpop.xlane.xlu0 %1280
        %v1282 = vsel %vm1166, %v1274, 0.0
        %1283 = vadd.xlane.f32.xlu0 %v1282
        %v1284 = vpop.xlane.xlu0 %1283
        %v1285 = vsel %vm1166, %v1276, 0.0
        %1286 = vadd.xlane.f32.xlu0 %v1285
        %v1287 = vpop.xlane.xlu0 %1286
        %v1288 = vsel %vm1166, %v1278, 0.0
        %1289 = vadd.xlane.f32.xlu0 %v1288
        %v1290 = vpop.xlane.xlu0 %1289
        %v1291 = vrcp.pop %v1281
        %v1292 = vrcp.pop %v1284
        %v1293 = vrcp.pop %v1287
        %v1294 = vrcp.pop %v1290
        %v1295 = vmul.f32 %v1272, %v1291
        %v1296 = vmul.f32 %v1274, %v1292
        %v1297 = vmul.f32 %v1276, %v1293
        %v1298 = vmul.f32 %v1278, %v1294
        %v1299 = vpack.c.bf16 %v1295, %v1295
        %v1300 = vpack.c.bf16 %v1296, %v1296
        %v1301 = vpack.c.bf16 %v1297, %v1297
        %v1302 = vpack.c.bf16 %v1298, %v1298
        %1303 = vrot.lane.b32.xlu0 %v1163, 64
        %v1304 = vpop.permute.xlu0 %1303
        %v1306 = vsel %vm1166, %v1299, 0
        %vm1308 = vcmask 1043456
        %v1310 = vsel %vm1308, %v1304, 0
        %1312 = vmatpush.bf16.msra.mxu0 0
        %1313 = vmatpush.bf16.msra.mxu0 0
        %1314 = vmatpush.bf16.msra.mxu0 0
        %1315 = vmatpush.bf16.msra.mxu0 0
        %1316 = vmatpush.bf16.msra.mxu0 0
        %1317 = vmatpush.bf16.msra.mxu0 0
        %1318 = vmatpush.bf16.msra.mxu0 0
        %1319 = vmatpush.bf16.msra.mxu0 %v1310
        %1320 = vmatmul.bf16.gmra.mxu0 %v1306
        %v1321 = vpop.f32.mrf.mxu0
        %v1322 = vadd.f32 0.0, %v1321
        %v1323 = vpop.f32.mrf.mxu0
        %1324 = vdwg.mxu0
        %1325 = vst.msk [vmem:[#allocation3] sm:$0xff] %vm1166, %v1322
        %1326 = vrot.lane.b32.xlu0 %v1163, 56
        %v1327 = vpop.permute.xlu0 %1326
        %v1329 = vsel %vm1166, %v1300, 0
        %v1332 = vsel %vm1308, %v1327, 0
        %1334 = vmatpush.bf16.msra.mxu0 0
        %1335 = vmatpush.bf16.msra.mxu0 0
        %1336 = vmatpush.bf16.msra.mxu0 0
        %1337 = vmatpush.bf16.msra.mxu0 0
        %1338 = vmatpush.bf16.msra.mxu0 0
        %1339 = vmatpush.bf16.msra.mxu0 0
        %1340 = vmatpush.bf16.msra.mxu0 0
        %1341 = vmatpush.bf16.msra.mxu0 %v1332
        %1342 = vmatmul.bf16.gmra.mxu0 %v1329
        %v1343 = vpop.f32.mrf.mxu0
        %v1344 = vadd.f32 0.0, %v1343
        %v1345 = vpop.f32.mrf.mxu0
        %1346 = vdwg.mxu0
        %1348 = vrot.lane.b32.xlu0 %v1344, 8
        %v1349 = vpop.permute.xlu0 %1348
        %vm1351 = vcmask 130112
        %1352 = vst.msk [vmem:[#allocation3] sm:$0xff] %vm1351, %v1349
        %1353 = vrot.lane.b32.xlu0 %v1163, 48
        %v1354 = vpop.permute.xlu0 %1353
        %v1356 = vsel %vm1166, %v1301, 0
        %v1359 = vsel %vm1308, %v1354, 0
        %1361 = vmatpush.bf16.msra.mxu0 0
        %1362 = vmatpush.bf16.msra.mxu0 0
        %1363 = vmatpush.bf16.msra.mxu0 0
        %1364 = vmatpush.bf16.msra.mxu0 0
        %1365 = vmatpush.bf16.msra.mxu0 0
        %1366 = vmatpush.bf16.msra.mxu0 0
        %1367 = vmatpush.bf16.msra.mxu0 0
        %1368 = vmatpush.bf16.msra.mxu0 %v1359
        %1369 = vmatmul.bf16.gmra.mxu0 %v1356
        %v1370 = vpop.f32.mrf.mxu0
        %v1371 = vadd.f32 0.0, %v1370
        %v1372 = vpop.f32.mrf.mxu0
        %1373 = vdwg.mxu0
        %1375 = vrot.lane.b32.xlu0 %v1371, 16
        %v1376 = vpop.permute.xlu0 %1375
        %vm1378 = vcmask 195712
        %1379 = vst.msk [vmem:[#allocation3] sm:$0xff] %vm1378, %v1376
        %1380 = vrot.lane.b32.xlu0 %v1163, 40
        %v1381 = vpop.permute.xlu0 %1380
        %v1383 = vsel %vm1166, %v1302, 0
        %v1386 = vsel %vm1308, %v1381, 0
        %1388 = vmatpush.bf16.msra.mxu0 0
        %1389 = vmatpush.bf16.msra.mxu0 0
        %1390 = vmatpush.bf16.msra.mxu0 0
        %1391 = vmatpush.bf16.msra.mxu0 0
        %1392 = vmatpush.bf16.msra.mxu0 0
        %1393 = vmatpush.bf16.msra.mxu0 0
        %1394 = vmatpush.bf16.msra.mxu0 0
        %1395 = vmatpush.bf16.msra.mxu0 %v1386
        %1396 = vmatmul.bf16.gmra.mxu0 %v1383
        %v1397 = vpop.f32.mrf.mxu0
        %v1398 = vadd.f32 0.0, %v1397
        %v1399 = vpop.f32.mrf.mxu0
        %1400 = vdwg.mxu0
        %1402 = vrot.lane.b32.xlu0 %v1398, 24
        %v1403 = vpop.permute.xlu0 %1402
        %vm1405 = vcmask 261312
        %1406 = vst.msk [vmem:[#allocation3] sm:$0xff] %vm1405, %v1403
        %v1407 = vld [vmem:[#allocation3] sm:$0xff]
        %v1408 = vpack.c.bf16 %v1407, %v1407
        %v1410 = vperm.slane %v1159, 0
        %v1416 = vunpack.c.l.b16 %v1154
        %v1417 = vunpack.c.l.b16 %v1155
        %v1418 = vunpack.c.l.b16 %v1156
        %v1419 = vunpack.c.l.b16 %v1157
        %v1420 = vpack.c.b16 %v1417, %v1416
        %v1421 = vpack.c.b16 %v1419, %v1418
        %v1425 = vsel %vm1135, %v1408, 0
        %1427 = vmatpush.bf16.msra.mxu0 0
        %1428 = vmatpush.bf16.msra.mxu0 0
        %1429 = vmatpush.bf16.msra.mxu0 0
        %1430 = vmatpush.bf16.msra.mxu0 0
        %1431 = vmatpush.bf16.msra.mxu0 0
        %1432 = vmatpush.bf16.msra.mxu0 0
        %1433 = vmatpush.bf16.msra.mxu0 %v1421
        %1434 = vmatpush.bf16.msra.mxu0 %v1420
        %1435 = vmatmul.bf16.gmra.mxu0 %v1425
        %v1436 = vpop.f32.mrf.mxu0
        %v1437 = vadd.f32 %v1410, %v1436
        %v1438 = vpop.f32.mrf.mxu0
        %1439 = vdwg.mxu0
        %v1440 = vadd.f32 %v1106, %v1437
        %v1441 = vsel %vm1135, %v1440, 0.0
        %1442 = vadd.xlane.f32.xlu0 %v1441
        %v1443 = vpop.xlane.xlu0 %1442
        %v1444 = vrcp.pop 32.0
        %v1445 = vmul.f32 32.0, %v1444
        %v1446 = vsub.f32 1.0, %v1445
        %v1447 = vmul.f32 %v1444, %v1446
        %v1448 = vadd.f32 %v1444, %v1447
        %vm1449 = vweird.f32 %v1444
        %v1450 = vsel %vm1449, %v1444, %v1448
        %v1451 = vmul.f32 %v1443, %v1450
        %v1452 = vsub.f32 %v1440, %v1451
        %v1453 = vmul.f32 %v1452, %v1452
        %v1454 = vsel %vm1135, %v1453, 0.0
        %1455 = vadd.xlane.f32.xlu0 %v1454
        %v1456 = vpop.xlane.xlu0 %1455
        %v1457 = vmul.f32 %v1456, %v1450
        %v1458 = vadd.f32 %v1457, 1e-05
        %v1459 = vrsqrt.pop %v1458
        %v1460 = vmul.f32 %v1459, %v1458
        %v1461 = vmul.f32 %v1460, %v1459
        %v1462 = vmul.f32 0.5, %v1461
        %v1463 = vsub.f32 1.5, %v1462
        %v1464 = vmul.f32 %v1459, %v1463
        %vm1465 = vweird.f32 %v1458
        %vm1466 = vweird.f32 %v1459
        %vm1467 = vmor %vm1465, %vm1466
        %v1468 = vsel %vm1467, %v1459, %v1464
        %v1469 = vmul.f32 %v1452, %v1468
        %v1470 = vperm.slane %v1109, 0
        %v1471 = vmul.f32 %v1469, %v1470
        %v1472 = vperm.slane %v1109, 1
        %v1473 = vadd.f32 %v1471, %v1472
        %v1474 = vld [vmem:[%s1092] sm:$0xff]
        %v1475 = vld [vmem:[%s1092 + $0x8] sm:$0xff]
        %v1476 = vpack.c.bf16 %v1475, %v1474
        %v1477 = vpack.c.bf16 %v1473, %v1473
        %s1478 = smul.addr %s1111, 4
        %s1479 = scalar_lea.vmem [#allocation12], %s1478
        %v1480 = vld [vmem:[%s1479] sm:$0xf]
        %v1481 = vld [vmem:[%s1479 + $0x4] sm:$0xf]
        %v1482 = vld [vmem:[%s1479 + $0x8] sm:$0xf]
        %v1483 = vld [vmem:[%s1479 + $0xc] sm:$0xf]
        %s1484 = scalar_lea.vmem [#allocation13], %s55
        %v1485 = vld [vmem:[%s1484] sm:$0x1]
        %v1487 = vperm.slane %v1485, 0
        %v1493 = vunpack.c.l.b16 %v1480
        %v1494 = vunpack.c.l.b16 %v1481
        %v1495 = vunpack.c.l.b16 %v1482
        %v1496 = vunpack.c.l.b16 %v1483
        %v1497 = vpack.c.b16 %v1494, %v1493
        %v1498 = vpack.c.b16 %v1496, %v1495
        %v1502 = vsel %vm1135, %v1477, 0
        %1504 = vmatpush.bf16.msra.mxu0 0
        %1505 = vmatpush.bf16.msra.mxu0 0
        %1506 = vmatpush.bf16.msra.mxu0 0
        %1507 = vmatpush.bf16.msra.mxu0 0
        %1508 = vmatpush.bf16.msra.mxu0 0
        %1509 = vmatpush.bf16.msra.mxu0 0
        %1510 = vmatpush.bf16.msra.mxu0 %v1498
        %1511 = vmatpush.bf16.msra.mxu0 %v1497
        %1512 = vmatmul.bf16.gmra.mxu0 %v1502
        %v1513 = vpop.f32.mrf.mxu0
        %v1514 = vadd.f32 %v1487, %v1513
        %v1515 = vpop.f32.mrf.mxu0
        %1516 = vdwg.mxu0
        %s1517 = smul.addr %s1111, 4
        %s1518 = scalar_lea.vmem [#allocation15], %s1517
        %v1519 = vld [vmem:[%s1518] sm:$0xf]
        %v1520 = vld [vmem:[%s1518 + $0x4] sm:$0xf]
        %v1521 = vld [vmem:[%s1518 + $0x8] sm:$0xf]
        %v1522 = vld [vmem:[%s1518 + $0xc] sm:$0xf]
        %s1523 = scalar_lea.vmem [#allocation16], %s55
        %v1524 = vld [vmem:[%s1523] sm:$0x1]
        %v1526 = vperm.slane %v1524, 0
        %v1532 = vunpack.c.l.b16 %v1519
        %v1533 = vunpack.c.l.b16 %v1520
        %v1534 = vunpack.c.l.b16 %v1521
        %v1535 = vunpack.c.l.b16 %v1522
        %v1536 = vpack.c.b16 %v1533, %v1532
        %v1537 = vpack.c.b16 %v1535, %v1534
        %v1541 = vsel %vm1135, %v1476, 0
        %1543 = vmatpush.bf16.msra.mxu0 0
        %1544 = vmatpush.bf16.msra.mxu0 0
        %1545 = vmatpush.bf16.msra.mxu0 0
        %1546 = vmatpush.bf16.msra.mxu0 0
        %1547 = vmatpush.bf16.msra.mxu0 0
        %1548 = vmatpush.bf16.msra.mxu0 0
        %1549 = vmatpush.bf16.msra.mxu0 %v1537
        %1550 = vmatpush.bf16.msra.mxu0 %v1536
        %1551 = vmatmul.bf16.gmra.mxu0 %v1541
        %v1552 = vpop.f32.mrf.mxu0
        %v1553 = vadd.f32 %v1526, %v1552
        %v1554 = vpop.f32.mrf.mxu0
        %v1555 = vadd.f32 %v1526, %v1554
        %1556 = vdwg.mxu0
        %s1557 = smul.addr %s1111, 4
        %s1558 = scalar_lea.vmem [#allocation18], %s1557
        %v1559 = vld [vmem:[%s1558] sm:$0xf]
        %v1560 = vld [vmem:[%s1558 + $0x4] sm:$0xf]
        %v1561 = vld [vmem:[%s1558 + $0x8] sm:$0xf]
        %v1562 = vld [vmem:[%s1558 + $0xc] sm:$0xf]
        %s1563 = scalar_lea.vmem [#allocation19], %s55
        %v1564 = vld [vmem:[%s1563] sm:$0x1]
        %v1565 = vpack.c.bf16 %v1514, %v1514
        %v1566 = vpack.c.bf16 %v1553, %v1553
        %v1567 = vpack.c.bf16 %v1555, %v1555
        %v1570 = vunpack.c.l.b16 %v1566
        %v1571 = vunpack.c.l.b16 %v1567
        %v1572 = vpack.c.b16 %v1571, %v1570
        %v1574 = vsel %vm1166, %v1565, 0
        %v1577 = vsel %vm1166, %v1572, 0
        %1579 = vmatpush.bf16.xpose.msra.mxu0 0
        %1580 = vmatpush.bf16.xpose.msra.mxu0 0
        %1581 = vmatpush.bf16.xpose.msra.mxu0 0
        %1582 = vmatpush.bf16.xpose.msra.mxu0 0
        %1583 = vmatpush.bf16.xpose.msra.mxu0 0
        %1584 = vmatpush.bf16.xpose.msra.mxu0 0
        %1585 = vmatpush.bf16.xpose.msra.mxu0 0
        %1586 = vmatpush.bf16.xpose.msra.mxu0 %v1577
        %1587 = vmatmul.bf16.gmra.mxu0 %v1574
        %v1588 = vpop.f32.mrf.mxu0
        %v1589 = vadd.f32 0.0, %v1588
        %v1590 = vpop.f32.mrf.mxu0
        %1591 = vdwg.mxu0
        %v1593 = vunpack.c.l.b16 %v1565
        %v1594 = vpack.c.b16 %v1593, %v1593
        %1595 = vrot.lane.b32.xlu0 %v1594, 120
        %v1596 = vpop.permute.xlu0 %1595
        %1597 = vrot.lane.b32.xlu0 %v1572, 120
        %v1598 = vpop.permute.xlu0 %1597
        %v1600 = vsel %vm1166, %v1596, 0
        %v1603 = vsel %vm1166, %v1598, 0
        %1605 = vmatpush.bf16.xpose.msra.mxu0 0
        %1606 = vmatpush.bf16.xpose.msra.mxu0 0
        %1607 = vmatpush.bf16.xpose.msra.mxu0 0
        %1608 = vmatpush.bf16.xpose.msra.mxu0 0
        %1609 = vmatpush.bf16.xpose.msra.mxu0 0
        %1610 = vmatpush.bf16.xpose.msra.mxu0 0
        %1611 = vmatpush.bf16.xpose.msra.mxu0 0
        %1612 = vmatpush.bf16.xpose.msra.mxu0 %v1603
        %1613 = vmatmul.bf16.gmra.mxu0 %v1600
        %v1614 = vpop.f32.mrf.mxu0
        %v1615 = vadd.f32 0.0, %v1614
        %v1616 = vpop.f32.mrf.mxu0
        %1617 = vdwg.mxu0
        %1618 = vrot.lane.b32.xlu0 %v1594, 112
        %v1619 = vpop.permute.xlu0 %1618
        %1620 = vrot.lane.b32.xlu0 %v1572, 112
        %v1621 = vpop.permute.xlu0 %1620
        %v1623 = vsel %vm1166, %v1619, 0
        %v1626 = vsel %vm1166, %v1621, 0
        %1628 = vmatpush.bf16.xpose.msra.mxu0 0
        %1629 = vmatpush.bf16.xpose.msra.mxu0 0
        %1630 = vmatpush.bf16.xpose.msra.mxu0 0
        %1631 = vmatpush.bf16.xpose.msra.mxu0 0
        %1632 = vmatpush.bf16.xpose.msra.mxu0 0
        %1633 = vmatpush.bf16.xpose.msra.mxu0 0
        %1634 = vmatpush.bf16.xpose.msra.mxu0 0
        %1635 = vmatpush.bf16.xpose.msra.mxu0 %v1626
        %1636 = vmatmul.bf16.gmra.mxu0 %v1623
        %v1637 = vpop.f32.mrf.mxu0
        %v1638 = vadd.f32 0.0, %v1637
        %v1639 = vpop.f32.mrf.mxu0
        %1640 = vdwg.mxu0
        %1641 = vrot.lane.b32.xlu0 %v1594, 104
        %v1642 = vpop.permute.xlu0 %1641
        %1643 = vrot.lane.b32.xlu0 %v1572, 104
        %v1644 = vpop.permute.xlu0 %1643
        %v1646 = vsel %vm1166, %v1642, 0
        %v1649 = vsel %vm1166, %v1644, 0
        %1651 = vmatpush.bf16.xpose.msra.mxu0 0
        %1652 = vmatpush.bf16.xpose.msra.mxu0 0
        %1653 = vmatpush.bf16.xpose.msra.mxu0 0
        %1654 = vmatpush.bf16.xpose.msra.mxu0 0
        %1655 = vmatpush.bf16.xpose.msra.mxu0 0
        %1656 = vmatpush.bf16.xpose.msra.mxu0 0
        %1657 = vmatpush.bf16.xpose.msra.mxu0 0
        %1658 = vmatpush.bf16.xpose.msra.mxu0 %v1649
        %1659 = vmatmul.bf16.gmra.mxu0 %v1646
        %v1660 = vpop.f32.mrf.mxu0
        %v1661 = vadd.f32 0.0, %v1660
        %v1662 = vpop.f32.mrf.mxu0
        %1663 = vdwg.mxu0
        %vm1664 = vcmask 130048
        %v1665 = vsel %vm1664, %v1589, -inf
        %1666 = vmax.xlane.f32.xlu0 %v1665
        %v1667 = vpop.xlane.xlu0 %1666
        %v1668 = vsel %vm1664, %v1615, -inf
        %1669 = vmax.xlane.f32.xlu0 %v1668
        %v1670 = vpop.xlane.xlu0 %1669
        %v1671 = vsel %vm1664, %v1638, -inf
        %1672 = vmax.xlane.f32.xlu0 %v1671
        %v1673 = vpop.xlane.xlu0 %1672
        %v1674 = vsel %vm1664, %v1661, -inf
        %1675 = vmax.xlane.f32.xlu0 %v1674
        %v1676 = vpop.xlane.xlu0 %1675
        %v1677 = vsub.f32 %v1589, %v1667
        %v1678 = vsub.f32 %v1615, %v1670
        %v1679 = vsub.f32 %v1638, %v1673
        %v1680 = vsub.f32 %v1661, %v1676
        %v1681 = vmul.f32 %v1677, 1.442695
        %v1682 = vpow.pop %v1681
        %v1683 = vmul.f32 %v1678, 1.442695
        %v1684 = vpow.pop %v1683
        %v1685 = vmul.f32 %v1679, 1.442695
        %v1686 = vpow.pop %v1685
        %v1687 = vmul.f32 %v1680, 1.442695
        %v1688 = vpow.pop %v1687
        %v1689 = vsel %vm1664, %v1682, 0.0
        %1690 = vadd.xlane.f32.xlu0 %v1689
        %v1691 = vpop.xlane.xlu0 %1690
        %v1692 = vsel %vm1664, %v1684, 0.0
        %1693 = vadd.xlane.f32.xlu0 %v1692
        %v1694 = vpop.xlane.xlu0 %1693
        %v1695 = vsel %vm1664, %v1686, 0.0
        %1696 = vadd.xlane.f32.xlu0 %v1695
        %v1697 = vpop.xlane.xlu0 %1696
        %v1698 = vsel %vm1664, %v1688, 0.0
        %1699 = vadd.xlane.f32.xlu0 %v1698
        %v1700 = vpop.xlane.xlu0 %1699
        %v1701 = vrcp.pop %v1691
        %v1702 = vrcp.pop %v1694
        %v1703 = vrcp.pop %v1697
        %v1704 = vrcp.pop %v1700
        %v1705 = vmul.f32 %v1682, %v1701
        %v1706 = vmul.f32 %v1684, %v1702
        %v1707 = vmul.f32 %v1686, %v1703
        %v1708 = vmul.f32 %v1688, %v1704
        %v1709 = vpack.c.bf16 %v1705, %v1705
        %v1710 = vpack.c.bf16 %v1706, %v1706
        %v1711 = vpack.c.bf16 %v1707, %v1707
        %v1712 = vpack.c.bf16 %v1708, %v1708
        %1713 = vrot.lane.b32.xlu0 %v1572, 96
        %v1714 = vpop.permute.xlu0 %1713
        %v1717 = vsel %vm1664, %v1709, 0
        %1719 = vmatpush.bf16.msra.mxu0 0
        %1720 = vmatpush.bf16.msra.mxu0 0
        %1721 = vmatpush.bf16.msra.mxu0 0
        %1722 = vmatpush.bf16.msra.mxu0 0
        %1723 = vmatpush.bf16.msra.mxu0 0
        %1724 = vmatpush.bf16.msra.mxu0 0
        %1725 = vmatpush.bf16.msra.mxu0 0
        %1726 = vmatpush.bf16.msra.mxu0 %v1714
        %1727 = vmatmul.bf16.gmra.mxu0 %v1717
        %v1728 = vpop.f32.mrf.mxu0
        %v1729 = vadd.f32 0.0, %v1728
        %v1730 = vpop.f32.mrf.mxu0
        %1731 = vdwg.mxu0
        %1732 = vst.msk [vmem:[#allocation3] sm:$0xff] %vm1166, %v1729
        %1733 = vrot.lane.b32.xlu0 %v1572, 88
        %v1734 = vpop.permute.xlu0 %1733
        %v1737 = vsel %vm1664, %v1710, 0
        %1739 = vmatpush.bf16.msra.mxu0 0
        %1740 = vmatpush.bf16.msra.mxu0 0
        %1741 = vmatpush.bf16.msra.mxu0 0
        %1742 = vmatpush.bf16.msra.mxu0 0
        %1743 = vmatpush.bf16.msra.mxu0 0
        %1744 = vmatpush.bf16.msra.mxu0 0
        %1745 = vmatpush.bf16.msra.mxu0 0
        %1746 = vmatpush.bf16.msra.mxu0 %v1734
        %1747 = vmatmul.bf16.gmra.mxu0 %v1737
        %v1748 = vpop.f32.mrf.mxu0
        %v1749 = vadd.f32 0.0, %v1748
        %v1750 = vpop.f32.mrf.mxu0
        %1751 = vdwg.mxu0
        %1753 = vrot.lane.b32.xlu0 %v1749, 8
        %v1754 = vpop.permute.xlu0 %1753
        %1756 = vst.msk [vmem:[#allocation3] sm:$0xff] %vm1351, %v1754
        %1757 = vrot.lane.b32.xlu0 %v1572, 80
        %v1758 = vpop.permute.xlu0 %1757
        %v1761 = vsel %vm1664, %v1711, 0
        %1763 = vmatpush.bf16.msra.mxu0 0
        %1764 = vmatpush.bf16.msra.mxu0 0
        %1765 = vmatpush.bf16.msra.mxu0 0
        %1766 = vmatpush.bf16.msra.mxu0 0
        %1767 = vmatpush.bf16.msra.mxu0 0
        %1768 = vmatpush.bf16.msra.mxu0 0
        %1769 = vmatpush.bf16.msra.mxu0 0
        %1770 = vmatpush.bf16.msra.mxu0 %v1758
        %1771 = vmatmul.bf16.gmra.mxu0 %v1761
        %v1772 = vpop.f32.mrf.mxu0
        %v1773 = vadd.f32 0.0, %v1772
        %v1774 = vpop.f32.mrf.mxu0
        %1775 = vdwg.mxu0
        %1777 = vrot.lane.b32.xlu0 %v1773, 16
        %v1778 = vpop.permute.xlu0 %1777
        %1780 = vst.msk [vmem:[#allocation3] sm:$0xff] %vm1378, %v1778
        %1781 = vrot.lane.b32.xlu0 %v1572, 72
        %v1782 = vpop.permute.xlu0 %1781
        %v1785 = vsel %vm1664, %v1712, 0
        %1787 = vmatpush.bf16.msra.mxu0 0
        %1788 = vmatpush.bf16.msra.mxu0 0
        %1789 = vmatpush.bf16.msra.mxu0 0
        %1790 = vmatpush.bf16.msra.mxu0 0
        %1791 = vmatpush.bf16.msra.mxu0 0
        %1792 = vmatpush.bf16.msra.mxu0 0
        %1793 = vmatpush.bf16.msra.mxu0 0
        %1794 = vmatpush.bf16.msra.mxu0 %v1782
        %1795 = vmatmul.bf16.gmra.mxu0 %v1785
        %v1796 = vpop.f32.mrf.mxu0
        %v1797 = vadd.f32 0.0, %v1796
        %v1798 = vpop.f32.mrf.mxu0
        %1799 = vdwg.mxu0
        %1801 = vrot.lane.b32.xlu0 %v1797, 24
        %v1802 = vpop.permute.xlu0 %1801
        %1804 = vst.msk [vmem:[#allocation3] sm:$0xff] %vm1405, %v1802
        %v1805 = vld [vmem:[#allocation3] sm:$0xff]
        %v1806 = vpack.c.bf16 %v1805, %v1805
        %v1808 = vperm.slane %v1564, 0
        %v1814 = vunpack.c.l.b16 %v1559
        %v1815 = vunpack.c.l.b16 %v1560
        %v1816 = vunpack.c.l.b16 %v1561
        %v1817 = vunpack.c.l.b16 %v1562
        %v1818 = vpack.c.b16 %v1815, %v1814
        %v1819 = vpack.c.b16 %v1817, %v1816
        %v1823 = vsel %vm1135, %v1806, 0
        %1825 = vmatpush.bf16.msra.mxu0 0
        %1826 = vmatpush.bf16.msra.mxu0 0
        %1827 = vmatpush.bf16.msra.mxu0 0
        %1828 = vmatpush.bf16.msra.mxu0 0
        %1829 = vmatpush.bf16.msra.mxu0 0
        %1830 = vmatpush.bf16.msra.mxu0 0
        %1831 = vmatpush.bf16.msra.mxu0 %v1819
        %1832 = vmatpush.bf16.msra.mxu0 %v1818
        %1833 = vmatmul.bf16.gmra.mxu0 %v1823
        %v1834 = vpop.f32.mrf.mxu0
        %v1835 = vadd.f32 %v1808, %v1834
        %v1836 = vpop.f32.mrf.mxu0
        %1837 = vdwg.mxu0
        %v1838 = vadd.f32 %v1473, %v1835
        %v1839 = vsel %vm1135, %v1838, 0.0
        %1840 = vadd.xlane.f32.xlu0 %v1839
        %v1841 = vpop.xlane.xlu0 %1840
        %v1842 = vmul.f32 %v1841, %v1450
        %v1843 = vsub.f32 %v1838, %v1842
        %v1844 = vmul.f32 %v1843, %v1843
        %v1845 = vsel %vm1135, %v1844, 0.0
        %1846 = vadd.xlane.f32.xlu0 %v1845
        %v1847 = vpop.xlane.xlu0 %1846
        %v1848 = vmul.f32 %v1847, %v1450
        %v1849 = vadd.f32 %v1848, 1e-05
        %v1850 = vrsqrt.pop %v1849
        %v1851 = vmul.f32 %v1850, %v1849
        %v1852 = vmul.f32 %v1851, %v1850
        %v1853 = vmul.f32 0.5, %v1852
        %v1854 = vsub.f32 1.5, %v1853
        %v1855 = vmul.f32 %v1850, %v1854
        %vm1856 = vweird.f32 %v1849
        %vm1857 = vweird.f32 %v1850
        %vm1858 = vmor %vm1856, %vm1857
        %v1859 = vsel %vm1858, %v1850, %v1855
        %v1860 = vmul.f32 %v1843, %v1859
        %v1861 = vperm.slane %v1109, 2
        %v1862 = vmul.f32 %v1860, %v1861
        %v1863 = vperm.slane %v1109, 3
        %v1864 = vadd.f32 %v1862, %v1863
        %v1865 = vld [vmem:[%s1097] sm:$0xff]
        %v1866 = vld [vmem:[%s1097 + $0x8] sm:$0xff]
        %v1867 = vpack.c.bf16 %v1866, %v1865
        %v1868 = vpack.c.bf16 %v1864, %v1864
        %s1869 = smul.addr %s1111, 4
        %s1870 = scalar_lea.vmem [#allocation21], %s1869
        %v1871 = vld [vmem:[%s1870] sm:$0xf]
        %v1872 = vld [vmem:[%s1870 + $0x4] sm:$0xf]
        %v1873 = vld [vmem:[%s1870 + $0x8] sm:$0xf]
        %v1874 = vld [vmem:[%s1870 + $0xc] sm:$0xf]
        %s1875 = scalar_lea.vmem [#allocation22], %s55
        %v1876 = vld [vmem:[%s1875] sm:$0x1]
        %v1878 = vperm.slane %v1876, 0
        %v1884 = vunpack.c.l.b16 %v1871
        %v1885 = vunpack.c.l.b16 %v1872
        %v1886 = vunpack.c.l.b16 %v1873
        %v1887 = vunpack.c.l.b16 %v1874
        %v1888 = vpack.c.b16 %v1885, %v1884
        %v1889 = vpack.c.b16 %v1887, %v1886
        %v1893 = vsel %vm1135, %v1868, 0
        %1895 = vmatpush.bf16.msra.mxu0 0
        %1896 = vmatpush.bf16.msra.mxu0 0
        %1897 = vmatpush.bf16.msra.mxu0 0
        %1898 = vmatpush.bf16.msra.mxu0 0
        %1899 = vmatpush.bf16.msra.mxu0 0
        %1900 = vmatpush.bf16.msra.mxu0 0
        %1901 = vmatpush.bf16.msra.mxu0 %v1889
        %1902 = vmatpush.bf16.msra.mxu0 %v1888
        %1903 = vmatmul.bf16.gmra.mxu0 %v1893
        %v1904 = vpop.f32.mrf.mxu0
        %v1905 = vadd.f32 %v1878, %v1904
        %v1906 = vpop.f32.mrf.mxu0
        %1907 = vdwg.mxu0
        %s1908 = smul.addr %s1111, 4
        %s1909 = scalar_lea.vmem [#allocation24], %s1908
        %v1910 = vld [vmem:[%s1909] sm:$0xf]
        %v1911 = vld [vmem:[%s1909 + $0x4] sm:$0xf]
        %v1912 = vld [vmem:[%s1909 + $0x8] sm:$0xf]
        %v1913 = vld [vmem:[%s1909 + $0xc] sm:$0xf]
        %s1914 = scalar_lea.vmem [#allocation25], %s55
        %v1915 = vld [vmem:[%s1914] sm:$0x1]
        %v1917 = vperm.slane %v1915, 0
        %v1923 = vunpack.c.l.b16 %v1910
        %v1924 = vunpack.c.l.b16 %v1911
        %v1925 = vunpack.c.l.b16 %v1912
        %v1926 = vunpack.c.l.b16 %v1913
        %v1927 = vpack.c.b16 %v1924, %v1923
        %v1928 = vpack.c.b16 %v1926, %v1925
        %v1932 = vsel %vm1135, %v1867, 0
        %1934 = vmatpush.bf16.msra.mxu0 0
        %1935 = vmatpush.bf16.msra.mxu0 0
        %1936 = vmatpush.bf16.msra.mxu0 0
        %1937 = vmatpush.bf16.msra.mxu0 0
        %1938 = vmatpush.bf16.msra.mxu0 0
        %1939 = vmatpush.bf16.msra.mxu0 0
        %1940 = vmatpush.bf16.msra.mxu0 %v1928
        %1941 = vmatpush.bf16.msra.mxu0 %v1927
        %1942 = vmatmul.bf16.gmra.mxu0 %v1932
        %v1943 = vpop.f32.mrf.mxu0
        %v1944 = vadd.f32 %v1917, %v1943
        %v1945 = vpop.f32.mrf.mxu0
        %v1946 = vadd.f32 %v1917, %v1945
        %1947 = vdwg.mxu0
        %s1948 = smul.addr %s1111, 4
        %s1949 = scalar_lea.vmem [#allocation27], %s1948
        %v1950 = vld [vmem:[%s1949] sm:$0xf]
        %v1951 = vld [vmem:[%s1949 + $0x4] sm:$0xf]
        %v1952 = vld [vmem:[%s1949 + $0x8] sm:$0xf]
        %v1953 = vld [vmem:[%s1949 + $0xc] sm:$0xf]
        %s1954 = scalar_lea.vmem [#allocation28], %s55
        %v1955 = vld [vmem:[%s1954] sm:$0x1]
        %v1956 = vpack.c.bf16 %v1905, %v1905
        %v1957 = vpack.c.bf16 %v1944, %v1944
        %v1958 = vpack.c.bf16 %v1946, %v1946
        %v1961 = vunpack.c.l.b16 %v1957
        %v1962 = vunpack.c.l.b16 %v1958
        %v1963 = vpack.c.b16 %v1962, %v1961
        %v1965 = vsel %vm1166, %v1956, 0
        %v1968 = vsel %vm1166, %v1963, 0
        %1970 = vmatpush.bf16.xpose.msra.mxu0 0
        %1971 = vmatpush.bf16.xpose.msra.mxu0 0
        %1972 = vmatpush.bf16.xpose.msra.mxu0 0
        %1973 = vmatpush.bf16.xpose.msra.mxu0 0
        %1974 = vmatpush.bf16.xpose.msra.mxu0 0
        %1975 = vmatpush.bf16.xpose.msra.mxu0 0
        %1976 = vmatpush.bf16.xpose.msra.mxu0 0
        %1977 = vmatpush.bf16.xpose.msra.mxu0 %v1968
        %1978 = vmatmul.bf16.gmra.mxu0 %v1965
        %v1979 = vpop.f32.mrf.mxu0
        %v1980 = vadd.f32 0.0, %v1979
        %v1981 = vpop.f32.mrf.mxu0
        %1982 = vdwg.mxu0
        %v1984 = vunpack.c.l.b16 %v1956
        %v1985 = vpack.c.b16 %v1984, %v1984
        %1986 = vrot.lane.b32.xlu0 %v1985, 120
        %v1987 = vpop.permute.xlu0 %1986
        %1988 = vrot.lane.b32.xlu0 %v1963, 120
        %v1989 = vpop.permute.xlu0 %1988
        %v1991 = vsel %vm1166, %v1987, 0
        %v1994 = vsel %vm1166, %v1989, 0
        %1996 = vmatpush.bf16.xpose.msra.mxu0 0
        %1997 = vmatpush.bf16.xpose.msra.mxu0 0
        %1998 = vmatpush.bf16.xpose.msra.mxu0 0
        %1999 = vmatpush.bf16.xpose.msra.mxu0 0
        %2000 = vmatpush.bf16.xpose.msra.mxu0 0
        %2001 = vmatpush.bf16.xpose.msra.mxu0 0
        %2002 = vmatpush.bf16.xpose.msra.mxu0 0
        %2003 = vmatpush.bf16.xpose.msra.mxu0 %v1994
        %2004 = vmatmul.bf16.gmra.mxu0 %v1991
        %v2005 = vpop.f32.mrf.mxu0
        %v2006 = vadd.f32 0.0, %v2005
        %v2007 = vpop.f32.mrf.mxu0
        %2008 = vdwg.mxu0
        %2009 = vrot.lane.b32.xlu0 %v1985, 112
        %v2010 = vpop.permute.xlu0 %2009
        %2011 = vrot.lane.b32.xlu0 %v1963, 112
        %v2012 = vpop.permute.xlu0 %2011
        %v2014 = vsel %vm1166, %v2010, 0
        %v2017 = vsel %vm1166, %v2012, 0
        %2019 = vmatpush.bf16.xpose.msra.mxu0 0
        %2020 = vmatpush.bf16.xpose.msra.mxu0 0
        %2021 = vmatpush.bf16.xpose.msra.mxu0 0
        %2022 = vmatpush.bf16.xpose.msra.mxu0 0
        %2023 = vmatpush.bf16.xpose.msra.mxu0 0
        %2024 = vmatpush.bf16.xpose.msra.mxu0 0
        %2025 = vmatpush.bf16.xpose.msra.mxu0 0
        %2026 = vmatpush.bf16.xpose.msra.mxu0 %v2017
        %2027 = vmatmul.bf16.gmra.mxu0 %v2014
        %v2028 = vpop.f32.mrf.mxu0
        %v2029 = vadd.f32 0.0, %v2028
        %v2030 = vpop.f32.mrf.mxu0
        %2031 = vdwg.mxu0
        %2032 = vrot.lane.b32.xlu0 %v1985, 104
        %v2033 = vpop.permute.xlu0 %2032
        %2034 = vrot.lane.b32.xlu0 %v1963, 104
        %v2035 = vpop.permute.xlu0 %2034
        %v2037 = vsel %vm1166, %v2033, 0
        %v2040 = vsel %vm1166, %v2035, 0
        %2042 = vmatpush.bf16.xpose.msra.mxu0 0
        %2043 = vmatpush.bf16.xpose.msra.mxu0 0
        %2044 = vmatpush.bf16.xpose.msra.mxu0 0
        %2045 = vmatpush.bf16.xpose.msra.mxu0 0
        %2046 = vmatpush.bf16.xpose.msra.mxu0 0
        %2047 = vmatpush.bf16.xpose.msra.mxu0 0
        %2048 = vmatpush.bf16.xpose.msra.mxu0 0
        %2049 = vmatpush.bf16.xpose.msra.mxu0 %v2040
        %2050 = vmatmul.bf16.gmra.mxu0 %v2037
        %v2051 = vpop.f32.mrf.mxu0
        %v2052 = vadd.f32 0.0, %v2051
        %v2053 = vpop.f32.mrf.mxu0
        %2054 = vdwg.mxu0
        %v2055 = vsel %vm1664, %v1980, -inf
        %2056 = vmax.xlane.f32.xlu0 %v2055
        %v2057 = vpop.xlane.xlu0 %2056
        %v2058 = vsel %vm1664, %v2006, -inf
        %2059 = vmax.xlane.f32.xlu0 %v2058
        %v2060 = vpop.xlane.xlu0 %2059
        %v2061 = vsel %vm1664, %v2029, -inf
        %2062 = vmax.xlane.f32.xlu0 %v2061
        %v2063 = vpop.xlane.xlu0 %2062
        %v2064 = vsel %vm1664, %v2052, -inf
        %2065 = vmax.xlane.f32.xlu0 %v2064
        %v2066 = vpop.xlane.xlu0 %2065
        %v2067 = vsub.f32 %v1980, %v2057
        %v2068 = vsub.f32 %v2006, %v2060
        %v2069 = vsub.f32 %v2029, %v2063
        %v2070 = vsub.f32 %v2052, %v2066
        %v2071 = vmul.f32 %v2067, 1.442695
        %v2072 = vpow.pop %v2071
        %v2073 = vmul.f32 %v2068, 1.442695
        %v2074 = vpow.pop %v2073
        %v2075 = vmul.f32 %v2069, 1.442695
        %v2076 = vpow.pop %v2075
        %v2077 = vmul.f32 %v2070, 1.442695
        %v2078 = vpow.pop %v2077
        %v2079 = vsel %vm1664, %v2072, 0.0
        %2080 = vadd.xlane.f32.xlu0 %v2079
        %v2081 = vpop.xlane.xlu0 %2080
        %v2082 = vsel %vm1664, %v2074, 0.0
        %2083 = vadd.xlane.f32.xlu0 %v2082
        %v2084 = vpop.xlane.xlu0 %2083
        %v2085 = vsel %vm1664, %v2076, 0.0
        %2086 = vadd.xlane.f32.xlu0 %v2085
        %v2087 = vpop.xlane.xlu0 %2086
        %v2088 = vsel %vm1664, %v2078, 0.0
        %2089 = vadd.xlane.f32.xlu0 %v2088
        %v2090 = vpop.xlane.xlu0 %2089
        %v2091 = vrcp.pop %v2081
        %v2092 = vrcp.pop %v2084
        %v2093 = vrcp.pop %v2087
        %v2094 = vrcp.pop %v2090
        %v2095 = vmul.f32 %v2072, %v2091
        %v2096 = vmul.f32 %v2074, %v2092
        %v2097 = vmul.f32 %v2076, %v2093
        %v2098 = vmul.f32 %v2078, %v2094
        %v2099 = vpack.c.bf16 %v2095, %v2095
        %v2100 = vpack.c.bf16 %v2096, %v2096
        %v2101 = vpack.c.bf16 %v2097, %v2097
        %v2102 = vpack.c.bf16 %v2098, %v2098
        %2103 = vrot.lane.b32.xlu0 %v1963, 96
        %v2104 = vpop.permute.xlu0 %2103
        %v2107 = vsel %vm1664, %v2099, 0
        %2109 = vmatpush.bf16.msra.mxu0 0
        %2110 = vmatpush.bf16.msra.mxu0 0
        %2111 = vmatpush.bf16.msra.mxu0 0
        %2112 = vmatpush.bf16.msra.mxu0 0
        %2113 = vmatpush.bf16.msra.mxu0 0
        %2114 = vmatpush.bf16.msra.mxu0 0
        %2115 = vmatpush.bf16.msra.mxu0 0
        %2116 = vmatpush.bf16.msra.mxu0 %v2104
        %2117 = vmatmul.bf16.gmra.mxu0 %v2107
        %v2118 = vpop.f32.mrf.mxu0
        %v2119 = vadd.f32 0.0, %v2118
        %v2120 = vpop.f32.mrf.mxu0
        %2121 = vdwg.mxu0
        %2122 = vst.msk [vmem:[#allocation3] sm:$0xff] %vm1166, %v2119
        %2123 = vrot.lane.b32.xlu0 %v1963, 88
        %v2124 = vpop.permute.xlu0 %2123
        %v2127 = vsel %vm1664, %v2100, 0
        %2129 = vmatpush.bf16.msra.mxu0 0
        %2130 = vmatpush.bf16.msra.mxu0 0
        %2131 = vmatpush.bf16.msra.mxu0 0
        %2132 = vmatpush.bf16.msra.mxu0 0
        %2133 = vmatpush.bf16.msra.mxu0 0
        %2134 = vmatpush.bf16.msra.mxu0 0
        %2135 = vmatpush.bf16.msra.mxu0 0
        %2136 = vmatpush.bf16.msra.mxu0 %v2124
        %2137 = vmatmul.bf16.gmra.mxu0 %v2127
        %v2138 = vpop.f32.mrf.mxu0
        %v2139 = vadd.f32 0.0, %v2138
        %v2140 = vpop.f32.mrf.mxu0
        %2141 = vdwg.mxu0
        %2143 = vrot.lane.b32.xlu0 %v2139, 8
        %v2144 = vpop.permute.xlu0 %2143
        %2146 = vst.msk [vmem:[#allocation3] sm:$0xff] %vm1351, %v2144
        %2147 = vrot.lane.b32.xlu0 %v1963, 80
        %v2148 = vpop.permute.xlu0 %2147
        %v2151 = vsel %vm1664, %v2101, 0
        %2153 = vmatpush.bf16.msra.mxu0 0
        %2154 = vmatpush.bf16.msra.mxu0 0
        %2155 = vmatpush.bf16.msra.mxu0 0
        %2156 = vmatpush.bf16.msra.mxu0 0
        %2157 = vmatpush.bf16.msra.mxu0 0
        %2158 = vmatpush.bf16.msra.mxu0 0
        %2159 = vmatpush.bf16.msra.mxu0 0
        %2160 = vmatpush.bf16.msra.mxu0 %v2148
        %2161 = vmatmul.bf16.gmra.mxu0 %v2151
        %v2162 = vpop.f32.mrf.mxu0
        %v2163 = vadd.f32 0.0, %v2162
        %v2164 = vpop.f32.mrf.mxu0
        %2165 = vdwg.mxu0
        %2167 = vrot.lane.b32.xlu0 %v2163, 16
        %v2168 = vpop.permute.xlu0 %2167
        %2170 = vst.msk [vmem:[#allocation3] sm:$0xff] %vm1378, %v2168
        %2171 = vrot.lane.b32.xlu0 %v1963, 72
        %v2172 = vpop.permute.xlu0 %2171
        %v2175 = vsel %vm1664, %v2102, 0
        %2177 = vmatpush.bf16.msra.mxu0 0
        %2178 = vmatpush.bf16.msra.mxu0 0
        %2179 = vmatpush.bf16.msra.mxu0 0
        %2180 = vmatpush.bf16.msra.mxu0 0
        %2181 = vmatpush.bf16.msra.mxu0 0
        %2182 = vmatpush.bf16.msra.mxu0 0
        %2183 = vmatpush.bf16.msra.mxu0 0
        %2184 = vmatpush.bf16.msra.mxu0 %v2172
        %2185 = vmatmul.bf16.gmra.mxu0 %v2175
        %v2186 = vpop.f32.mrf.mxu0
        %v2187 = vadd.f32 0.0, %v2186
        %v2188 = vpop.f32.mrf.mxu0
        %2189 = vdwg.mxu0
        %2191 = vrot.lane.b32.xlu0 %v2187, 24
        %v2192 = vpop.permute.xlu0 %2191
        %2194 = vst.msk [vmem:[#allocation3] sm:$0xff] %vm1405, %v2192
        %v2195 = vld [vmem:[#allocation3] sm:$0xff]
        %v2196 = vpack.c.bf16 %v2195, %v2195
        %v2198 = vperm.slane %v1955, 0
        %v2204 = vunpack.c.l.b16 %v1950
        %v2205 = vunpack.c.l.b16 %v1951
        %v2206 = vunpack.c.l.b16 %v1952
        %v2207 = vunpack.c.l.b16 %v1953
        %v2208 = vpack.c.b16 %v2205, %v2204
        %v2209 = vpack.c.b16 %v2207, %v2206
        %v2213 = vsel %vm1135, %v2196, 0
        %2215 = vmatpush.bf16.msra.mxu0 0
        %2216 = vmatpush.bf16.msra.mxu0 0
        %2217 = vmatpush.bf16.msra.mxu0 0
        %2218 = vmatpush.bf16.msra.mxu0 0
        %2219 = vmatpush.bf16.msra.mxu0 0
        %2220 = vmatpush.bf16.msra.mxu0 0
        %2221 = vmatpush.bf16.msra.mxu0 %v2209
        %2222 = vmatpush.bf16.msra.mxu0 %v2208
        %2223 = vmatmul.bf16.gmra.mxu0 %v2213
        %v2224 = vpop.f32.mrf.mxu0
        %v2225 = vadd.f32 %v2198, %v2224
        %v2226 = vpop.f32.mrf.mxu0
        %2227 = vdwg.mxu0
        %v2228 = vadd.f32 %v1864, %v2225
        %v2229 = vsel %vm1135, %v2228, 0.0
        %2230 = vadd.xlane.f32.xlu0 %v2229
        %v2231 = vpop.xlane.xlu0 %2230
        %v2232 = vmul.f32 %v2231, %v1450
        %v2233 = vsub.f32 %v2228, %v2232
        %v2234 = vmul.f32 %v2233, %v2233
        %v2235 = vsel %vm1135, %v2234, 0.0
        %2236 = vadd.xlane.f32.xlu0 %v2235
        %v2237 = vpop.xlane.xlu0 %2236
        %v2238 = vmul.f32 %v2237, %v1450
        %v2239 = vadd.f32 %v2238, 1e-05
        %v2240 = vrsqrt.pop %v2239
        %v2241 = vmul.f32 %v2240, %v2239
        %v2242 = vmul.f32 %v2241, %v2240
        %v2243 = vmul.f32 0.5, %v2242
        %v2244 = vsub.f32 1.5, %v2243
        %v2245 = vmul.f32 %v2240, %v2244
        %vm2246 = vweird.f32 %v2239
        %vm2247 = vweird.f32 %v2240
        %vm2248 = vmor %vm2246, %vm2247
        %v2249 = vsel %vm2248, %v2240, %v2245
        %v2250 = vmul.f32 %v2233, %v2249
        %v2251 = vperm.slane %v1109, 4
        %v2252 = vmul.f32 %v2250, %v2251
        %v2253 = vperm.slane %v1109, 5
        %v2254 = vadd.f32 %v2252, %v2253
        %v2255 = vpack.c.bf16 %v2254, %v2254
        %s2256 = smul.addr %s1111, 4
        %s2257 = scalar_lea.vmem [#allocation30], %s2256
        %v2258 = vld [vmem:[%s2257] sm:$0xf]
        %v2259 = vld [vmem:[%s2257 + $0x4] sm:$0xf]
        %v2260 = vld [vmem:[%s2257 + $0x8] sm:$0xf]
        %v2261 = vld [vmem:[%s2257 + $0xc] sm:$0xf]
        %s2262 = scalar_lea.vmem %s20, %s55
        %v2263 = vld [vmem:[%s2262] sm:$0x1]
        %v2265 = vperm.slane %v2263, 0
        %v2271 = vunpack.c.l.b16 %v2258
        %v2272 = vunpack.c.l.b16 %v2259
        %v2273 = vunpack.c.l.b16 %v2260
        %v2274 = vunpack.c.l.b16 %v2261
        %v2275 = vpack.c.b16 %v2272, %v2271
        %v2276 = vpack.c.b16 %v2274, %v2273
        %v2280 = vsel %vm1135, %v2255, 0
        %2282 = vmatpush.bf16.msra.mxu0 0
        %2283 = vmatpush.bf16.msra.mxu0 0
        %2284 = vmatpush.bf16.msra.mxu0 0
        %2285 = vmatpush.bf16.msra.mxu0 0
        %2286 = vmatpush.bf16.msra.mxu0 0
        %2287 = vmatpush.bf16.msra.mxu0 0
        %2288 = vmatpush.bf16.msra.mxu0 %v2276
        %2289 = vmatpush.bf16.msra.mxu0 %v2275
        %2290 = vmatmul.bf16.gmra.mxu0 %v2280
        %v2291 = vpop.f32.mrf.mxu0
        %v2292 = vadd.f32 %v2265, %v2291
        %v2293 = vpop.f32.mrf.mxu0
        %2294 = vdwg.mxu0
        %v2295 = vmax.f32 %v2292, 0.0
        %v2296 = vpack.c.bf16 %v2295, %v2295
        %s2297 = smul.addr %s1107, 4
        %s2298 = scalar_lea.vmem %s21, %s2297
        %v2299 = vld [vmem:[%s2298] sm:$0xf]
        %v2300 = vld [vmem:[%s2298 + $0x4] sm:$0xf]
        %v2301 = vld [vmem:[%s2298 + $0x8] sm:$0xf]
        %v2302 = vld [vmem:[%s2298 + $0xc] sm:$0xf]
        %v2303 = vld [vmem:[%s2298 + $0x10] sm:$0xf]
        %v2304 = vld [vmem:[%s2298 + $0x14] sm:$0xf]
        %v2305 = vld [vmem:[%s2298 + $0x18] sm:$0xf]
        %v2306 = vld [vmem:[%s2298 + $0x1c] sm:$0xf]
        %s2307 = scalar_lea.vmem %s22, %s55
        %v2308 = vld [vmem:[%s2307] sm:$0x1]
        %v2310 = vperm.slane %v2308, 0
        %v2320 = vunpack.c.l.b16 %v2299
        %v2321 = vunpack.c.l.b16 %v2300
        %v2322 = vunpack.c.l.b16 %v2301
        %v2323 = vunpack.c.l.b16 %v2302
        %v2324 = vunpack.c.l.b16 %v2303
        %v2325 = vunpack.c.l.b16 %v2304
        %v2326 = vunpack.c.l.b16 %v2305
        %v2327 = vunpack.c.l.b16 %v2306
        %v2328 = vpack.c.b16 %v2321, %v2320
        %v2329 = vpack.c.b16 %v2323, %v2322
        %v2330 = vpack.c.b16 %v2325, %v2324
        %v2331 = vpack.c.b16 %v2327, %v2326
        %vm2336 = vcmask 523264
        %v2338 = vsel %vm2336, %v2296, 0
        %2340 = vmatpush.bf16.msra.mxu0 0
        %2341 = vmatpush.bf16.msra.mxu0 0
        %2342 = vmatpush.bf16.msra.mxu0 0
        %2343 = vmatpush.bf16.msra.mxu0 0
        %2344 = vmatpush.bf16.msra.mxu0 %v2331
        %2345 = vmatpush.bf16.msra.mxu0 %v2330
        %2346 = vmatpush.bf16.msra.mxu0 %v2329
        %2347 = vmatpush.bf16.msra.mxu0 %v2328
        %2348 = vmatmul.bf16.gmra.mxu0 %v2338
        %v2349 = vpop.f32.mrf.mxu0
        %v2350 = vadd.f32 %v2310, %v2349
        %v2351 = vpop.f32.mrf.mxu0
        %2352 = vdwg.mxu0
        %v2353 = vadd.f32 %v2254, %v2350
        %v2354 = vsel %vm1135, %v2353, 0.0
        %2355 = vadd.xlane.f32.xlu0 %v2354
        %v2356 = vpop.xlane.xlu0 %2355
        %v2357 = vmul.f32 %v2356, %v1450
        %v2358 = vsub.f32 %v2353, %v2357
        %v2359 = vmul.f32 %v2358, %v2358
        %v2360 = vsel %vm1135, %v2359, 0.0
        %2361 = vadd.xlane.f32.xlu0 %v2360
        %v2362 = vpop.xlane.xlu0 %2361
        %v2363 = vmul.f32 %v2362, %v1450
        %v2364 = vadd.f32 %v2363, 1e-05
        %v2365 = vrsqrt.pop %v2364
        %v2366 = vmul.f32 %v2365, %v2364
        %v2367 = vmul.f32 %v2366, %v2365
        %v2368 = vmul.f32 0.5, %v2367
        %v2369 = vsub.f32 1.5, %v2368
        %v2370 = vmul.f32 %v2365, %v2369
        %vm2371 = vweird.f32 %v2364
        %vm2372 = vweird.f32 %v2365
        %vm2373 = vmor %vm2371, %vm2372
        %v2374 = vsel %vm2373, %v2365, %v2370
        %v2375 = vmul.f32 %v2358, %v2374
        %v2376 = vperm.slane %v1109, 6
        %v2377 = vmul.f32 %v2375, %v2376
        %v2378 = vperm.slane %v1109, 7
        %v2379 = vadd.f32 %v2377, %v2378
        %p2380 = scmp.lt.s32.totalorder %s55, 1
        // Predicated region
        $region193: #{tpu_custom_call.1} parent=119 // pred_check
          %p2381 = pneg %p2380
        $region194: #{tpu_custom_call.1} parent=119 // pred_check_branch
          %2383 = sbr.rel (%p2381) target = $region196
        $region195: #{tpu_custom_call.1} parent=119 // pred_region
          %2384 = vst.msk [vmem:[#allocation2] sm:$0xff] %vm1135, %v2379
        $region196: #{tpu_custom_call.1} parent=119 // pred_fallthru
          _
        %p2385 = scmp.eq.s32.totalorder %s55, 1
        // Predicated region
        $region197: #{tpu_custom_call.1} parent=119 // pred_check
          %p2386 = pneg %p2385
        $region198: #{tpu_custom_call.1} parent=119 // pred_check_branch
          %2388 = sbr.rel (%p2386) target = $region200
        $region199: #{tpu_custom_call.1} parent=119 // pred_region
          %v2389 = vld [vmem:[%s24] sm:$0x3]
          %v2390 = vsel %vm1135, %v2379, 0.0
          %2391 = vadd.xlane.f32.xlu0 %v2390
          %v2392 = vpop.xlane.xlu0 %2391
          %v2393 = vmul.f32 %v2392, %v1450
          %v2394 = vsub.f32 %v2379, %v2393
          %v2395 = vmul.f32 %v2394, %v2394
          %v2396 = vsel %vm1135, %v2395, 0.0
          %2397 = vadd.xlane.f32.xlu0 %v2396
          %v2398 = vpop.xlane.xlu0 %2397
          %v2399 = vmul.f32 %v2398, %v1450
          %v2400 = vadd.f32 %v2399, 1e-05
          %v2401 = vrsqrt.pop %v2400
          %v2402 = vmul.f32 %v2401, %v2400
          %v2403 = vmul.f32 %v2402, %v2401
          %v2404 = vmul.f32 0.5, %v2403
          %v2405 = vsub.f32 1.5, %v2404
          %v2406 = vmul.f32 %v2401, %v2405
          %vm2407 = vweird.f32 %v2400
          %vm2408 = vweird.f32 %v2401
          %vm2409 = vmor %vm2407, %vm2408
          %v2410 = vsel %vm2409, %v2401, %v2406
          %v2411 = vmul.f32 %v2394, %v2410
          %v2412 = vperm.slane %v2389, 0
          %v2413 = vmul.f32 %v2411, %v2412
          %v2414 = vperm.slane %v2389, 1
          %v2415 = vadd.f32 %v2413, %v2414
          %2416 = vst.msk [vmem:[%s1087] sm:$0xff] %vm1135, %v2415
        $region200: #{tpu_custom_call.1} parent=119 // pred_fallthru
          _
        %s2417 = sand.u32 %s610, 1
        %s2418 = scalar_lea.sflag [#allocation6], %s2417
        %s2419 = sand.u32 %s610, 1
        %s2420 = smul.addr %s2419, 8
        %s2421 = scalar_lea.vmem [#allocation31], %s2420
        // Predicated region
        $region201: #{tpu_custom_call.1} parent=119 // pred_check
          %p2422 = pneg %p620
        $region202: #{tpu_custom_call.1} parent=119 // pred_check_branch
          %2424 = sbr.rel (%p2422) target = $region204
        $region203: #{tpu_custom_call.1} parent=119 // pred_region
          %2426 = vsyncadd %s2418, 0
          %s2427 = smul.addr %s54, 8
          %s2428 = scalar_lea.hbm %s25, %s2427
          %s2430 = sshll.u32 %s2421, 4
          %s2431 = int_to_ptr.vmem [resolvable:$true] %s2430
          %s2432 = sshll.u32 %s2428, 4
          %s2433 = int_to_ptr.hbm [resolvable:$true] %s2432
          %2435 = dma.vmem_to_hbm [thread:$0]  %s2431, 128, %s2433, %s2418
        $region204: #{tpu_custom_call.1} parent=119 // pred_fallthru
          _
      $region120: #{tpu_custom_call.1} parent=5 // pred_fallthru
        _
      %p2436 = scmp.le.s32.totalorder 2, %s45
      // Predicated region
      $region205: #{tpu_custom_call.1} parent=5 // pred_check
        %p2437 = pneg %p2436
      $region206: #{tpu_custom_call.1} parent=5 // pred_check_branch
        %2439 = sbr.rel (%p2437) target = $region208
      $region207: #{tpu_custom_call.1} parent=5 // pred_region
        %s2440 = ssub.s32 %s45, 2
        // Predicated region
        $region209: #{tpu_custom_call.1} parent=207 // pred_check
          %p2441 = pneg %p626
        $region210: #{tpu_custom_call.1} parent=207 // pred_check_branch
          %2443 = sbr.rel (%p2441) target = $region212
        $region211: #{tpu_custom_call.1} parent=207 // pred_region
          %s2444 = sand.u32 %s611, 1
          %s2445 = scalar_lea.sflag [#allocation6], %s2444
          %s2446 = sand.u32 %s611, 1
          %s2447 = smul.addr %s2446, 8
          %s2448 = scalar_lea.vmem [#allocation31], %s2447
          %2450 = dma.done %s2445, 128
        $region212: #{tpu_custom_call.1} parent=207 // pred_fallthru
          _
      $region208: #{tpu_custom_call.1} parent=5 // pred_fallthru
        _
    $region6: #{tpu_custom_call.1} parent=1 // loop_footer
      %s49 = sadd.s32 1, %s45
    $region7: #{tpu_custom_call.1} parent=1 // loop_footer_branch
      %44 = sbr.rel target = $region3
    $region8: #{tpu_custom_call.1} parent=1 // loop_exit
      _
    %2451 = vsyncpa [#allocation5], 1
    %s2452 = scalar_lea.sflag [#allocation5], 1
    %2453 = vsyncpa %s2452, 1
    %2454 = vsyncpa [#allocation8], 1
    %2455 = vsyncpa [#allocation11], 1
    %2456 = vsyncpa [#allocation14], 1
    %2457 = vsyncpa [#allocation17], 1
    %2458 = vsyncpa [#allocation20], 1
    %2459 = vsyncpa [#allocation23], 1
    %2460 = vsyncpa [#allocation26], 1
    %2461 = vsyncpa [#allocation29], 1
    %2462 = vsyncpa [#allocation6], 1
    %s2463 = scalar_lea.sflag [#allocation6], 1
    %2464 = vsyncpa %s2463, 1

</llo_original>
